<compile_context>
chip_gen: v7x
topology: tpu7x:2x2x1
jax: 0.10.0
libtpu: 0.0.40
codegen_flags: <defaults>
</compile_context>

<pallas_src>
import jax
import jax.numpy as jnp
from jax.experimental import pallas as pl
from jax.experimental.pallas import tpu as pltpu


_EPS = 1e-5

# (in, out) dims of the 8 GCNConv layers (concat doubles the input of 5/6/7)
_LAYER_DIMS = [(3, 16), (16, 64), (64, 128), (128, 256),
               (256, 128), (256, 64), (128, 16), (32, 2)]
_SKIP_LAYERS = (5, 6, 7)

_W_COLS = 256          # max fan_out -> lane width of the weight slab
_V_COLS = 256          # lane width of the bias/gamma/beta slab


def _round8(n):
    return (n + 7) // 8 * 8


def _weight_layout():
    """Static row offsets (sublane-aligned) of every weight in the packed slab."""
    layout = {}
    off = 0
    for i, (fi, fo) in enumerate(_LAYER_DIMS):
        if i in _SKIP_LAYERS:
            half = fi // 2
            top = (off, half, fo)
            off += _round8(half)
            bot = (off, half, fo)
            off += _round8(half)
            layout[i] = (top, bot)
        else:
            layout[i] = (off, fi, fo)
            off += _round8(fi)
    return layout, off


_W_LAYOUT, _W_ROWS = _weight_layout()     # 888 rows total


# ---------------------------------------------------------------------------
# Fused Pallas kernel: conv0..conv7 + sigmoid + BN (+ 2-class softmax)
# ---------------------------------------------------------------------------
def _fused_netconnect1_kernel(a_ref, x_ref, w_ref, v_ref, o_ref):
    n = a_ref.shape[0]
    inv_n = 1.0 / n
    a = a_ref[...]                                   # [N, N], VMEM-resident once
    ones_row = jnp.ones((1, n), jnp.float32)         # for MXU-based BN moments

    def propagate(x):                                # A_hat @ X  (MXU)
        return jnp.dot(a, x, preferred_element_type=jnp.float32)

    def get_w(off, rows, cols):                      # static slab slice (view load)
        return w_ref[off:off + rows, :cols]

    def get_vec(i, cols):                            # bias / gamma / beta rows
        b = v_ref[3 * i + 0:3 * i + 1, :cols]
        g = v_ref[3 * i + 1:3 * i + 2, :cols]
        be = v_ref[3 * i + 2:3 * i + 3, :cols]
        return b, g, be

    def layer_tail(z, i, fo):
        # sigmoid(z+b) = 0.5*tanh(0.5*(z+b)) + 0.5 ; the outer affine is folded
        # into BN (eps -> 4*eps), so only the tanh survives (EUP).
        b, g, be = get_vec(i, fo)
        t = jnp.tanh(0.5 * (z + b))                                  # [N, F]
        # one-pass BN moments on the MXU (frees the XLU / shortens the chain)
        s1 = jnp.dot(ones_row, t, preferred_element_type=jnp.float32)      # [1,F]
        s2 = jnp.dot(ones_row, t * t, preferred_element_type=jnp.float32)  # [1,F]
        mean = s1 * inv_n
        var = s2 * inv_n - mean * mean               # biased variance
        scale = g * jax.lax.rsqrt(var + 4.0 * _EPS)  # eps_eff = 4*eps (affine fold)
        shift = be - mean * scale
        return t * scale + shift

    def layer(ax, i):
        off, fi, fo = _W_LAYOUT[i]
        z = jnp.dot(ax, get_w(off, fi, fo), preferred_element_type=jnp.float32)
        return layer_tail(z, i, fo)

    def skip_layer(ax_new, ax_skip, i):
        # concat folded into split-weight MXU accumulation (no cross-lane concat)
        (ot, half, fo), (ob, _, _) = _W_LAYOUT[i]
        z = (jnp.dot(ax_new, get_w(ot, half, fo), preferred_element_type=jnp.float32)
             + jnp.dot(ax_skip, get_w(ob, half, fo), preferred_element_type=jnp.float32))
        return layer_tail(z, i, fo)

    # ---- main trunk (A@part products cached for the skip layers) ----
    part0 = layer(propagate(x_ref[...]), 0)          # [N, 16]
    ap0 = propagate(part0)                            # reused by layer 7
    part1 = layer(ap0, 1)                             # [N, 64]
    ap1 = propagate(part1)                            # reused by layer 6
    part2 = layer(ap1, 2)                             # [N, 128]
    ap2 = propagate(part2)                            # reused by layer 5
    h3 = layer(ap2, 3)                                # [N, 256]
    h4 = layer(propagate(h3), 4)                      # [N, 128]

    # ---- skip layers ----
    h5 = skip_layer(propagate(h4), ap2, 5)            # [N, 64]
    h6 = skip_layer(propagate(h5), ap1, 6)            # [N, 16]
    h7 = skip_layer(propagate(h6), ap0, 7)            # [N, 2]

    # ---- 2-class softmax == sigmoid of the logit difference (exact) ----
    d = h7[:, 1:2] - h7[:, 0:1]
    p1 = 0.5 * jnp.tanh(0.5 * d) + 0.5
    o_ref[:, 0:1] = 1.0 - p1
    o_ref[:, 1:2] = p1


def netconnect1_forward(a_hat, x, w_slab, v_slab):
    """Single fused pallas_call for the whole network (4 input DMAs total)."""
    n = x.shape[0]
    return pl.pallas_call(
        _fused_netconnect1_kernel,
        out_shape=jax.ShapeDtypeStruct((n, 2), jnp.float32),
        in_specs=[pl.BlockSpec(memory_space=pltpu.MemorySpace.VMEM)] * 4,
        out_specs=pl.BlockSpec(memory_space=pltpu.MemorySpace.VMEM),
    )(a_hat, x, w_slab, v_slab)


# ---------------------------------------------------------------------------
# Glue: normalized adjacency, parameter init, host-side parameter packing
# ---------------------------------------------------------------------------
def gcn_norm_dense(edge_index, num_nodes):
    """A_hat = D^{-1/2} (A + I) D^{-1/2} as a dense [N, N] float32 matrix."""
    row, col = edge_index[0], edge_index[1]
    a = jnp.zeros((num_nodes, num_nodes), jnp.float32)
    a = a.at[row, col].add(1.0)
    a = a + jnp.eye(num_nodes, dtype=jnp.float32)
    deg = jnp.sum(a, axis=1)
    d_inv_sqrt = jnp.where(deg > 0.0, jax.lax.rsqrt(deg), 0.0)
    return d_inv_sqrt[:, None] * a * d_inv_sqrt[None, :]


def init_params(key):
    params = []
    for fan_in, fan_out in _LAYER_DIMS:
        key, wk = jax.random.split(key)
        limit = (6.0 / (fan_in + fan_out)) ** 0.5          # glorot (PyG default)
        w = jax.random.uniform(wk, (fan_in, fan_out), jnp.float32, -limit, limit)
        b = jnp.zeros((1, fan_out), jnp.float32)            # GCNConv bias init
        gamma = jnp.ones((1, fan_out), jnp.float32)          # BN weight
        beta = jnp.zeros((1, fan_out), jnp.float32)          # BN bias
        params.append((w, b, gamma, beta))
    return params


def pack_params(params):
    """Pack all weights / vectors into two padded slabs (done once, host side).

    Skip-layer weights are split into top/bottom halves so the in-kernel concat
    becomes a split-weight matmul accumulation.
    """
    w_slab = jnp.zeros((_W_ROWS, _W_COLS), jnp.float32)
    v_slab = jnp.zeros((3 * len(params), _V_COLS), jnp.float32)
    for i, (w, b, gamma, beta) in enumerate(params):
        fo = w.shape[1]
        if i in _SKIP_LAYERS:
            (ot, half, _), (ob, _, _) = _W_LAYOUT[i]
            w_slab = w_slab.at[ot:ot + half, :fo].set(w[:half])
            w_slab = w_slab.at[ob:ob + half, :fo].set(w[half:])
        else:
            off, fi, _ = _W_LAYOUT[i]
            w_slab = w_slab.at[off:off + fi, :fo].set(w)
        v_slab = v_slab.at[3 * i + 0, :fo].set(b[0])
        v_slab = v_slab.at[3 * i + 1, :fo].set(gamma[0])
        v_slab = v_slab.at[3 * i + 2, :fo].set(beta[0])
    return w_slab, v_slab


# ---------------------------------------------------------------------------
# Pure-JAX reference (explicit concatenation, like the PyTorch module)
# ---------------------------------------------------------------------------
def reference_forward(a_hat, x, params):
    hp = jax.lax.Precision.HIGHEST

    def layer(x_in, p):
        w, b, gamma, beta = p
        h = jnp.dot(jnp.dot(a_hat, x_in, precision=hp), w, precision=hp) + b
        h = jax.nn.sigmoid(h)
        mean = jnp.mean(h, axis=0, keepdims=True)
        var = jnp.mean(jnp.square(h - mean), axis=0, keepdims=True)
        return (h - mean) * jax.lax.rsqrt(var + _EPS) * gamma + beta

    x = layer(x, params[0]); part0 = x
    x = layer(x, params[1]); part1 = x
    x = layer(x, params[2]); part2 = x
    x = layer(x, params[3])
    x = layer(x, params[4])
    x = layer(jnp.concatenate([x, part2], axis=1), params[5])
    x = layer(jnp.concatenate([x, part1], axis=1), params[6])
    x = layer(jnp.concatenate([x, part0], axis=1), params[7])
    return jax.nn.softmax(x, axis=1)


if __name__ == "__main__":
    key = jax.random.PRNGKey(0)
    k_x, k_p = jax.random.split(key)

    N = 32                                   # nodes
    # deterministic bidirectional ring graph, E = 2N = 64 edges
    src = jnp.arange(N, dtype=jnp.int32)
    dst = (src + 1) % N
    edge_index = jnp.concatenate(
        [jnp.stack([src, dst], axis=0), jnp.stack([dst, src], axis=0)], axis=1
    )                                        # [2, 64]

    x = jax.random.normal(k_x, (N, 3), jnp.float32)   # data.x : [N, 3]
    a_hat = gcn_norm_dense(edge_index, N)             # computed once, outside kernel
    params = init_params(k_p)
    w_slab, v_slab = pack_params(params)               # packed once, host side

    fwd = jax.jit(netconnect1_forward)
    out = jax.block_until_ready(fwd(a_hat, x, w_slab, v_slab))

    assert out.shape == (N, 2)
    assert bool(jnp.all(jnp.isfinite(out)))
    # exact 2-class softmax-as-sigmoid -> rows sum to 1 to ~1 ulp
    assert bool(jnp.allclose(jnp.sum(out, axis=1), 1.0, atol=1e-5))
    # numerical parity with the unfused pure-JAX reference
    ref = jax.block_until_ready(reference_forward(a_hat, x, params))
    assert bool(jnp.allclose(out, ref, atol=5e-3))
    print("KERNEL_OK")
</pallas_src>

<mosaic_0001>
module attributes {stable_mosaic.version = 11 : i64} {
  func.func @_fused_netconnect1_kernel(%arg0: memref<32x32xf32, #tpu.memory_space<vmem>>, %arg1: memref<32x3xf32, #tpu.memory_space<vmem>>, %arg2: memref<888x256xf32, #tpu.memory_space<vmem>>, %arg3: memref<24x256xf32, #tpu.memory_space<vmem>>, %arg4: memref<32x2xf32, #tpu.memory_space<vmem>>) attributes {dimension_semantics = [], scalar_prefetch = 0 : i64, scratch_operands = 0 : i64, tpu.core_type = #tpu.core_type<tc>} {
    %c0 = arith.constant 0 : index
    %c0_0 = arith.constant 0 : index
    %0 = vector.load %arg0[%c0, %c0_0] : memref<32x32xf32, #tpu.memory_space<vmem>>, vector<32x32xf32>
    %cst = arith.constant 1.000000e+00 : f32
    %1 = vector.broadcast %cst : f32 to vector<1x32xf32>
    %c0_1 = arith.constant 0 : index
    %c0_2 = arith.constant 0 : index
    %2 = vector.load %arg1[%c0_1, %c0_2] : memref<32x3xf32, #tpu.memory_space<vmem>>, vector<32x3xf32>
    %cst_3 = arith.constant dense<0.000000e+00> : vector<32x3xf32>
    %3 = tpu.matmul %0, %2, %cst_3 {dimension_numbers = #tpu.dot_dimension_numbers<[1], [0], [0], [1], [0, 0, 1, 1], [], []>} : vector<32x32xf32>, vector<32x3xf32>, vector<32x3xf32> -> vector<32x3xf32>
    %c0_4 = arith.constant 0 : index
    %c0_5 = arith.constant 0 : index
    %4 = vector.load %arg2[%c0_4, %c0_5] : memref<888x256xf32, #tpu.memory_space<vmem>>, vector<3x16xf32>
    %cst_6 = arith.constant dense<0.000000e+00> : vector<32x16xf32>
    %5 = tpu.matmul %3, %4, %cst_6 {dimension_numbers = #tpu.dot_dimension_numbers<[1], [0], [0], [1], [0, 0, 1, 1], [], []>} : vector<32x3xf32>, vector<3x16xf32>, vector<32x16xf32> -> vector<32x16xf32>
    %c0_7 = arith.constant 0 : index
    %c0_8 = arith.constant 0 : index
    %6 = vector.load %arg3[%c0_7, %c0_8] : memref<24x256xf32, #tpu.memory_space<vmem>>, vector<1x16xf32>
    %c1 = arith.constant 1 : index
    %c0_9 = arith.constant 0 : index
    %7 = vector.load %arg3[%c1, %c0_9] : memref<24x256xf32, #tpu.memory_space<vmem>>, vector<1x16xf32>
    %c2 = arith.constant 2 : index
    %c0_10 = arith.constant 0 : index
    %8 = vector.load %arg3[%c2, %c0_10] : memref<24x256xf32, #tpu.memory_space<vmem>>, vector<1x16xf32>
    %9 = vector.broadcast %6 : vector<1x16xf32> to vector<32x16xf32>
    %10 = arith.addf %5, %9 : vector<32x16xf32>
    %cst_11 = arith.constant 5.000000e-01 : f32
    %11 = vector.broadcast %cst_11 : f32 to vector<32x16xf32>
    %12 = arith.mulf %11, %10 : vector<32x16xf32>
    %13 = math.tanh %12 : vector<32x16xf32>
    %cst_12 = arith.constant dense<0.000000e+00> : vector<1x16xf32>
    %14 = tpu.matmul %1, %13, %cst_12 {dimension_numbers = #tpu.dot_dimension_numbers<[1], [0], [0], [1], [0, 0, 1, 1], [], []>} : vector<1x32xf32>, vector<32x16xf32>, vector<1x16xf32> -> vector<1x16xf32>
    %15 = arith.mulf %13, %13 : vector<32x16xf32>
    %cst_13 = arith.constant dense<0.000000e+00> : vector<1x16xf32>
    %16 = tpu.matmul %1, %15, %cst_13 {dimension_numbers = #tpu.dot_dimension_numbers<[1], [0], [0], [1], [0, 0, 1, 1], [], []>} : vector<1x32xf32>, vector<32x16xf32>, vector<1x16xf32> -> vector<1x16xf32>
    %cst_14 = arith.constant 3.125000e-02 : f32
    %17 = vector.broadcast %cst_14 : f32 to vector<1x16xf32>
    %18 = arith.mulf %14, %17 : vector<1x16xf32>
    %cst_15 = arith.constant 3.125000e-02 : f32
    %19 = vector.broadcast %cst_15 : f32 to vector<1x16xf32>
    %20 = arith.mulf %16, %19 : vector<1x16xf32>
    %21 = arith.mulf %18, %18 : vector<1x16xf32>
    %22 = arith.subf %20, %21 : vector<1x16xf32>
    %cst_16 = arith.constant 4.000000e-05 : f32
    %23 = vector.broadcast %cst_16 : f32 to vector<1x16xf32>
    %24 = arith.addf %22, %23 : vector<1x16xf32>
    %25 = math.rsqrt %24 : vector<1x16xf32>
    %26 = arith.mulf %7, %25 : vector<1x16xf32>
    %27 = arith.mulf %18, %26 : vector<1x16xf32>
    %28 = arith.subf %8, %27 : vector<1x16xf32>
    %29 = vector.broadcast %26 : vector<1x16xf32> to vector<32x16xf32>
    %30 = arith.mulf %13, %29 : vector<32x16xf32>
    %31 = vector.broadcast %28 : vector<1x16xf32> to vector<32x16xf32>
    %32 = arith.addf %30, %31 : vector<32x16xf32>
    %cst_17 = arith.constant dense<0.000000e+00> : vector<32x16xf32>
    %33 = tpu.matmul %0, %32, %cst_17 {dimension_numbers = #tpu.dot_dimension_numbers<[1], [0], [0], [1], [0, 0, 1, 1], [], []>} : vector<32x32xf32>, vector<32x16xf32>, vector<32x16xf32> -> vector<32x16xf32>
    %c8 = arith.constant 8 : index
    %c0_18 = arith.constant 0 : index
    %34 = vector.load %arg2[%c8, %c0_18] : memref<888x256xf32, #tpu.memory_space<vmem>>, vector<16x64xf32>
    %cst_19 = arith.constant dense<0.000000e+00> : vector<32x64xf32>
    %35 = tpu.matmul %33, %34, %cst_19 {dimension_numbers = #tpu.dot_dimension_numbers<[1], [0], [0], [1], [0, 0, 1, 1], [], []>} : vector<32x16xf32>, vector<16x64xf32>, vector<32x64xf32> -> vector<32x64xf32>
    %c3 = arith.constant 3 : index
    %c0_20 = arith.constant 0 : index
    %36 = vector.load %arg3[%c3, %c0_20] : memref<24x256xf32, #tpu.memory_space<vmem>>, vector<1x64xf32>
    %c4 = arith.constant 4 : index
    %c0_21 = arith.constant 0 : index
    %37 = vector.load %arg3[%c4, %c0_21] : memref<24x256xf32, #tpu.memory_space<vmem>>, vector<1x64xf32>
    %c5 = arith.constant 5 : index
    %c0_22 = arith.constant 0 : index
    %38 = vector.load %arg3[%c5, %c0_22] : memref<24x256xf32, #tpu.memory_space<vmem>>, vector<1x64xf32>
    %39 = vector.broadcast %36 : vector<1x64xf32> to vector<32x64xf32>
    %40 = arith.addf %35, %39 : vector<32x64xf32>
    %cst_23 = arith.constant 5.000000e-01 : f32
    %41 = vector.broadcast %cst_23 : f32 to vector<32x64xf32>
    %42 = arith.mulf %41, %40 : vector<32x64xf32>
    %43 = math.tanh %42 : vector<32x64xf32>
    %cst_24 = arith.constant dense<0.000000e+00> : vector<1x64xf32>
    %44 = tpu.matmul %1, %43, %cst_24 {dimension_numbers = #tpu.dot_dimension_numbers<[1], [0], [0], [1], [0, 0, 1, 1], [], []>} : vector<1x32xf32>, vector<32x64xf32>, vector<1x64xf32> -> vector<1x64xf32>
    %45 = arith.mulf %43, %43 : vector<32x64xf32>
    %cst_25 = arith.constant dense<0.000000e+00> : vector<1x64xf32>
    %46 = tpu.matmul %1, %45, %cst_25 {dimension_numbers = #tpu.dot_dimension_numbers<[1], [0], [0], [1], [0, 0, 1, 1], [], []>} : vector<1x32xf32>, vector<32x64xf32>, vector<1x64xf32> -> vector<1x64xf32>
    %cst_26 = arith.constant 3.125000e-02 : f32
    %47 = vector.broadcast %cst_26 : f32 to vector<1x64xf32>
    %48 = arith.mulf %44, %47 : vector<1x64xf32>
    %cst_27 = arith.constant 3.125000e-02 : f32
    %49 = vector.broadcast %cst_27 : f32 to vector<1x64xf32>
    %50 = arith.mulf %46, %49 : vector<1x64xf32>
    %51 = arith.mulf %48, %48 : vector<1x64xf32>
    %52 = arith.subf %50, %51 : vector<1x64xf32>
    %cst_28 = arith.constant 4.000000e-05 : f32
    %53 = vector.broadcast %cst_28 : f32 to vector<1x64xf32>
    %54 = arith.addf %52, %53 : vector<1x64xf32>
    %55 = math.rsqrt %54 : vector<1x64xf32>
    %56 = arith.mulf %37, %55 : vector<1x64xf32>
    %57 = arith.mulf %48, %56 : vector<1x64xf32>
    %58 = arith.subf %38, %57 : vector<1x64xf32>
    %59 = vector.broadcast %56 : vector<1x64xf32> to vector<32x64xf32>
    %60 = arith.mulf %43, %59 : vector<32x64xf32>
    %61 = vector.broadcast %58 : vector<1x64xf32> to vector<32x64xf32>
    %62 = arith.addf %60, %61 : vector<32x64xf32>
    %cst_29 = arith.constant dense<0.000000e+00> : vector<32x64xf32>
    %63 = tpu.matmul %0, %62, %cst_29 {dimension_numbers = #tpu.dot_dimension_numbers<[1], [0], [0], [1], [0, 0, 1, 1], [], []>} : vector<32x32xf32>, vector<32x64xf32>, vector<32x64xf32> -> vector<32x64xf32>
    %c24 = arith.constant 24 : index
    %c0_30 = arith.constant 0 : index
    %64 = vector.load %arg2[%c24, %c0_30] : memref<888x256xf32, #tpu.memory_space<vmem>>, vector<64x128xf32>
    %cst_31 = arith.constant dense<0.000000e+00> : vector<32x128xf32>
    %65 = tpu.matmul %63, %64, %cst_31 {dimension_numbers = #tpu.dot_dimension_numbers<[1], [0], [0], [1], [0, 0, 1, 1], [], []>} : vector<32x64xf32>, vector<64x128xf32>, vector<32x128xf32> -> vector<32x128xf32>
    %c6 = arith.constant 6 : index
    %c0_32 = arith.constant 0 : index
    %66 = vector.load %arg3[%c6, %c0_32] : memref<24x256xf32, #tpu.memory_space<vmem>>, vector<1x128xf32>
    %c7 = arith.constant 7 : index
    %c0_33 = arith.constant 0 : index
    %67 = vector.load %arg3[%c7, %c0_33] : memref<24x256xf32, #tpu.memory_space<vmem>>, vector<1x128xf32>
    %c8_34 = arith.constant 8 : index
    %c0_35 = arith.constant 0 : index
    %68 = vector.load %arg3[%c8_34, %c0_35] : memref<24x256xf32, #tpu.memory_space<vmem>>, vector<1x128xf32>
    %69 = vector.broadcast %66 : vector<1x128xf32> to vector<32x128xf32>
    %70 = arith.addf %65, %69 : vector<32x128xf32>
    %cst_36 = arith.constant 5.000000e-01 : f32
    %71 = vector.broadcast %cst_36 : f32 to vector<32x128xf32>
    %72 = arith.mulf %71, %70 : vector<32x128xf32>
    %73 = math.tanh %72 : vector<32x128xf32>
    %cst_37 = arith.constant dense<0.000000e+00> : vector<1x128xf32>
    %74 = tpu.matmul %1, %73, %cst_37 {dimension_numbers = #tpu.dot_dimension_numbers<[1], [0], [0], [1], [0, 0, 1, 1], [], []>} : vector<1x32xf32>, vector<32x128xf32>, vector<1x128xf32> -> vector<1x128xf32>
    %75 = arith.mulf %73, %73 : vector<32x128xf32>
    %cst_38 = arith.constant dense<0.000000e+00> : vector<1x128xf32>
    %76 = tpu.matmul %1, %75, %cst_38 {dimension_numbers = #tpu.dot_dimension_numbers<[1], [0], [0], [1], [0, 0, 1, 1], [], []>} : vector<1x32xf32>, vector<32x128xf32>, vector<1x128xf32> -> vector<1x128xf32>
    %cst_39 = arith.constant 3.125000e-02 : f32
    %77 = vector.broadcast %cst_39 : f32 to vector<1x128xf32>
    %78 = arith.mulf %74, %77 : vector<1x128xf32>
    %cst_40 = arith.constant 3.125000e-02 : f32
    %79 = vector.broadcast %cst_40 : f32 to vector<1x128xf32>
    %80 = arith.mulf %76, %79 : vector<1x128xf32>
    %81 = arith.mulf %78, %78 : vector<1x128xf32>
    %82 = arith.subf %80, %81 : vector<1x128xf32>
    %cst_41 = arith.constant 4.000000e-05 : f32
    %83 = vector.broadcast %cst_41 : f32 to vector<1x128xf32>
    %84 = arith.addf %82, %83 : vector<1x128xf32>
    %85 = math.rsqrt %84 : vector<1x128xf32>
    %86 = arith.mulf %67, %85 : vector<1x128xf32>
    %87 = arith.mulf %78, %86 : vector<1x128xf32>
    %88 = arith.subf %68, %87 : vector<1x128xf32>
    %89 = vector.broadcast %86 : vector<1x128xf32> to vector<32x128xf32>
    %90 = arith.mulf %73, %89 : vector<32x128xf32>
    %91 = vector.broadcast %88 : vector<1x128xf32> to vector<32x128xf32>
    %92 = arith.addf %90, %91 : vector<32x128xf32>
    %cst_42 = arith.constant dense<0.000000e+00> : vector<32x128xf32>
    %93 = tpu.matmul %0, %92, %cst_42 {dimension_numbers = #tpu.dot_dimension_numbers<[1], [0], [0], [1], [0, 0, 1, 1], [], []>} : vector<32x32xf32>, vector<32x128xf32>, vector<32x128xf32> -> vector<32x128xf32>
    %c88 = arith.constant 88 : index
    %c0_43 = arith.constant 0 : index
    %94 = vector.load %arg2[%c88, %c0_43] : memref<888x256xf32, #tpu.memory_space<vmem>>, vector<128x256xf32>
    %cst_44 = arith.constant dense<0.000000e+00> : vector<32x256xf32>
    %95 = tpu.matmul %93, %94, %cst_44 {dimension_numbers = #tpu.dot_dimension_numbers<[1], [0], [0], [1], [0, 0, 1, 1], [], []>} : vector<32x128xf32>, vector<128x256xf32>, vector<32x256xf32> -> vector<32x256xf32>
    %c9 = arith.constant 9 : index
    %c0_45 = arith.constant 0 : index
    %96 = vector.load %arg3[%c9, %c0_45] : memref<24x256xf32, #tpu.memory_space<vmem>>, vector<1x256xf32>
    %c10 = arith.constant 10 : index
    %c0_46 = arith.constant 0 : index
    %97 = vector.load %arg3[%c10, %c0_46] : memref<24x256xf32, #tpu.memory_space<vmem>>, vector<1x256xf32>
    %c11 = arith.constant 11 : index
    %c0_47 = arith.constant 0 : index
    %98 = vector.load %arg3[%c11, %c0_47] : memref<24x256xf32, #tpu.memory_space<vmem>>, vector<1x256xf32>
    %99 = vector.broadcast %96 : vector<1x256xf32> to vector<32x256xf32>
    %100 = arith.addf %95, %99 : vector<32x256xf32>
    %cst_48 = arith.constant 5.000000e-01 : f32
    %101 = vector.broadcast %cst_48 : f32 to vector<32x256xf32>
    %102 = arith.mulf %101, %100 : vector<32x256xf32>
    %103 = math.tanh %102 : vector<32x256xf32>
    %cst_49 = arith.constant dense<0.000000e+00> : vector<1x256xf32>
    %104 = tpu.matmul %1, %103, %cst_49 {dimension_numbers = #tpu.dot_dimension_numbers<[1], [0], [0], [1], [0, 0, 1, 1], [], []>} : vector<1x32xf32>, vector<32x256xf32>, vector<1x256xf32> -> vector<1x256xf32>
    %105 = arith.mulf %103, %103 : vector<32x256xf32>
    %cst_50 = arith.constant dense<0.000000e+00> : vector<1x256xf32>
    %106 = tpu.matmul %1, %105, %cst_50 {dimension_numbers = #tpu.dot_dimension_numbers<[1], [0], [0], [1], [0, 0, 1, 1], [], []>} : vector<1x32xf32>, vector<32x256xf32>, vector<1x256xf32> -> vector<1x256xf32>
    %cst_51 = arith.constant 3.125000e-02 : f32
    %107 = vector.broadcast %cst_51 : f32 to vector<1x256xf32>
    %108 = arith.mulf %104, %107 : vector<1x256xf32>
    %cst_52 = arith.constant 3.125000e-02 : f32
    %109 = vector.broadcast %cst_52 : f32 to vector<1x256xf32>
    %110 = arith.mulf %106, %109 : vector<1x256xf32>
    %111 = arith.mulf %108, %108 : vector<1x256xf32>
    %112 = arith.subf %110, %111 : vector<1x256xf32>
    %cst_53 = arith.constant 4.000000e-05 : f32
    %113 = vector.broadcast %cst_53 : f32 to vector<1x256xf32>
    %114 = arith.addf %112, %113 : vector<1x256xf32>
    %115 = math.rsqrt %114 : vector<1x256xf32>
    %116 = arith.mulf %97, %115 : vector<1x256xf32>
    %117 = arith.mulf %108, %116 : vector<1x256xf32>
    %118 = arith.subf %98, %117 : vector<1x256xf32>
    %119 = vector.broadcast %116 : vector<1x256xf32> to vector<32x256xf32>
    %120 = arith.mulf %103, %119 : vector<32x256xf32>
    %121 = vector.broadcast %118 : vector<1x256xf32> to vector<32x256xf32>
    %122 = arith.addf %120, %121 : vector<32x256xf32>
    %cst_54 = arith.constant dense<0.000000e+00> : vector<32x256xf32>
    %123 = tpu.matmul %0, %122, %cst_54 {dimension_numbers = #tpu.dot_dimension_numbers<[1], [0], [0], [1], [0, 0, 1, 1], [], []>} : vector<32x32xf32>, vector<32x256xf32>, vector<32x256xf32> -> vector<32x256xf32>
    %c216 = arith.constant 216 : index
    %c0_55 = arith.constant 0 : index
    %124 = vector.load %arg2[%c216, %c0_55] : memref<888x256xf32, #tpu.memory_space<vmem>>, vector<256x128xf32>
    %cst_56 = arith.constant dense<0.000000e+00> : vector<32x128xf32>
    %125 = tpu.matmul %123, %124, %cst_56 {dimension_numbers = #tpu.dot_dimension_numbers<[1], [0], [0], [1], [0, 0, 1, 1], [], []>} : vector<32x256xf32>, vector<256x128xf32>, vector<32x128xf32> -> vector<32x128xf32>
    %c12 = arith.constant 12 : index
    %c0_57 = arith.constant 0 : index
    %126 = vector.load %arg3[%c12, %c0_57] : memref<24x256xf32, #tpu.memory_space<vmem>>, vector<1x128xf32>
    %c13 = arith.constant 13 : index
    %c0_58 = arith.constant 0 : index
    %127 = vector.load %arg3[%c13, %c0_58] : memref<24x256xf32, #tpu.memory_space<vmem>>, vector<1x128xf32>
    %c14 = arith.constant 14 : index
    %c0_59 = arith.constant 0 : index
    %128 = vector.load %arg3[%c14, %c0_59] : memref<24x256xf32, #tpu.memory_space<vmem>>, vector<1x128xf32>
    %129 = vector.broadcast %126 : vector<1x128xf32> to vector<32x128xf32>
    %130 = arith.addf %125, %129 : vector<32x128xf32>
    %cst_60 = arith.constant 5.000000e-01 : f32
    %131 = vector.broadcast %cst_60 : f32 to vector<32x128xf32>
    %132 = arith.mulf %131, %130 : vector<32x128xf32>
    %133 = math.tanh %132 : vector<32x128xf32>
    %cst_61 = arith.constant dense<0.000000e+00> : vector<1x128xf32>
    %134 = tpu.matmul %1, %133, %cst_61 {dimension_numbers = #tpu.dot_dimension_numbers<[1], [0], [0], [1], [0, 0, 1, 1], [], []>} : vector<1x32xf32>, vector<32x128xf32>, vector<1x128xf32> -> vector<1x128xf32>
    %135 = arith.mulf %133, %133 : vector<32x128xf32>
    %cst_62 = arith.constant dense<0.000000e+00> : vector<1x128xf32>
    %136 = tpu.matmul %1, %135, %cst_62 {dimension_numbers = #tpu.dot_dimension_numbers<[1], [0], [0], [1], [0, 0, 1, 1], [], []>} : vector<1x32xf32>, vector<32x128xf32>, vector<1x128xf32> -> vector<1x128xf32>
    %cst_63 = arith.constant 3.125000e-02 : f32
    %137 = vector.broadcast %cst_63 : f32 to vector<1x128xf32>
    %138 = arith.mulf %134, %137 : vector<1x128xf32>
    %cst_64 = arith.constant 3.125000e-02 : f32
    %139 = vector.broadcast %cst_64 : f32 to vector<1x128xf32>
    %140 = arith.mulf %136, %139 : vector<1x128xf32>
    %141 = arith.mulf %138, %138 : vector<1x128xf32>
    %142 = arith.subf %140, %141 : vector<1x128xf32>
    %cst_65 = arith.constant 4.000000e-05 : f32
    %143 = vector.broadcast %cst_65 : f32 to vector<1x128xf32>
    %144 = arith.addf %142, %143 : vector<1x128xf32>
    %145 = math.rsqrt %144 : vector<1x128xf32>
    %146 = arith.mulf %127, %145 : vector<1x128xf32>
    %147 = arith.mulf %138, %146 : vector<1x128xf32>
    %148 = arith.subf %128, %147 : vector<1x128xf32>
    %149 = vector.broadcast %146 : vector<1x128xf32> to vector<32x128xf32>
    %150 = arith.mulf %133, %149 : vector<32x128xf32>
    %151 = vector.broadcast %148 : vector<1x128xf32> to vector<32x128xf32>
    %152 = arith.addf %150, %151 : vector<32x128xf32>
    %cst_66 = arith.constant dense<0.000000e+00> : vector<32x128xf32>
    %153 = tpu.matmul %0, %152, %cst_66 {dimension_numbers = #tpu.dot_dimension_numbers<[1], [0], [0], [1], [0, 0, 1, 1], [], []>} : vector<32x32xf32>, vector<32x128xf32>, vector<32x128xf32> -> vector<32x128xf32>
    %c472 = arith.constant 472 : index
    %c0_67 = arith.constant 0 : index
    %154 = vector.load %arg2[%c472, %c0_67] : memref<888x256xf32, #tpu.memory_space<vmem>>, vector<128x64xf32>
    %cst_68 = arith.constant dense<0.000000e+00> : vector<32x64xf32>
    %155 = tpu.matmul %153, %154, %cst_68 {dimension_numbers = #tpu.dot_dimension_numbers<[1], [0], [0], [1], [0, 0, 1, 1], [], []>} : vector<32x128xf32>, vector<128x64xf32>, vector<32x64xf32> -> vector<32x64xf32>
    %c600 = arith.constant 600 : index
    %c0_69 = arith.constant 0 : index
    %156 = vector.load %arg2[%c600, %c0_69] : memref<888x256xf32, #tpu.memory_space<vmem>>, vector<128x64xf32>
    %cst_70 = arith.constant dense<0.000000e+00> : vector<32x64xf32>
    %157 = tpu.matmul %93, %156, %cst_70 {dimension_numbers = #tpu.dot_dimension_numbers<[1], [0], [0], [1], [0, 0, 1, 1], [], []>} : vector<32x128xf32>, vector<128x64xf32>, vector<32x64xf32> -> vector<32x64xf32>
    %158 = arith.addf %155, %157 : vector<32x64xf32>
    %c15 = arith.constant 15 : index
    %c0_71 = arith.constant 0 : index
    %159 = vector.load %arg3[%c15, %c0_71] : memref<24x256xf32, #tpu.memory_space<vmem>>, vector<1x64xf32>
    %c16 = arith.constant 16 : index
    %c0_72 = arith.constant 0 : index
    %160 = vector.load %arg3[%c16, %c0_72] : memref<24x256xf32, #tpu.memory_space<vmem>>, vector<1x64xf32>
    %c17 = arith.constant 17 : index
    %c0_73 = arith.constant 0 : index
    %161 = vector.load %arg3[%c17, %c0_73] : memref<24x256xf32, #tpu.memory_space<vmem>>, vector<1x64xf32>
    %162 = vector.broadcast %159 : vector<1x64xf32> to vector<32x64xf32>
    %163 = arith.addf %158, %162 : vector<32x64xf32>
    %cst_74 = arith.constant 5.000000e-01 : f32
    %164 = vector.broadcast %cst_74 : f32 to vector<32x64xf32>
    %165 = arith.mulf %164, %163 : vector<32x64xf32>
    %166 = math.tanh %165 : vector<32x64xf32>
    %cst_75 = arith.constant dense<0.000000e+00> : vector<1x64xf32>
    %167 = tpu.matmul %1, %166, %cst_75 {dimension_numbers = #tpu.dot_dimension_numbers<[1], [0], [0], [1], [0, 0, 1, 1], [], []>} : vector<1x32xf32>, vector<32x64xf32>, vector<1x64xf32> -> vector<1x64xf32>
    %168 = arith.mulf %166, %166 : vector<32x64xf32>
    %cst_76 = arith.constant dense<0.000000e+00> : vector<1x64xf32>
    %169 = tpu.matmul %1, %168, %cst_76 {dimension_numbers = #tpu.dot_dimension_numbers<[1], [0], [0], [1], [0, 0, 1, 1], [], []>} : vector<1x32xf32>, vector<32x64xf32>, vector<1x64xf32> -> vector<1x64xf32>
    %cst_77 = arith.constant 3.125000e-02 : f32
    %170 = vector.broadcast %cst_77 : f32 to vector<1x64xf32>
    %171 = arith.mulf %167, %170 : vector<1x64xf32>
    %cst_78 = arith.constant 3.125000e-02 : f32
    %172 = vector.broadcast %cst_78 : f32 to vector<1x64xf32>
    %173 = arith.mulf %169, %172 : vector<1x64xf32>
    %174 = arith.mulf %171, %171 : vector<1x64xf32>
    %175 = arith.subf %173, %174 : vector<1x64xf32>
    %cst_79 = arith.constant 4.000000e-05 : f32
    %176 = vector.broadcast %cst_79 : f32 to vector<1x64xf32>
    %177 = arith.addf %175, %176 : vector<1x64xf32>
    %178 = math.rsqrt %177 : vector<1x64xf32>
    %179 = arith.mulf %160, %178 : vector<1x64xf32>
    %180 = arith.mulf %171, %179 : vector<1x64xf32>
    %181 = arith.subf %161, %180 : vector<1x64xf32>
    %182 = vector.broadcast %179 : vector<1x64xf32> to vector<32x64xf32>
    %183 = arith.mulf %166, %182 : vector<32x64xf32>
    %184 = vector.broadcast %181 : vector<1x64xf32> to vector<32x64xf32>
    %185 = arith.addf %183, %184 : vector<32x64xf32>
    %cst_80 = arith.constant dense<0.000000e+00> : vector<32x64xf32>
    %186 = tpu.matmul %0, %185, %cst_80 {dimension_numbers = #tpu.dot_dimension_numbers<[1], [0], [0], [1], [0, 0, 1, 1], [], []>} : vector<32x32xf32>, vector<32x64xf32>, vector<32x64xf32> -> vector<32x64xf32>
    %c728 = arith.constant 728 : index
    %c0_81 = arith.constant 0 : index
    %187 = vector.load %arg2[%c728, %c0_81] : memref<888x256xf32, #tpu.memory_space<vmem>>, vector<64x16xf32>
    %cst_82 = arith.constant dense<0.000000e+00> : vector<32x16xf32>
    %188 = tpu.matmul %186, %187, %cst_82 {dimension_numbers = #tpu.dot_dimension_numbers<[1], [0], [0], [1], [0, 0, 1, 1], [], []>} : vector<32x64xf32>, vector<64x16xf32>, vector<32x16xf32> -> vector<32x16xf32>
    %c792 = arith.constant 792 : index
    %c0_83 = arith.constant 0 : index
    %189 = vector.load %arg2[%c792, %c0_83] : memref<888x256xf32, #tpu.memory_space<vmem>>, vector<64x16xf32>
    %cst_84 = arith.constant dense<0.000000e+00> : vector<32x16xf32>
    %190 = tpu.matmul %63, %189, %cst_84 {dimension_numbers = #tpu.dot_dimension_numbers<[1], [0], [0], [1], [0, 0, 1, 1], [], []>} : vector<32x64xf32>, vector<64x16xf32>, vector<32x16xf32> -> vector<32x16xf32>
    %191 = arith.addf %188, %190 : vector<32x16xf32>
    %c18 = arith.constant 18 : index
    %c0_85 = arith.constant 0 : index
    %192 = vector.load %arg3[%c18, %c0_85] : memref<24x256xf32, #tpu.memory_space<vmem>>, vector<1x16xf32>
    %c19 = arith.constant 19 : index
    %c0_86 = arith.constant 0 : index
    %193 = vector.load %arg3[%c19, %c0_86] : memref<24x256xf32, #tpu.memory_space<vmem>>, vector<1x16xf32>
    %c20 = arith.constant 20 : index
    %c0_87 = arith.constant 0 : index
    %194 = vector.load %arg3[%c20, %c0_87] : memref<24x256xf32, #tpu.memory_space<vmem>>, vector<1x16xf32>
    %195 = vector.broadcast %192 : vector<1x16xf32> to vector<32x16xf32>
    %196 = arith.addf %191, %195 : vector<32x16xf32>
    %cst_88 = arith.constant 5.000000e-01 : f32
    %197 = vector.broadcast %cst_88 : f32 to vector<32x16xf32>
    %198 = arith.mulf %197, %196 : vector<32x16xf32>
    %199 = math.tanh %198 : vector<32x16xf32>
    %cst_89 = arith.constant dense<0.000000e+00> : vector<1x16xf32>
    %200 = tpu.matmul %1, %199, %cst_89 {dimension_numbers = #tpu.dot_dimension_numbers<[1], [0], [0], [1], [0, 0, 1, 1], [], []>} : vector<1x32xf32>, vector<32x16xf32>, vector<1x16xf32> -> vector<1x16xf32>
    %201 = arith.mulf %199, %199 : vector<32x16xf32>
    %cst_90 = arith.constant dense<0.000000e+00> : vector<1x16xf32>
    %202 = tpu.matmul %1, %201, %cst_90 {dimension_numbers = #tpu.dot_dimension_numbers<[1], [0], [0], [1], [0, 0, 1, 1], [], []>} : vector<1x32xf32>, vector<32x16xf32>, vector<1x16xf32> -> vector<1x16xf32>
    %cst_91 = arith.constant 3.125000e-02 : f32
    %203 = vector.broadcast %cst_91 : f32 to vector<1x16xf32>
    %204 = arith.mulf %200, %203 : vector<1x16xf32>
    %cst_92 = arith.constant 3.125000e-02 : f32
    %205 = vector.broadcast %cst_92 : f32 to vector<1x16xf32>
    %206 = arith.mulf %202, %205 : vector<1x16xf32>
    %207 = arith.mulf %204, %204 : vector<1x16xf32>
    %208 = arith.subf %206, %207 : vector<1x16xf32>
    %cst_93 = arith.constant 4.000000e-05 : f32
    %209 = vector.broadcast %cst_93 : f32 to vector<1x16xf32>
    %210 = arith.addf %208, %209 : vector<1x16xf32>
    %211 = math.rsqrt %210 : vector<1x16xf32>
    %212 = arith.mulf %193, %211 : vector<1x16xf32>
    %213 = arith.mulf %204, %212 : vector<1x16xf32>
    %214 = arith.subf %194, %213 : vector<1x16xf32>
    %215 = vector.broadcast %212 : vector<1x16xf32> to vector<32x16xf32>
    %216 = arith.mulf %199, %215 : vector<32x16xf32>
    %217 = vector.broadcast %214 : vector<1x16xf32> to vector<32x16xf32>
    %218 = arith.addf %216, %217 : vector<32x16xf32>
    %cst_94 = arith.constant dense<0.000000e+00> : vector<32x16xf32>
    %219 = tpu.matmul %0, %218, %cst_94 {dimension_numbers = #tpu.dot_dimension_numbers<[1], [0], [0], [1], [0, 0, 1, 1], [], []>} : vector<32x32xf32>, vector<32x16xf32>, vector<32x16xf32> -> vector<32x16xf32>
    %c856 = arith.constant 856 : index
    %c0_95 = arith.constant 0 : index
    %220 = vector.load %arg2[%c856, %c0_95] : memref<888x256xf32, #tpu.memory_space<vmem>>, vector<16x2xf32>
    %cst_96 = arith.constant dense<0.000000e+00> : vector<32x2xf32>
    %221 = tpu.matmul %219, %220, %cst_96 {dimension_numbers = #tpu.dot_dimension_numbers<[1], [0], [0], [1], [0, 0, 1, 1], [], []>} : vector<32x16xf32>, vector<16x2xf32>, vector<32x2xf32> -> vector<32x2xf32>
    %c872 = arith.constant 872 : index
    %c0_97 = arith.constant 0 : index
    %222 = vector.load %arg2[%c872, %c0_97] : memref<888x256xf32, #tpu.memory_space<vmem>>, vector<16x2xf32>
    %cst_98 = arith.constant dense<0.000000e+00> : vector<32x2xf32>
    %223 = tpu.matmul %33, %222, %cst_98 {dimension_numbers = #tpu.dot_dimension_numbers<[1], [0], [0], [1], [0, 0, 1, 1], [], []>} : vector<32x16xf32>, vector<16x2xf32>, vector<32x2xf32> -> vector<32x2xf32>
    %224 = arith.addf %221, %223 : vector<32x2xf32>
    %c21 = arith.constant 21 : index
    %c0_99 = arith.constant 0 : index
    %225 = vector.load %arg3[%c21, %c0_99] : memref<24x256xf32, #tpu.memory_space<vmem>>, vector<1x2xf32>
    %c22 = arith.constant 22 : index
    %c0_100 = arith.constant 0 : index
    %226 = vector.load %arg3[%c22, %c0_100] : memref<24x256xf32, #tpu.memory_space<vmem>>, vector<1x2xf32>
    %c23 = arith.constant 23 : index
    %c0_101 = arith.constant 0 : index
    %227 = vector.load %arg3[%c23, %c0_101] : memref<24x256xf32, #tpu.memory_space<vmem>>, vector<1x2xf32>
    %228 = vector.broadcast %225 : vector<1x2xf32> to vector<32x2xf32>
    %229 = arith.addf %224, %228 : vector<32x2xf32>
    %cst_102 = arith.constant 5.000000e-01 : f32
    %230 = vector.broadcast %cst_102 : f32 to vector<32x2xf32>
    %231 = arith.mulf %230, %229 : vector<32x2xf32>
    %232 = math.tanh %231 : vector<32x2xf32>
    %cst_103 = arith.constant dense<0.000000e+00> : vector<1x2xf32>
    %233 = tpu.matmul %1, %232, %cst_103 {dimension_numbers = #tpu.dot_dimension_numbers<[1], [0], [0], [1], [0, 0, 1, 1], [], []>} : vector<1x32xf32>, vector<32x2xf32>, vector<1x2xf32> -> vector<1x2xf32>
    %234 = arith.mulf %232, %232 : vector<32x2xf32>
    %cst_104 = arith.constant dense<0.000000e+00> : vector<1x2xf32>
    %235 = tpu.matmul %1, %234, %cst_104 {dimension_numbers = #tpu.dot_dimension_numbers<[1], [0], [0], [1], [0, 0, 1, 1], [], []>} : vector<1x32xf32>, vector<32x2xf32>, vector<1x2xf32> -> vector<1x2xf32>
    %cst_105 = arith.constant 3.125000e-02 : f32
    %236 = vector.broadcast %cst_105 : f32 to vector<1x2xf32>
    %237 = arith.mulf %233, %236 : vector<1x2xf32>
    %cst_106 = arith.constant 3.125000e-02 : f32
    %238 = vector.broadcast %cst_106 : f32 to vector<1x2xf32>
    %239 = arith.mulf %235, %238 : vector<1x2xf32>
    %240 = arith.mulf %237, %237 : vector<1x2xf32>
    %241 = arith.subf %239, %240 : vector<1x2xf32>
    %cst_107 = arith.constant 4.000000e-05 : f32
    %242 = vector.broadcast %cst_107 : f32 to vector<1x2xf32>
    %243 = arith.addf %241, %242 : vector<1x2xf32>
    %244 = math.rsqrt %243 : vector<1x2xf32>
    %245 = arith.mulf %226, %244 : vector<1x2xf32>
    %246 = arith.mulf %237, %245 : vector<1x2xf32>
    %247 = arith.subf %227, %246 : vector<1x2xf32>
    %248 = vector.broadcast %245 : vector<1x2xf32> to vector<32x2xf32>
    %249 = arith.mulf %232, %248 : vector<32x2xf32>
    %250 = vector.broadcast %247 : vector<1x2xf32> to vector<32x2xf32>
    %251 = arith.addf %249, %250 : vector<32x2xf32>
    %252 = vector.extract_strided_slice %251 {offsets = [0, 1], sizes = [32, 1], strides = [1, 1]} : vector<32x2xf32> to vector<32x1xf32>
    %253 = vector.extract_strided_slice %251 {offsets = [0, 0], sizes = [32, 1], strides = [1, 1]} : vector<32x2xf32> to vector<32x1xf32>
    %254 = arith.subf %252, %253 : vector<32x1xf32>
    %cst_108 = arith.constant 5.000000e-01 : f32
    %255 = vector.broadcast %cst_108 : f32 to vector<32x1xf32>
    %256 = arith.mulf %255, %254 : vector<32x1xf32>
    %257 = math.tanh %256 : vector<32x1xf32>
    %cst_109 = arith.constant 5.000000e-01 : f32
    %258 = vector.broadcast %cst_109 : f32 to vector<32x1xf32>
    %259 = arith.mulf %258, %257 : vector<32x1xf32>
    %cst_110 = arith.constant 5.000000e-01 : f32
    %260 = vector.broadcast %cst_110 : f32 to vector<32x1xf32>
    %261 = arith.addf %259, %260 : vector<32x1xf32>
    %cst_111 = arith.constant 1.000000e+00 : f32
    %262 = vector.broadcast %cst_111 : f32 to vector<32x1xf32>
    %263 = arith.subf %262, %261 : vector<32x1xf32>
    %c0_112 = arith.constant 0 : index
    %c0_113 = arith.constant 0 : index
    %264 = vector.load %arg4[%c0_112, %c0_113] : memref<32x2xf32, #tpu.memory_space<vmem>>, vector<32x1xf32>
    tpu.vector_store %arg4[%c0_112, %c0_113], %263 {strides = array<i32>} : memref<32x2xf32, #tpu.memory_space<vmem>>, vector<32x1xf32>,
    %c0_114 = arith.constant 0 : index
    %c1_115 = arith.constant 1 : index
    %265 = vector.load %arg4[%c0_114, %c1_115] : memref<32x2xf32, #tpu.memory_space<vmem>>, vector<32x1xf32>
    tpu.vector_store %arg4[%c0_114, %c1_115], %261 {strides = array<i32>} : memref<32x2xf32, #tpu.memory_space<vmem>>, vector<32x1xf32>,
    return
  }
}

</mosaic_0001>

<llo_original>
// kernel: netconnect1_forward.1
$region0: #{netconnect1_forward.1}
  #allocation0 [shape = 'u32[]', space=smem, size = 0x4, offset = 0x4, fixed_abs, tag = 'smem constant byte address 0x4 - core index']
  #allocation1 [shape = 'u32[144,128]{1,0:T(1,128)}', space=vmem, size = 0x12000, scoped, tag = 'internal scratch']
  %s0 = inlined_call_operand.vmem [shape: f32[32,32], index: 0, kind: input, shape index: {}]
  %s1 = inlined_call_operand.vmem [shape: f32[32,3], index: 1, kind: input, shape index: {}]
  %s2 = inlined_call_operand.hbm [shape: f32[888,256], index: 2, kind: input, shape index: {}]
  %s3 = inlined_call_operand.hbm [shape: f32[24,256], index: 3, kind: input, shape index: {}]
  %s4 = inlined_call_operand.vmem [shape: f32[32,2], index: 4, kind: output, shape index: {}]
  %s5 = sld [smem:[#allocation0]]
  $region34: #{netconnect1_forward.1} parent=0
    _
  %s7 = ssub.s32 1, %s5
  %s8 = scalar_select 0, %s7, %s5
  $region1: #{netconnect1_forward.1} parent=0
    #allocation2 [shape = 'u8[909312]{0}', space=vmem, size = 0xde000, scoped, tag = 'input window, operand 2, single buffered']
    #allocation3 [shape = 's32[1]{0}', space=sflag, size = 0x4, scoped, tag = 'scoped memory for netconnect1_forward.1']
    #allocation4 [shape = 'u8[24576]{0}', space=vmem, size = 0x6000, scoped, tag = 'input window, operand 3, single buffered']
    #allocation5 [shape = 's32[1]{0}', space=sflag, size = 0x4, scoped, tag = 'scoped memory for netconnect1_forward.1']
    %9 = vsyncpa [#allocation3], 0
    %10 = vsyncpa [#allocation5], 0
    // Predicated region
    $region2: #{netconnect1_forward.1} parent=1 // pred_check
      _
    $region3: #{netconnect1_forward.1} parent=1 // pred_check_branch
      %12 = sbr.rel (0) target = $region5
    $region4: #{netconnect1_forward.1} parent=1 // pred_region
      _
    $region5: #{netconnect1_forward.1} parent=1 // pred_fallthru
      _
    // Predicated region
    $region6: #{netconnect1_forward.1} parent=1 // pred_check
      _
    $region7: #{netconnect1_forward.1} parent=1 // pred_check_branch
      %14 = sbr.rel (0) target = $region9
    $region8: #{netconnect1_forward.1} parent=1 // pred_region
      _
    $region9: #{netconnect1_forward.1} parent=1 // pred_fallthru
      _
    // Predicated region
    $region10: #{netconnect1_forward.1} parent=1 // pred_check
      _
    $region11: #{netconnect1_forward.1} parent=1 // pred_check_branch
      %16 = sbr.rel (0) target = $region13
    $region12: #{netconnect1_forward.1} parent=1 // pred_region
      %s18 = ssub.s32 28416, 28416
      %19 = vsyncadd [#allocation3], %s18
      %s20 = sshll.u32 [#allocation2], 4
      %s21 = int_to_ptr.vmem [resolvable:$true] %s20
      %26 = dma.hbm_to_vmem [thread:$0]  %s2, 28416, %s21, [#allocation3], 256, 256, 16
    $region13: #{netconnect1_forward.1} parent=1 // pred_fallthru
      _
    // Predicated region
    $region14: #{netconnect1_forward.1} parent=1 // pred_check
      _
    $region15: #{netconnect1_forward.1} parent=1 // pred_check_branch
      %28 = sbr.rel (0) target = $region17
    $region16: #{netconnect1_forward.1} parent=1 // pred_region
      %s30 = ssub.s32 768, 768
      %31 = vsyncadd [#allocation5], %s30
      %s32 = sshll.u32 [#allocation4], 4
      %s33 = int_to_ptr.vmem [resolvable:$true] %s32
      %38 = dma.hbm_to_vmem [thread:$0]  %s3, 768, %s33, [#allocation5], 256, 256, 16
    $region17: #{netconnect1_forward.1} parent=1 // pred_fallthru
      _
    // Predicated region
    $region18: #{netconnect1_forward.1} parent=1 // pred_check
      _
    $region19: #{netconnect1_forward.1} parent=1 // pred_check_branch
      %40 = sbr.rel (0) target = $region21
    $region20: #{netconnect1_forward.1} parent=1 // pred_region
      %41 = dma.done [#allocation3], 28416
    $region21: #{netconnect1_forward.1} parent=1 // pred_fallthru
      _
    // Predicated region
    $region22: #{netconnect1_forward.1} parent=1 // pred_check
      _
    $region23: #{netconnect1_forward.1} parent=1 // pred_check_branch
      %43 = sbr.rel (0) target = $region25
    $region24: #{netconnect1_forward.1} parent=1 // pred_region
      %44 = dma.done [#allocation5], 768
    $region25: #{netconnect1_forward.1} parent=1 // pred_fallthru
      _
    %v45 = vld [vmem:[%s0] sm:$0xff]
    %v46 = vld [vmem:[%s0 + $0x8] sm:$0xff]
    %v47 = vld [vmem:[%s0 + $0x10] sm:$0xff]
    %v48 = vld [vmem:[%s0 + $0x18] sm:$0xff]
    %v49 = vld [vmem:[%s1] sm:$0xff]
    %v50 = vld [vmem:[%s1 + $0x8] sm:$0xff]
    %v51 = vld [vmem:[%s1 + $0x10] sm:$0xff]
    %v52 = vld [vmem:[%s1 + $0x18] sm:$0xff]
    %vm53 = vcmask 261120
    %v55 = vsel %vm53, %v45, 0
    %v58 = vsel %vm53, %v46, 0
    %v61 = vsel %vm53, %v47, 0
    %v64 = vsel %vm53, %v48, 0
    %66 = vmatprep.subr.mxu0 0.0
    %67 = vmatpush1.msra.mxu0 %v49
    %68 = vmatprep.subr.mxu0 0.0
    %69 = vmatpush1.msra.mxu0 %v50
    %70 = vmatprep.subr.mxu0 0.0
    %71 = vmatpush1.msra.mxu0 %v51
    %72 = vmatprep.subr.mxu0 0.0
    %73 = vmatpush1.msra.mxu0 %v52
    %74 = vmatprep.subr.mxu0 0.0
    %75 = vmatpush1.msra.mxu0 0.0
    %76 = vmatprep.subr.mxu0 0.0
    %77 = vmatpush1.msra.mxu0 0.0
    %78 = vmatprep.subr.mxu0 0.0
    %79 = vmatpush1.msra.mxu0 0.0
    %80 = vmatprep.subr.mxu0 0.0
    %81 = vmatpush1.msra.mxu0 0.0
    %82 = vmatprep.subr.mxu0 0.0
    %83 = vmatpush1.msra.mxu0 0.0
    %84 = vmatprep.subr.mxu0 0.0
    %85 = vmatpush1.msra.mxu0 0.0
    %86 = vmatprep.subr.mxu0 0.0
    %87 = vmatpush1.msra.mxu0 0.0
    %88 = vmatprep.subr.mxu0 0.0
    %89 = vmatpush1.msra.mxu0 0.0
    %90 = vmatprep.subr.mxu0 0.0
    %91 = vmatpush1.msra.mxu0 0.0
    %92 = vmatprep.subr.mxu0 0.0
    %93 = vmatpush1.msra.mxu0 0.0
    %94 = vmatprep.subr.mxu0 0.0
    %95 = vmatpush1.msra.mxu0 0.0
    %96 = vmatprep.subr.mxu0 0.0
    %97 = vmatpush1.msra.mxu0 0.0
    %98 = vmatprep.subr.mxu0 0.0
    %99 = vmatpush1.msra.mxu0 0.0
    %100 = vmatprep.subr.mxu0 0.0
    %101 = vmatpush1.msra.mxu0 0.0
    %102 = vmatprep.subr.mxu0 0.0
    %103 = vmatpush1.msra.mxu0 0.0
    %104 = vmatprep.subr.mxu0 0.0
    %105 = vmatpush1.msra.mxu0 0.0
    %106 = vmatprep.subr.mxu0 0.0
    %107 = vmatpush1.msra.mxu0 0.0
    %108 = vmatprep.subr.mxu0 0.0
    %109 = vmatpush1.msra.mxu0 0.0
    %110 = vmatprep.subr.mxu0 0.0
    %111 = vmatpush1.msra.mxu0 0.0
    %112 = vmatprep.subr.mxu0 0.0
    %113 = vmatpush1.msra.mxu0 0.0
    %114 = vmatprep.subr.mxu0 0.0
    %115 = vmatpush1.msra.mxu0 0.0
    %116 = vmatprep.subr.mxu0 0.0
    %117 = vmatpush1.msra.mxu0 0.0
    %118 = vmatprep.subr.mxu0 0.0
    %119 = vmatpush1.msra.mxu0 0.0
    %120 = vmatprep.subr.mxu0 0.0
    %121 = vmatpush1.msra.mxu0 0.0
    %122 = vmatprep.subr.mxu0 0.0
    %123 = vmatpush1.msra.mxu0 0.0
    %124 = vmatprep.subr.mxu0 0.0
    %125 = vmatpush1.msra.mxu0 0.0
    %126 = vmatprep.subr.mxu0 0.0
    %127 = vmatpush1.msra.mxu0 0.0
    %128 = vmatprep.subr.mxu0 0.0
    %129 = vmatpush1.msra.mxu0 0.0
    %130 = vmatprep.mubr.f32.mxu0 0.0
    %131 = vmatmul.mubr.f32.gmra.mrb[0].mxu0 %v55
    %v132 = vpop.f32.mrb[0].mxu0
    %v133 = vadd.f32 0.0, %v132
    %v134 = vpop.f32.mrb[0].mxu0
    %135 = vmatprep.mubr.f32.mxu0 0.0
    %136 = vmatmul.mubr.f32.gmra.mrb[0].mxu0 %v58
    %v137 = vpop.f32.mrb[0].mxu0
    %v138 = vadd.f32 0.0, %v137
    %v139 = vpop.f32.mrb[0].mxu0
    %140 = vmatprep.mubr.f32.mxu0 0.0
    %141 = vmatmul.mubr.f32.gmra.mrb[0].mxu0 %v61
    %v142 = vpop.f32.mrb[0].mxu0
    %v143 = vadd.f32 0.0, %v142
    %v144 = vpop.f32.mrb[0].mxu0
    %145 = vmatprep.mubr.f32.mxu0 0.0
    %146 = vmatmul.mubr.f32.gmra.mrb[0].mxu0 %v64
    %v147 = vpop.f32.mrb[0].mxu0
    %v148 = vadd.f32 0.0, %v147
    %v149 = vpop.f32.mrb[0].mxu0
    %150 = vdwg.mxu0
    %v151 = vld [vmem:[#allocation2] sm:$0x7]
    %v152 = vld [vmem:[#allocation4] ss:$0 sm:$0xff]
    %v153 = vld [vmem:[#allocation4 + $0x1] ss:$0 sm:$0xff]
    %v154 = vld [vmem:[#allocation4 + $0x2] ss:$0 sm:$0xff]
    %vm155 = vcmask 23552
    %v157 = vsel %vm155, %v133, 0
    %v160 = vsel %vm155, %v138, 0
    %v163 = vsel %vm155, %v143, 0
    %v166 = vsel %vm155, %v148, 0
    %vm168 = vcmask 1042432
    %v170 = vsel %vm168, %v151, 0
    %172 = vmatprep.subr.mxu0 0.0
    %173 = vmatpush1.msra.mxu0 %v170
    %174 = vmatprep.subr.mxu0 0.0
    %175 = vmatpush1.msra.mxu0 0.0
    %176 = vmatprep.subr.mxu0 0.0
    %177 = vmatpush1.msra.mxu0 0.0
    %178 = vmatprep.subr.mxu0 0.0
    %179 = vmatpush1.msra.mxu0 0.0
    %180 = vmatprep.subr.mxu0 0.0
    %181 = vmatpush1.msra.mxu0 0.0
    %182 = vmatprep.subr.mxu0 0.0
    %183 = vmatpush1.msra.mxu0 0.0
    %184 = vmatprep.subr.mxu0 0.0
    %185 = vmatpush1.msra.mxu0 0.0
    %186 = vmatprep.subr.mxu0 0.0
    %187 = vmatpush1.msra.mxu0 0.0
    %188 = vmatprep.subr.mxu0 0.0
    %189 = vmatpush1.msra.mxu0 0.0
    %190 = vmatprep.subr.mxu0 0.0
    %191 = vmatpush1.msra.mxu0 0.0
    %192 = vmatprep.subr.mxu0 0.0
    %193 = vmatpush1.msra.mxu0 0.0
    %194 = vmatprep.subr.mxu0 0.0
    %195 = vmatpush1.msra.mxu0 0.0
    %196 = vmatprep.subr.mxu0 0.0
    %197 = vmatpush1.msra.mxu0 0.0
    %198 = vmatprep.subr.mxu0 0.0
    %199 = vmatpush1.msra.mxu0 0.0
    %200 = vmatprep.subr.mxu0 0.0
    %201 = vmatpush1.msra.mxu0 0.0
    %202 = vmatprep.subr.mxu0 0.0
    %203 = vmatpush1.msra.mxu0 0.0
    %204 = vmatprep.subr.mxu0 0.0
    %205 = vmatpush1.msra.mxu0 0.0
    %206 = vmatprep.subr.mxu0 0.0
    %207 = vmatpush1.msra.mxu0 0.0
    %208 = vmatprep.subr.mxu0 0.0
    %209 = vmatpush1.msra.mxu0 0.0
    %210 = vmatprep.subr.mxu0 0.0
    %211 = vmatpush1.msra.mxu0 0.0
    %212 = vmatprep.subr.mxu0 0.0
    %213 = vmatpush1.msra.mxu0 0.0
    %214 = vmatprep.subr.mxu0 0.0
    %215 = vmatpush1.msra.mxu0 0.0
    %216 = vmatprep.subr.mxu0 0.0
    %217 = vmatpush1.msra.mxu0 0.0
    %218 = vmatprep.subr.mxu0 0.0
    %219 = vmatpush1.msra.mxu0 0.0
    %220 = vmatprep.subr.mxu0 0.0
    %221 = vmatpush1.msra.mxu0 0.0
    %222 = vmatprep.subr.mxu0 0.0
    %223 = vmatpush1.msra.mxu0 0.0
    %224 = vmatprep.subr.mxu0 0.0
    %225 = vmatpush1.msra.mxu0 0.0
    %226 = vmatprep.subr.mxu0 0.0
    %227 = vmatpush1.msra.mxu0 0.0
    %228 = vmatprep.subr.mxu0 0.0
    %229 = vmatpush1.msra.mxu0 0.0
    %230 = vmatprep.subr.mxu0 0.0
    %231 = vmatpush1.msra.mxu0 0.0
    %232 = vmatprep.subr.mxu0 0.0
    %233 = vmatpush1.msra.mxu0 0.0
    %234 = vmatprep.subr.mxu0 0.0
    %235 = vmatpush1.msra.mxu0 0.0
    %236 = vmatprep.mubr.f32.mxu0 0.0
    %237 = vmatmul.mubr.f32.gmra.mrb[0].mxu0 %v157
    %v238 = vpop.f32.mrb[0].mxu0
    %v239 = vadd.f32 %v152, %v238
    %v240 = vpop.f32.mrb[0].mxu0
    %241 = vmatprep.mubr.f32.mxu0 0.0
    %242 = vmatmul.mubr.f32.gmra.mrb[0].mxu0 %v160
    %v243 = vpop.f32.mrb[0].mxu0
    %v244 = vadd.f32 %v152, %v243
    %v245 = vpop.f32.mrb[0].mxu0
    %246 = vmatprep.mubr.f32.mxu0 0.0
    %247 = vmatmul.mubr.f32.gmra.mrb[0].mxu0 %v163
    %v248 = vpop.f32.mrb[0].mxu0
    %v249 = vadd.f32 %v152, %v248
    %v250 = vpop.f32.mrb[0].mxu0
    %251 = vmatprep.mubr.f32.mxu0 0.0
    %252 = vmatmul.mubr.f32.gmra.mrb[0].mxu0 %v166
    %v253 = vpop.f32.mrb[0].mxu0
    %v254 = vadd.f32 %v152, %v253
    %v255 = vpop.f32.mrb[0].mxu0
    %256 = vdwg.mxu0
    %v257 = vmul.f32 %v239, 0.5
    %v258 = vmul.f32 %v244, 0.5
    %v259 = vmul.f32 %v249, 0.5
    %v260 = vmul.f32 %v254, 0.5
    %v261 = vtanh.pop %v257
    %v262 = vtanh.pop %v258
    %v263 = vtanh.pop %v259
    %v264 = vtanh.pop %v260
    %v266 = vsel %vm53, 1.0, 0
    %268 = vmatprep.subr.mxu0 0.0
    %269 = vmatpush1.msra.mxu0 %v261
    %270 = vmatprep.subr.mxu0 0.0
    %271 = vmatpush1.msra.mxu0 %v262
    %272 = vmatprep.subr.mxu0 0.0
    %273 = vmatpush1.msra.mxu0 %v263
    %274 = vmatprep.subr.mxu0 0.0
    %275 = vmatpush1.msra.mxu0 %v264
    %276 = vmatprep.subr.mxu0 0.0
    %277 = vmatpush1.msra.mxu0 0.0
    %278 = vmatprep.subr.mxu0 0.0
    %279 = vmatpush1.msra.mxu0 0.0
    %280 = vmatprep.subr.mxu0 0.0
    %281 = vmatpush1.msra.mxu0 0.0
    %282 = vmatprep.subr.mxu0 0.0
    %283 = vmatpush1.msra.mxu0 0.0
    %284 = vmatprep.subr.mxu0 0.0
    %285 = vmatpush1.msra.mxu0 0.0
    %286 = vmatprep.subr.mxu0 0.0
    %287 = vmatpush1.msra.mxu0 0.0
    %288 = vmatprep.subr.mxu0 0.0
    %289 = vmatpush1.msra.mxu0 0.0
    %290 = vmatprep.subr.mxu0 0.0
    %291 = vmatpush1.msra.mxu0 0.0
    %292 = vmatprep.subr.mxu0 0.0
    %293 = vmatpush1.msra.mxu0 0.0
    %294 = vmatprep.subr.mxu0 0.0
    %295 = vmatpush1.msra.mxu0 0.0
    %296 = vmatprep.subr.mxu0 0.0
    %297 = vmatpush1.msra.mxu0 0.0
    %298 = vmatprep.subr.mxu0 0.0
    %299 = vmatpush1.msra.mxu0 0.0
    %300 = vmatprep.subr.mxu0 0.0
    %301 = vmatpush1.msra.mxu0 0.0
    %302 = vmatprep.subr.mxu0 0.0
    %303 = vmatpush1.msra.mxu0 0.0
    %304 = vmatprep.subr.mxu0 0.0
    %305 = vmatpush1.msra.mxu0 0.0
    %306 = vmatprep.subr.mxu0 0.0
    %307 = vmatpush1.msra.mxu0 0.0
    %308 = vmatprep.subr.mxu0 0.0
    %309 = vmatpush1.msra.mxu0 0.0
    %310 = vmatprep.subr.mxu0 0.0
    %311 = vmatpush1.msra.mxu0 0.0
    %312 = vmatprep.subr.mxu0 0.0
    %313 = vmatpush1.msra.mxu0 0.0
    %314 = vmatprep.subr.mxu0 0.0
    %315 = vmatpush1.msra.mxu0 0.0
    %316 = vmatprep.subr.mxu0 0.0
    %317 = vmatpush1.msra.mxu0 0.0
    %318 = vmatprep.subr.mxu0 0.0
    %319 = vmatpush1.msra.mxu0 0.0
    %320 = vmatprep.subr.mxu0 0.0
    %321 = vmatpush1.msra.mxu0 0.0
    %322 = vmatprep.subr.mxu0 0.0
    %323 = vmatpush1.msra.mxu0 0.0
    %324 = vmatprep.subr.mxu0 0.0
    %325 = vmatpush1.msra.mxu0 0.0
    %326 = vmatprep.subr.mxu0 0.0
    %327 = vmatpush1.msra.mxu0 0.0
    %328 = vmatprep.subr.mxu0 0.0
    %329 = vmatpush1.msra.mxu0 0.0
    %330 = vmatprep.subr.mxu0 0.0
    %331 = vmatpush1.msra.mxu0 0.0
    %332 = vmatprep.mubr.f32.mxu0 0.0
    %333 = vmatmul.mubr.f32.gmra.mrb[0].mxu0 %v266
    %v334 = vpop.f32.mrb[0].mxu0
    %v335 = vadd.f32 0.0, %v334
    %v336 = vpop.f32.mrb[0].mxu0
    %337 = vdwg.mxu0
    %v338 = vmul.f32 %v261, %v261
    %v339 = vmul.f32 %v262, %v262
    %v340 = vmul.f32 %v263, %v263
    %v341 = vmul.f32 %v264, %v264
    %342 = vmatprep.subr.mxu0 0.0
    %343 = vmatpush1.msra.mxu0 %v338
    %344 = vmatprep.subr.mxu0 0.0
    %345 = vmatpush1.msra.mxu0 %v339
    %346 = vmatprep.subr.mxu0 0.0
    %347 = vmatpush1.msra.mxu0 %v340
    %348 = vmatprep.subr.mxu0 0.0
    %349 = vmatpush1.msra.mxu0 %v341
    %350 = vmatprep.subr.mxu0 0.0
    %351 = vmatpush1.msra.mxu0 0.0
    %352 = vmatprep.subr.mxu0 0.0
    %353 = vmatpush1.msra.mxu0 0.0
    %354 = vmatprep.subr.mxu0 0.0
    %355 = vmatpush1.msra.mxu0 0.0
    %356 = vmatprep.subr.mxu0 0.0
    %357 = vmatpush1.msra.mxu0 0.0
    %358 = vmatprep.subr.mxu0 0.0
    %359 = vmatpush1.msra.mxu0 0.0
    %360 = vmatprep.subr.mxu0 0.0
    %361 = vmatpush1.msra.mxu0 0.0
    %362 = vmatprep.subr.mxu0 0.0
    %363 = vmatpush1.msra.mxu0 0.0
    %364 = vmatprep.subr.mxu0 0.0
    %365 = vmatpush1.msra.mxu0 0.0
    %366 = vmatprep.subr.mxu0 0.0
    %367 = vmatpush1.msra.mxu0 0.0
    %368 = vmatprep.subr.mxu0 0.0
    %369 = vmatpush1.msra.mxu0 0.0
    %370 = vmatprep.subr.mxu0 0.0
    %371 = vmatpush1.msra.mxu0 0.0
    %372 = vmatprep.subr.mxu0 0.0
    %373 = vmatpush1.msra.mxu0 0.0
    %374 = vmatprep.subr.mxu0 0.0
    %375 = vmatpush1.msra.mxu0 0.0
    %376 = vmatprep.subr.mxu0 0.0
    %377 = vmatpush1.msra.mxu0 0.0
    %378 = vmatprep.subr.mxu0 0.0
    %379 = vmatpush1.msra.mxu0 0.0
    %380 = vmatprep.subr.mxu0 0.0
    %381 = vmatpush1.msra.mxu0 0.0
    %382 = vmatprep.subr.mxu0 0.0
    %383 = vmatpush1.msra.mxu0 0.0
    %384 = vmatprep.subr.mxu0 0.0
    %385 = vmatpush1.msra.mxu0 0.0
    %386 = vmatprep.subr.mxu0 0.0
    %387 = vmatpush1.msra.mxu0 0.0
    %388 = vmatprep.subr.mxu0 0.0
    %389 = vmatpush1.msra.mxu0 0.0
    %390 = vmatprep.subr.mxu0 0.0
    %391 = vmatpush1.msra.mxu0 0.0
    %392 = vmatprep.subr.mxu0 0.0
    %393 = vmatpush1.msra.mxu0 0.0
    %394 = vmatprep.subr.mxu0 0.0
    %395 = vmatpush1.msra.mxu0 0.0
    %396 = vmatprep.subr.mxu0 0.0
    %397 = vmatpush1.msra.mxu0 0.0
    %398 = vmatprep.subr.mxu0 0.0
    %399 = vmatpush1.msra.mxu0 0.0
    %400 = vmatprep.subr.mxu0 0.0
    %401 = vmatpush1.msra.mxu0 0.0
    %402 = vmatprep.subr.mxu0 0.0
    %403 = vmatpush1.msra.mxu0 0.0
    %404 = vmatprep.subr.mxu0 0.0
    %405 = vmatpush1.msra.mxu0 0.0
    %406 = vmatprep.mubr.f32.mxu0 0.0
    %407 = vmatmul.mubr.f32.gmra.mrb[0].mxu0 %v266
    %v408 = vpop.f32.mrb[0].mxu0
    %v409 = vadd.f32 0.0, %v408
    %v410 = vpop.f32.mrb[0].mxu0
    %411 = vdwg.mxu0
    %v412 = vmul.f32 %v335, 0.03125
    %v413 = vmul.f32 %v409, 0.03125
    %v414 = vmul.f32 %v412, %v412
    %v415 = vsub.f32 %v413, %v414
    %v416 = vadd.f32 %v415, 4e-05
    %v417 = vrsqrt.pop %v416
    %v418 = vmul.f32 %v153, %v417
    %v419 = vmul.f32 %v412, %v418
    %v420 = vsub.f32 %v154, %v419
    %v421 = vlaneseq
    %v422 = vshrl.u32 %v421, 7
    %v423 = vsub.s32 0, %v422
    %v424 = vrot.slane %v418, %v423
    %v425 = vmul.f32 %v261, %v424
    %v426 = vmul.f32 %v262, %v424
    %v427 = vmul.f32 %v263, %v424
    %v428 = vmul.f32 %v264, %v424
    %v429 = vlaneseq
    %v430 = vshrl.u32 %v429, 7
    %v431 = vsub.s32 0, %v430
    %v432 = vrot.slane %v420, %v431
    %v433 = vadd.f32 %v425, %v432
    %v434 = vadd.f32 %v426, %v432
    %v435 = vadd.f32 %v427, %v432
    %v436 = vadd.f32 %v428, %v432
    %437 = vmatprep.subr.mxu0 0.0
    %438 = vmatpush1.msra.mxu0 %v433
    %439 = vmatprep.subr.mxu0 0.0
    %440 = vmatpush1.msra.mxu0 %v434
    %441 = vmatprep.subr.mxu0 0.0
    %442 = vmatpush1.msra.mxu0 %v435
    %443 = vmatprep.subr.mxu0 0.0
    %444 = vmatpush1.msra.mxu0 %v436
    %445 = vmatprep.subr.mxu0 0.0
    %446 = vmatpush1.msra.mxu0 0.0
    %447 = vmatprep.subr.mxu0 0.0
    %448 = vmatpush1.msra.mxu0 0.0
    %449 = vmatprep.subr.mxu0 0.0
    %450 = vmatpush1.msra.mxu0 0.0
    %451 = vmatprep.subr.mxu0 0.0
    %452 = vmatpush1.msra.mxu0 0.0
    %453 = vmatprep.subr.mxu0 0.0
    %454 = vmatpush1.msra.mxu0 0.0
    %455 = vmatprep.subr.mxu0 0.0
    %456 = vmatpush1.msra.mxu0 0.0
    %457 = vmatprep.subr.mxu0 0.0
    %458 = vmatpush1.msra.mxu0 0.0
    %459 = vmatprep.subr.mxu0 0.0
    %460 = vmatpush1.msra.mxu0 0.0
    %461 = vmatprep.subr.mxu0 0.0
    %462 = vmatpush1.msra.mxu0 0.0
    %463 = vmatprep.subr.mxu0 0.0
    %464 = vmatpush1.msra.mxu0 0.0
    %465 = vmatprep.subr.mxu0 0.0
    %466 = vmatpush1.msra.mxu0 0.0
    %467 = vmatprep.subr.mxu0 0.0
    %468 = vmatpush1.msra.mxu0 0.0
    %469 = vmatprep.subr.mxu0 0.0
    %470 = vmatpush1.msra.mxu0 0.0
    %471 = vmatprep.subr.mxu0 0.0
    %472 = vmatpush1.msra.mxu0 0.0
    %473 = vmatprep.subr.mxu0 0.0
    %474 = vmatpush1.msra.mxu0 0.0
    %475 = vmatprep.subr.mxu0 0.0
    %476 = vmatpush1.msra.mxu0 0.0
    %477 = vmatprep.subr.mxu0 0.0
    %478 = vmatpush1.msra.mxu0 0.0
    %479 = vmatprep.subr.mxu0 0.0
    %480 = vmatpush1.msra.mxu0 0.0
    %481 = vmatprep.subr.mxu0 0.0
    %482 = vmatpush1.msra.mxu0 0.0
    %483 = vmatprep.subr.mxu0 0.0
    %484 = vmatpush1.msra.mxu0 0.0
    %485 = vmatprep.subr.mxu0 0.0
    %486 = vmatpush1.msra.mxu0 0.0
    %487 = vmatprep.subr.mxu0 0.0
    %488 = vmatpush1.msra.mxu0 0.0
    %489 = vmatprep.subr.mxu0 0.0
    %490 = vmatpush1.msra.mxu0 0.0
    %491 = vmatprep.subr.mxu0 0.0
    %492 = vmatpush1.msra.mxu0 0.0
    %493 = vmatprep.subr.mxu0 0.0
    %494 = vmatpush1.msra.mxu0 0.0
    %495 = vmatprep.subr.mxu0 0.0
    %496 = vmatpush1.msra.mxu0 0.0
    %497 = vmatprep.subr.mxu0 0.0
    %498 = vmatpush1.msra.mxu0 0.0
    %499 = vmatprep.subr.mxu0 0.0
    %500 = vmatpush1.msra.mxu0 0.0
    %501 = vmatprep.mubr.f32.mxu0 0.0
    %502 = vmatmul.mubr.f32.gmra.mrb[0].mxu0 %v55
    %v503 = vpop.f32.mrb[0].mxu0
    %v504 = vadd.f32 0.0, %v503
    %v505 = vpop.f32.mrb[0].mxu0
    %506 = vmatprep.mubr.f32.mxu0 0.0
    %507 = vmatmul.mubr.f32.gmra.mrb[0].mxu0 %v58
    %v508 = vpop.f32.mrb[0].mxu0
    %v509 = vadd.f32 0.0, %v508
    %v510 = vpop.f32.mrb[0].mxu0
    %511 = vmatprep.mubr.f32.mxu0 0.0
    %512 = vmatmul.mubr.f32.gmra.mrb[0].mxu0 %v61
    %v513 = vpop.f32.mrb[0].mxu0
    %v514 = vadd.f32 0.0, %v513
    %v515 = vpop.f32.mrb[0].mxu0
    %516 = vmatprep.mubr.f32.mxu0 0.0
    %517 = vmatmul.mubr.f32.gmra.mrb[0].mxu0 %v64
    %v518 = vpop.f32.mrb[0].mxu0
    %v519 = vadd.f32 0.0, %v518
    %v520 = vpop.f32.mrb[0].mxu0
    %521 = vdwg.mxu0
    %v522 = vld [vmem:[#allocation2 + $0x10] sm:$0xff]
    %v523 = vld [vmem:[#allocation2 + $0x20] sm:$0xff]
    %v524 = vld [vmem:[#allocation4 + $0x3] ss:$0 sm:$0xff]
    %v525 = vld [vmem:[#allocation4 + $0x4] ss:$0 sm:$0xff]
    %v526 = vld [vmem:[#allocation4 + $0x5] ss:$0 sm:$0xff]
    %vm527 = vcmask 130048
    %v529 = vsel %vm527, %v504, 0
    %v532 = vsel %vm527, %v509, 0
    %v535 = vsel %vm527, %v514, 0
    %v538 = vsel %vm527, %v519, 0
    %540 = vmatprep.subr.mxu0 0.0
    %541 = vmatpush1.msra.mxu0 %v522
    %542 = vmatprep.subr.mxu0 0.0
    %543 = vmatpush1.msra.mxu0 %v523
    %544 = vmatprep.subr.mxu0 0.0
    %545 = vmatpush1.msra.mxu0 0.0
    %546 = vmatprep.subr.mxu0 0.0
    %547 = vmatpush1.msra.mxu0 0.0
    %548 = vmatprep.subr.mxu0 0.0
    %549 = vmatpush1.msra.mxu0 0.0
    %550 = vmatprep.subr.mxu0 0.0
    %551 = vmatpush1.msra.mxu0 0.0
    %552 = vmatprep.subr.mxu0 0.0
    %553 = vmatpush1.msra.mxu0 0.0
    %554 = vmatprep.subr.mxu0 0.0
    %555 = vmatpush1.msra.mxu0 0.0
    %556 = vmatprep.subr.mxu0 0.0
    %557 = vmatpush1.msra.mxu0 0.0
    %558 = vmatprep.subr.mxu0 0.0
    %559 = vmatpush1.msra.mxu0 0.0
    %560 = vmatprep.subr.mxu0 0.0
    %561 = vmatpush1.msra.mxu0 0.0
    %562 = vmatprep.subr.mxu0 0.0
    %563 = vmatpush1.msra.mxu0 0.0
    %564 = vmatprep.subr.mxu0 0.0
    %565 = vmatpush1.msra.mxu0 0.0
    %566 = vmatprep.subr.mxu0 0.0
    %567 = vmatpush1.msra.mxu0 0.0
    %568 = vmatprep.subr.mxu0 0.0
    %569 = vmatpush1.msra.mxu0 0.0
    %570 = vmatprep.subr.mxu0 0.0
    %571 = vmatpush1.msra.mxu0 0.0
    %572 = vmatprep.subr.mxu0 0.0
    %573 = vmatpush1.msra.mxu0 0.0
    %574 = vmatprep.subr.mxu0 0.0
    %575 = vmatpush1.msra.mxu0 0.0
    %576 = vmatprep.subr.mxu0 0.0
    %577 = vmatpush1.msra.mxu0 0.0
    %578 = vmatprep.subr.mxu0 0.0
    %579 = vmatpush1.msra.mxu0 0.0
    %580 = vmatprep.subr.mxu0 0.0
    %581 = vmatpush1.msra.mxu0 0.0
    %582 = vmatprep.subr.mxu0 0.0
    %583 = vmatpush1.msra.mxu0 0.0
    %584 = vmatprep.subr.mxu0 0.0
    %585 = vmatpush1.msra.mxu0 0.0
    %586 = vmatprep.subr.mxu0 0.0
    %587 = vmatpush1.msra.mxu0 0.0
    %588 = vmatprep.subr.mxu0 0.0
    %589 = vmatpush1.msra.mxu0 0.0
    %590 = vmatprep.subr.mxu0 0.0
    %591 = vmatpush1.msra.mxu0 0.0
    %592 = vmatprep.subr.mxu0 0.0
    %593 = vmatpush1.msra.mxu0 0.0
    %594 = vmatprep.subr.mxu0 0.0
    %595 = vmatpush1.msra.mxu0 0.0
    %596 = vmatprep.subr.mxu0 0.0
    %597 = vmatpush1.msra.mxu0 0.0
    %598 = vmatprep.subr.mxu0 0.0
    %599 = vmatpush1.msra.mxu0 0.0
    %600 = vmatprep.subr.mxu0 0.0
    %601 = vmatpush1.msra.mxu0 0.0
    %602 = vmatprep.subr.mxu0 0.0
    %603 = vmatpush1.msra.mxu0 0.0
    %604 = vmatprep.mubr.f32.mxu0 0.0
    %605 = vmatmul.mubr.f32.gmra.mrb[0].mxu0 %v529
    %v606 = vpop.f32.mrb[0].mxu0
    %v607 = vadd.f32 %v524, %v606
    %v608 = vpop.f32.mrb[0].mxu0
    %609 = vmatprep.mubr.f32.mxu0 0.0
    %610 = vmatmul.mubr.f32.gmra.mrb[0].mxu0 %v532
    %v611 = vpop.f32.mrb[0].mxu0
    %v612 = vadd.f32 %v524, %v611
    %v613 = vpop.f32.mrb[0].mxu0
    %614 = vmatprep.mubr.f32.mxu0 0.0
    %615 = vmatmul.mubr.f32.gmra.mrb[0].mxu0 %v535
    %v616 = vpop.f32.mrb[0].mxu0
    %v617 = vadd.f32 %v524, %v616
    %v618 = vpop.f32.mrb[0].mxu0
    %619 = vmatprep.mubr.f32.mxu0 0.0
    %620 = vmatmul.mubr.f32.gmra.mrb[0].mxu0 %v538
    %v621 = vpop.f32.mrb[0].mxu0
    %v622 = vadd.f32 %v524, %v621
    %v623 = vpop.f32.mrb[0].mxu0
    %624 = vdwg.mxu0
    %v625 = vmul.f32 %v607, 0.5
    %v626 = vmul.f32 %v612, 0.5
    %v627 = vmul.f32 %v617, 0.5
    %v628 = vmul.f32 %v622, 0.5
    %v629 = vtanh.pop %v625
    %v630 = vtanh.pop %v626
    %v631 = vtanh.pop %v627
    %v632 = vtanh.pop %v628
    %633 = vmatprep.subr.mxu0 0.0
    %634 = vmatpush1.msra.mxu0 %v629
    %635 = vmatprep.subr.mxu0 0.0
    %636 = vmatpush1.msra.mxu0 %v630
    %637 = vmatprep.subr.mxu0 0.0
    %638 = vmatpush1.msra.mxu0 %v631
    %639 = vmatprep.subr.mxu0 0.0
    %640 = vmatpush1.msra.mxu0 %v632
    %641 = vmatprep.subr.mxu0 0.0
    %642 = vmatpush1.msra.mxu0 0.0
    %643 = vmatprep.subr.mxu0 0.0
    %644 = vmatpush1.msra.mxu0 0.0
    %645 = vmatprep.subr.mxu0 0.0
    %646 = vmatpush1.msra.mxu0 0.0
    %647 = vmatprep.subr.mxu0 0.0
    %648 = vmatpush1.msra.mxu0 0.0
    %649 = vmatprep.subr.mxu0 0.0
    %650 = vmatpush1.msra.mxu0 0.0
    %651 = vmatprep.subr.mxu0 0.0
    %652 = vmatpush1.msra.mxu0 0.0
    %653 = vmatprep.subr.mxu0 0.0
    %654 = vmatpush1.msra.mxu0 0.0
    %655 = vmatprep.subr.mxu0 0.0
    %656 = vmatpush1.msra.mxu0 0.0
    %657 = vmatprep.subr.mxu0 0.0
    %658 = vmatpush1.msra.mxu0 0.0
    %659 = vmatprep.subr.mxu0 0.0
    %660 = vmatpush1.msra.mxu0 0.0
    %661 = vmatprep.subr.mxu0 0.0
    %662 = vmatpush1.msra.mxu0 0.0
    %663 = vmatprep.subr.mxu0 0.0
    %664 = vmatpush1.msra.mxu0 0.0
    %665 = vmatprep.subr.mxu0 0.0
    %666 = vmatpush1.msra.mxu0 0.0
    %667 = vmatprep.subr.mxu0 0.0
    %668 = vmatpush1.msra.mxu0 0.0
    %669 = vmatprep.subr.mxu0 0.0
    %670 = vmatpush1.msra.mxu0 0.0
    %671 = vmatprep.subr.mxu0 0.0
    %672 = vmatpush1.msra.mxu0 0.0
    %673 = vmatprep.subr.mxu0 0.0
    %674 = vmatpush1.msra.mxu0 0.0
    %675 = vmatprep.subr.mxu0 0.0
    %676 = vmatpush1.msra.mxu0 0.0
    %677 = vmatprep.subr.mxu0 0.0
    %678 = vmatpush1.msra.mxu0 0.0
    %679 = vmatprep.subr.mxu0 0.0
    %680 = vmatpush1.msra.mxu0 0.0
    %681 = vmatprep.subr.mxu0 0.0
    %682 = vmatpush1.msra.mxu0 0.0
    %683 = vmatprep.subr.mxu0 0.0
    %684 = vmatpush1.msra.mxu0 0.0
    %685 = vmatprep.subr.mxu0 0.0
    %686 = vmatpush1.msra.mxu0 0.0
    %687 = vmatprep.subr.mxu0 0.0
    %688 = vmatpush1.msra.mxu0 0.0
    %689 = vmatprep.subr.mxu0 0.0
    %690 = vmatpush1.msra.mxu0 0.0
    %691 = vmatprep.subr.mxu0 0.0
    %692 = vmatpush1.msra.mxu0 0.0
    %693 = vmatprep.subr.mxu0 0.0
    %694 = vmatpush1.msra.mxu0 0.0
    %695 = vmatprep.subr.mxu0 0.0
    %696 = vmatpush1.msra.mxu0 0.0
    %697 = vmatprep.mubr.f32.mxu0 0.0
    %698 = vmatmul.mubr.f32.gmra.mrb[0].mxu0 %v266
    %v699 = vpop.f32.mrb[0].mxu0
    %v700 = vadd.f32 0.0, %v699
    %v701 = vpop.f32.mrb[0].mxu0
    %702 = vdwg.mxu0
    %v703 = vmul.f32 %v629, %v629
    %v704 = vmul.f32 %v630, %v630
    %v705 = vmul.f32 %v631, %v631
    %v706 = vmul.f32 %v632, %v632
    %707 = vmatprep.subr.mxu0 0.0
    %708 = vmatpush1.msra.mxu0 %v703
    %709 = vmatprep.subr.mxu0 0.0
    %710 = vmatpush1.msra.mxu0 %v704
    %711 = vmatprep.subr.mxu0 0.0
    %712 = vmatpush1.msra.mxu0 %v705
    %713 = vmatprep.subr.mxu0 0.0
    %714 = vmatpush1.msra.mxu0 %v706
    %715 = vmatprep.subr.mxu0 0.0
    %716 = vmatpush1.msra.mxu0 0.0
    %717 = vmatprep.subr.mxu0 0.0
    %718 = vmatpush1.msra.mxu0 0.0
    %719 = vmatprep.subr.mxu0 0.0
    %720 = vmatpush1.msra.mxu0 0.0
    %721 = vmatprep.subr.mxu0 0.0
    %722 = vmatpush1.msra.mxu0 0.0
    %723 = vmatprep.subr.mxu0 0.0
    %724 = vmatpush1.msra.mxu0 0.0
    %725 = vmatprep.subr.mxu0 0.0
    %726 = vmatpush1.msra.mxu0 0.0
    %727 = vmatprep.subr.mxu0 0.0
    %728 = vmatpush1.msra.mxu0 0.0
    %729 = vmatprep.subr.mxu0 0.0
    %730 = vmatpush1.msra.mxu0 0.0
    %731 = vmatprep.subr.mxu0 0.0
    %732 = vmatpush1.msra.mxu0 0.0
    %733 = vmatprep.subr.mxu0 0.0
    %734 = vmatpush1.msra.mxu0 0.0
    %735 = vmatprep.subr.mxu0 0.0
    %736 = vmatpush1.msra.mxu0 0.0
    %737 = vmatprep.subr.mxu0 0.0
    %738 = vmatpush1.msra.mxu0 0.0
    %739 = vmatprep.subr.mxu0 0.0
    %740 = vmatpush1.msra.mxu0 0.0
    %741 = vmatprep.subr.mxu0 0.0
    %742 = vmatpush1.msra.mxu0 0.0
    %743 = vmatprep.subr.mxu0 0.0
    %744 = vmatpush1.msra.mxu0 0.0
    %745 = vmatprep.subr.mxu0 0.0
    %746 = vmatpush1.msra.mxu0 0.0
    %747 = vmatprep.subr.mxu0 0.0
    %748 = vmatpush1.msra.mxu0 0.0
    %749 = vmatprep.subr.mxu0 0.0
    %750 = vmatpush1.msra.mxu0 0.0
    %751 = vmatprep.subr.mxu0 0.0
    %752 = vmatpush1.msra.mxu0 0.0
    %753 = vmatprep.subr.mxu0 0.0
    %754 = vmatpush1.msra.mxu0 0.0
    %755 = vmatprep.subr.mxu0 0.0
    %756 = vmatpush1.msra.mxu0 0.0
    %757 = vmatprep.subr.mxu0 0.0
    %758 = vmatpush1.msra.mxu0 0.0
    %759 = vmatprep.subr.mxu0 0.0
    %760 = vmatpush1.msra.mxu0 0.0
    %761 = vmatprep.subr.mxu0 0.0
    %762 = vmatpush1.msra.mxu0 0.0
    %763 = vmatprep.subr.mxu0 0.0
    %764 = vmatpush1.msra.mxu0 0.0
    %765 = vmatprep.subr.mxu0 0.0
    %766 = vmatpush1.msra.mxu0 0.0
    %767 = vmatprep.subr.mxu0 0.0
    %768 = vmatpush1.msra.mxu0 0.0
    %769 = vmatprep.subr.mxu0 0.0
    %770 = vmatpush1.msra.mxu0 0.0
    %771 = vmatprep.mubr.f32.mxu0 0.0
    %772 = vmatmul.mubr.f32.gmra.mrb[0].mxu0 %v266
    %v773 = vpop.f32.mrb[0].mxu0
    %v774 = vadd.f32 0.0, %v773
    %v775 = vpop.f32.mrb[0].mxu0
    %776 = vdwg.mxu0
    %v777 = vmul.f32 %v700, 0.03125
    %v778 = vmul.f32 %v774, 0.03125
    %v779 = vmul.f32 %v777, %v777
    %v780 = vsub.f32 %v778, %v779
    %v781 = vadd.f32 %v780, 4e-05
    %v782 = vrsqrt.pop %v781
    %v783 = vmul.f32 %v525, %v782
    %v784 = vmul.f32 %v777, %v783
    %v785 = vsub.f32 %v526, %v784
    %v786 = vlaneseq
    %v787 = vshrl.u32 %v786, 7
    %v788 = vsub.s32 0, %v787
    %v789 = vrot.slane %v783, %v788
    %v790 = vmul.f32 %v629, %v789
    %v791 = vmul.f32 %v630, %v789
    %v792 = vmul.f32 %v631, %v789
    %v793 = vmul.f32 %v632, %v789
    %v794 = vlaneseq
    %v795 = vshrl.u32 %v794, 7
    %v796 = vsub.s32 0, %v795
    %v797 = vrot.slane %v785, %v796
    %v798 = vadd.f32 %v790, %v797
    %v799 = vadd.f32 %v791, %v797
    %v800 = vadd.f32 %v792, %v797
    %v801 = vadd.f32 %v793, %v797
    %802 = vmatprep.subr.mxu0 0.0
    %803 = vmatpush1.msra.mxu0 %v798
    %804 = vmatprep.subr.mxu0 0.0
    %805 = vmatpush1.msra.mxu0 %v799
    %806 = vmatprep.subr.mxu0 0.0
    %807 = vmatpush1.msra.mxu0 %v800
    %808 = vmatprep.subr.mxu0 0.0
    %809 = vmatpush1.msra.mxu0 %v801
    %810 = vmatprep.subr.mxu0 0.0
    %811 = vmatpush1.msra.mxu0 0.0
    %812 = vmatprep.subr.mxu0 0.0
    %813 = vmatpush1.msra.mxu0 0.0
    %814 = vmatprep.subr.mxu0 0.0
    %815 = vmatpush1.msra.mxu0 0.0
    %816 = vmatprep.subr.mxu0 0.0
    %817 = vmatpush1.msra.mxu0 0.0
    %818 = vmatprep.subr.mxu0 0.0
    %819 = vmatpush1.msra.mxu0 0.0
    %820 = vmatprep.subr.mxu0 0.0
    %821 = vmatpush1.msra.mxu0 0.0
    %822 = vmatprep.subr.mxu0 0.0
    %823 = vmatpush1.msra.mxu0 0.0
    %824 = vmatprep.subr.mxu0 0.0
    %825 = vmatpush1.msra.mxu0 0.0
    %826 = vmatprep.subr.mxu0 0.0
    %827 = vmatpush1.msra.mxu0 0.0
    %828 = vmatprep.subr.mxu0 0.0
    %829 = vmatpush1.msra.mxu0 0.0
    %830 = vmatprep.subr.mxu0 0.0
    %831 = vmatpush1.msra.mxu0 0.0
    %832 = vmatprep.subr.mxu0 0.0
    %833 = vmatpush1.msra.mxu0 0.0
    %834 = vmatprep.subr.mxu0 0.0
    %835 = vmatpush1.msra.mxu0 0.0
    %836 = vmatprep.subr.mxu0 0.0
    %837 = vmatpush1.msra.mxu0 0.0
    %838 = vmatprep.subr.mxu0 0.0
    %839 = vmatpush1.msra.mxu0 0.0
    %840 = vmatprep.subr.mxu0 0.0
    %841 = vmatpush1.msra.mxu0 0.0
    %842 = vmatprep.subr.mxu0 0.0
    %843 = vmatpush1.msra.mxu0 0.0
    %844 = vmatprep.subr.mxu0 0.0
    %845 = vmatpush1.msra.mxu0 0.0
    %846 = vmatprep.subr.mxu0 0.0
    %847 = vmatpush1.msra.mxu0 0.0
    %848 = vmatprep.subr.mxu0 0.0
    %849 = vmatpush1.msra.mxu0 0.0
    %850 = vmatprep.subr.mxu0 0.0
    %851 = vmatpush1.msra.mxu0 0.0
    %852 = vmatprep.subr.mxu0 0.0
    %853 = vmatpush1.msra.mxu0 0.0
    %854 = vmatprep.subr.mxu0 0.0
    %855 = vmatpush1.msra.mxu0 0.0
    %856 = vmatprep.subr.mxu0 0.0
    %857 = vmatpush1.msra.mxu0 0.0
    %858 = vmatprep.subr.mxu0 0.0
    %859 = vmatpush1.msra.mxu0 0.0
    %860 = vmatprep.subr.mxu0 0.0
    %861 = vmatpush1.msra.mxu0 0.0
    %862 = vmatprep.subr.mxu0 0.0
    %863 = vmatpush1.msra.mxu0 0.0
    %864 = vmatprep.subr.mxu0 0.0
    %865 = vmatpush1.msra.mxu0 0.0
    %866 = vmatprep.mubr.f32.mxu0 0.0
    %867 = vmatmul.mubr.f32.gmra.mrb[0].mxu0 %v55
    %v868 = vpop.f32.mrb[0].mxu0
    %v869 = vadd.f32 0.0, %v868
    %v870 = vpop.f32.mrb[0].mxu0
    %871 = vmatprep.mubr.f32.mxu0 0.0
    %872 = vmatmul.mubr.f32.gmra.mrb[0].mxu0 %v58
    %v873 = vpop.f32.mrb[0].mxu0
    %v874 = vadd.f32 0.0, %v873
    %v875 = vpop.f32.mrb[0].mxu0
    %876 = vmatprep.mubr.f32.mxu0 0.0
    %877 = vmatmul.mubr.f32.gmra.mrb[0].mxu0 %v61
    %v878 = vpop.f32.mrb[0].mxu0
    %v879 = vadd.f32 0.0, %v878
    %v880 = vpop.f32.mrb[0].mxu0
    %881 = vmatprep.mubr.f32.mxu0 0.0
    %882 = vmatmul.mubr.f32.gmra.mrb[0].mxu0 %v64
    %v883 = vpop.f32.mrb[0].mxu0
    %v884 = vadd.f32 0.0, %v883
    %v885 = vpop.f32.mrb[0].mxu0
    %886 = vdwg.mxu0
    %v887 = vld [vmem:[#allocation2 + $0x30] sm:$0xff]
    %v888 = vld [vmem:[#allocation2 + $0x40] sm:$0xff]
    %v889 = vld [vmem:[#allocation2 + $0x50] sm:$0xff]
    %v890 = vld [vmem:[#allocation2 + $0x60] sm:$0xff]
    %v891 = vld [vmem:[#allocation2 + $0x70] sm:$0xff]
    %v892 = vld [vmem:[#allocation2 + $0x80] sm:$0xff]
    %v893 = vld [vmem:[#allocation2 + $0x90] sm:$0xff]
    %v894 = vld [vmem:[#allocation2 + $0xa0] sm:$0xff]
    %v895 = vld [vmem:[#allocation4 + $0x6] ss:$0 sm:$0xff]
    %v896 = vld [vmem:[#allocation4 + $0x7] ss:$0 sm:$0xff]
    %v897 = vld [vmem:[#allocation4 + $0x10] ss:$0 sm:$0xff]
    %vm898 = vcmask 523264
    %v900 = vsel %vm898, %v869, 0
    %v903 = vsel %vm898, %v874, 0
    %v906 = vsel %vm898, %v879, 0
    %v909 = vsel %vm898, %v884, 0
    %911 = vmatprep.subr.mxu0 0.0
    %912 = vmatpush1.msra.mxu0 %v887
    %913 = vmatprep.subr.mxu0 0.0
    %914 = vmatpush1.msra.mxu0 %v888
    %915 = vmatprep.subr.mxu0 0.0
    %916 = vmatpush1.msra.mxu0 %v889
    %917 = vmatprep.subr.mxu0 0.0
    %918 = vmatpush1.msra.mxu0 %v890
    %919 = vmatprep.subr.mxu0 0.0
    %920 = vmatpush1.msra.mxu0 %v891
    %921 = vmatprep.subr.mxu0 0.0
    %922 = vmatpush1.msra.mxu0 %v892
    %923 = vmatprep.subr.mxu0 0.0
    %924 = vmatpush1.msra.mxu0 %v893
    %925 = vmatprep.subr.mxu0 0.0
    %926 = vmatpush1.msra.mxu0 %v894
    %927 = vmatprep.subr.mxu0 0.0
    %928 = vmatpush1.msra.mxu0 0.0
    %929 = vmatprep.subr.mxu0 0.0
    %930 = vmatpush1.msra.mxu0 0.0
    %931 = vmatprep.subr.mxu0 0.0
    %932 = vmatpush1.msra.mxu0 0.0
    %933 = vmatprep.subr.mxu0 0.0
    %934 = vmatpush1.msra.mxu0 0.0
    %935 = vmatprep.subr.mxu0 0.0
    %936 = vmatpush1.msra.mxu0 0.0
    %937 = vmatprep.subr.mxu0 0.0
    %938 = vmatpush1.msra.mxu0 0.0
    %939 = vmatprep.subr.mxu0 0.0
    %940 = vmatpush1.msra.mxu0 0.0
    %941 = vmatprep.subr.mxu0 0.0
    %942 = vmatpush1.msra.mxu0 0.0
    %943 = vmatprep.subr.mxu0 0.0
    %944 = vmatpush1.msra.mxu0 0.0
    %945 = vmatprep.subr.mxu0 0.0
    %946 = vmatpush1.msra.mxu0 0.0
    %947 = vmatprep.subr.mxu0 0.0
    %948 = vmatpush1.msra.mxu0 0.0
    %949 = vmatprep.subr.mxu0 0.0
    %950 = vmatpush1.msra.mxu0 0.0
    %951 = vmatprep.subr.mxu0 0.0
    %952 = vmatpush1.msra.mxu0 0.0
    %953 = vmatprep.subr.mxu0 0.0
    %954 = vmatpush1.msra.mxu0 0.0
    %955 = vmatprep.subr.mxu0 0.0
    %956 = vmatpush1.msra.mxu0 0.0
    %957 = vmatprep.subr.mxu0 0.0
    %958 = vmatpush1.msra.mxu0 0.0
    %959 = vmatprep.subr.mxu0 0.0
    %960 = vmatpush1.msra.mxu0 0.0
    %961 = vmatprep.subr.mxu0 0.0
    %962 = vmatpush1.msra.mxu0 0.0
    %963 = vmatprep.subr.mxu0 0.0
    %964 = vmatpush1.msra.mxu0 0.0
    %965 = vmatprep.subr.mxu0 0.0
    %966 = vmatpush1.msra.mxu0 0.0
    %967 = vmatprep.subr.mxu0 0.0
    %968 = vmatpush1.msra.mxu0 0.0
    %969 = vmatprep.subr.mxu0 0.0
    %970 = vmatpush1.msra.mxu0 0.0
    %971 = vmatprep.subr.mxu0 0.0
    %972 = vmatpush1.msra.mxu0 0.0
    %973 = vmatprep.subr.mxu0 0.0
    %974 = vmatpush1.msra.mxu0 0.0
    %975 = vmatprep.mubr.f32.mxu0 0.0
    %976 = vmatmul.mubr.f32.gmra.mrb[0].mxu0 %v900
    %v977 = vpop.f32.mrb[0].mxu0
    %v978 = vadd.f32 %v895, %v977
    %v979 = vpop.f32.mrb[0].mxu0
    %980 = vmatprep.mubr.f32.mxu0 0.0
    %981 = vmatmul.mubr.f32.gmra.mrb[0].mxu0 %v903
    %v982 = vpop.f32.mrb[0].mxu0
    %v983 = vadd.f32 %v895, %v982
    %v984 = vpop.f32.mrb[0].mxu0
    %985 = vmatprep.mubr.f32.mxu0 0.0
    %986 = vmatmul.mubr.f32.gmra.mrb[0].mxu0 %v906
    %v987 = vpop.f32.mrb[0].mxu0
    %v988 = vadd.f32 %v895, %v987
    %v989 = vpop.f32.mrb[0].mxu0
    %990 = vmatprep.mubr.f32.mxu0 0.0
    %991 = vmatmul.mubr.f32.gmra.mrb[0].mxu0 %v909
    %v992 = vpop.f32.mrb[0].mxu0
    %v993 = vadd.f32 %v895, %v992
    %v994 = vpop.f32.mrb[0].mxu0
    %995 = vdwg.mxu0
    %v996 = vmul.f32 %v978, 0.5
    %v997 = vmul.f32 %v983, 0.5
    %v998 = vmul.f32 %v988, 0.5
    %v999 = vmul.f32 %v993, 0.5
    %v1000 = vtanh.pop %v996
    %v1001 = vtanh.pop %v997
    %v1002 = vtanh.pop %v998
    %v1003 = vtanh.pop %v999
    %1004 = vmatprep.subr.mxu0 0.0
    %1005 = vmatpush1.msra.mxu0 %v1000
    %1006 = vmatprep.subr.mxu0 0.0
    %1007 = vmatpush1.msra.mxu0 %v1001
    %1008 = vmatprep.subr.mxu0 0.0
    %1009 = vmatpush1.msra.mxu0 %v1002
    %1010 = vmatprep.subr.mxu0 0.0
    %1011 = vmatpush1.msra.mxu0 %v1003
    %1012 = vmatprep.subr.mxu0 0.0
    %1013 = vmatpush1.msra.mxu0 0.0
    %1014 = vmatprep.subr.mxu0 0.0
    %1015 = vmatpush1.msra.mxu0 0.0
    %1016 = vmatprep.subr.mxu0 0.0
    %1017 = vmatpush1.msra.mxu0 0.0
    %1018 = vmatprep.subr.mxu0 0.0
    %1019 = vmatpush1.msra.mxu0 0.0
    %1020 = vmatprep.subr.mxu0 0.0
    %1021 = vmatpush1.msra.mxu0 0.0
    %1022 = vmatprep.subr.mxu0 0.0
    %1023 = vmatpush1.msra.mxu0 0.0
    %1024 = vmatprep.subr.mxu0 0.0
    %1025 = vmatpush1.msra.mxu0 0.0
    %1026 = vmatprep.subr.mxu0 0.0
    %1027 = vmatpush1.msra.mxu0 0.0
    %1028 = vmatprep.subr.mxu0 0.0
    %1029 = vmatpush1.msra.mxu0 0.0
    %1030 = vmatprep.subr.mxu0 0.0
    %1031 = vmatpush1.msra.mxu0 0.0
    %1032 = vmatprep.subr.mxu0 0.0
    %1033 = vmatpush1.msra.mxu0 0.0
    %1034 = vmatprep.subr.mxu0 0.0
    %1035 = vmatpush1.msra.mxu0 0.0
    %1036 = vmatprep.subr.mxu0 0.0
    %1037 = vmatpush1.msra.mxu0 0.0
    %1038 = vmatprep.subr.mxu0 0.0
    %1039 = vmatpush1.msra.mxu0 0.0
    %1040 = vmatprep.subr.mxu0 0.0
    %1041 = vmatpush1.msra.mxu0 0.0
    %1042 = vmatprep.subr.mxu0 0.0
    %1043 = vmatpush1.msra.mxu0 0.0
    %1044 = vmatprep.subr.mxu0 0.0
    %1045 = vmatpush1.msra.mxu0 0.0
    %1046 = vmatprep.subr.mxu0 0.0
    %1047 = vmatpush1.msra.mxu0 0.0
    %1048 = vmatprep.subr.mxu0 0.0
    %1049 = vmatpush1.msra.mxu0 0.0
    %1050 = vmatprep.subr.mxu0 0.0
    %1051 = vmatpush1.msra.mxu0 0.0
    %1052 = vmatprep.subr.mxu0 0.0
    %1053 = vmatpush1.msra.mxu0 0.0
    %1054 = vmatprep.subr.mxu0 0.0
    %1055 = vmatpush1.msra.mxu0 0.0
    %1056 = vmatprep.subr.mxu0 0.0
    %1057 = vmatpush1.msra.mxu0 0.0
    %1058 = vmatprep.subr.mxu0 0.0
    %1059 = vmatpush1.msra.mxu0 0.0
    %1060 = vmatprep.subr.mxu0 0.0
    %1061 = vmatpush1.msra.mxu0 0.0
    %1062 = vmatprep.subr.mxu0 0.0
    %1063 = vmatpush1.msra.mxu0 0.0
    %1064 = vmatprep.subr.mxu0 0.0
    %1065 = vmatpush1.msra.mxu0 0.0
    %1066 = vmatprep.subr.mxu0 0.0
    %1067 = vmatpush1.msra.mxu0 0.0
    %1068 = vmatprep.mubr.f32.mxu0 0.0
    %1069 = vmatmul.mubr.f32.gmra.mrb[0].mxu0 %v266
    %v1070 = vpop.f32.mrb[0].mxu0
    %v1071 = vadd.f32 0.0, %v1070
    %v1072 = vpop.f32.mrb[0].mxu0
    %1073 = vdwg.mxu0
    %v1074 = vmul.f32 %v1000, %v1000
    %v1075 = vmul.f32 %v1001, %v1001
    %v1076 = vmul.f32 %v1002, %v1002
    %v1077 = vmul.f32 %v1003, %v1003
    %1078 = vmatprep.subr.mxu0 0.0
    %1079 = vmatpush1.msra.mxu0 %v1074
    %1080 = vmatprep.subr.mxu0 0.0
    %1081 = vmatpush1.msra.mxu0 %v1075
    %1082 = vmatprep.subr.mxu0 0.0
    %1083 = vmatpush1.msra.mxu0 %v1076
    %1084 = vmatprep.subr.mxu0 0.0
    %1085 = vmatpush1.msra.mxu0 %v1077
    %1086 = vmatprep.subr.mxu0 0.0
    %1087 = vmatpush1.msra.mxu0 0.0
    %1088 = vmatprep.subr.mxu0 0.0
    %1089 = vmatpush1.msra.mxu0 0.0
    %1090 = vmatprep.subr.mxu0 0.0
    %1091 = vmatpush1.msra.mxu0 0.0
    %1092 = vmatprep.subr.mxu0 0.0
    %1093 = vmatpush1.msra.mxu0 0.0
    %1094 = vmatprep.subr.mxu0 0.0
    %1095 = vmatpush1.msra.mxu0 0.0
    %1096 = vmatprep.subr.mxu0 0.0
    %1097 = vmatpush1.msra.mxu0 0.0
    %1098 = vmatprep.subr.mxu0 0.0
    %1099 = vmatpush1.msra.mxu0 0.0
    %1100 = vmatprep.subr.mxu0 0.0
    %1101 = vmatpush1.msra.mxu0 0.0
    %1102 = vmatprep.subr.mxu0 0.0
    %1103 = vmatpush1.msra.mxu0 0.0
    %1104 = vmatprep.subr.mxu0 0.0
    %1105 = vmatpush1.msra.mxu0 0.0
    %1106 = vmatprep.subr.mxu0 0.0
    %1107 = vmatpush1.msra.mxu0 0.0
    %1108 = vmatprep.subr.mxu0 0.0
    %1109 = vmatpush1.msra.mxu0 0.0
    %1110 = vmatprep.subr.mxu0 0.0
    %1111 = vmatpush1.msra.mxu0 0.0
    %1112 = vmatprep.subr.mxu0 0.0
    %1113 = vmatpush1.msra.mxu0 0.0
    %1114 = vmatprep.subr.mxu0 0.0
    %1115 = vmatpush1.msra.mxu0 0.0
    %1116 = vmatprep.subr.mxu0 0.0
    %1117 = vmatpush1.msra.mxu0 0.0
    %1118 = vmatprep.subr.mxu0 0.0
    %1119 = vmatpush1.msra.mxu0 0.0
    %1120 = vmatprep.subr.mxu0 0.0
    %1121 = vmatpush1.msra.mxu0 0.0
    %1122 = vmatprep.subr.mxu0 0.0
    %1123 = vmatpush1.msra.mxu0 0.0
    %1124 = vmatprep.subr.mxu0 0.0
    %1125 = vmatpush1.msra.mxu0 0.0
    %1126 = vmatprep.subr.mxu0 0.0
    %1127 = vmatpush1.msra.mxu0 0.0
    %1128 = vmatprep.subr.mxu0 0.0
    %1129 = vmatpush1.msra.mxu0 0.0
    %1130 = vmatprep.subr.mxu0 0.0
    %1131 = vmatpush1.msra.mxu0 0.0
    %1132 = vmatprep.subr.mxu0 0.0
    %1133 = vmatpush1.msra.mxu0 0.0
    %1134 = vmatprep.subr.mxu0 0.0
    %1135 = vmatpush1.msra.mxu0 0.0
    %1136 = vmatprep.subr.mxu0 0.0
    %1137 = vmatpush1.msra.mxu0 0.0
    %1138 = vmatprep.subr.mxu0 0.0
    %1139 = vmatpush1.msra.mxu0 0.0
    %1140 = vmatprep.subr.mxu0 0.0
    %1141 = vmatpush1.msra.mxu0 0.0
    %1142 = vmatprep.mubr.f32.mxu0 0.0
    %1143 = vmatmul.mubr.f32.gmra.mrb[0].mxu0 %v266
    %v1144 = vpop.f32.mrb[0].mxu0
    %v1145 = vadd.f32 0.0, %v1144
    %v1146 = vpop.f32.mrb[0].mxu0
    %1147 = vdwg.mxu0
    %v1148 = vmul.f32 %v1071, 0.03125
    %v1149 = vmul.f32 %v1145, 0.03125
    %v1150 = vmul.f32 %v1148, %v1148
    %v1151 = vsub.f32 %v1149, %v1150
    %v1152 = vadd.f32 %v1151, 4e-05
    %v1153 = vrsqrt.pop %v1152
    %v1154 = vmul.f32 %v896, %v1153
    %v1155 = vmul.f32 %v1148, %v1154
    %v1156 = vsub.f32 %v897, %v1155
    %v1157 = vlaneseq
    %v1158 = vshrl.u32 %v1157, 7
    %v1159 = vsub.s32 0, %v1158
    %v1160 = vrot.slane %v1154, %v1159
    %v1161 = vmul.f32 %v1000, %v1160
    %v1162 = vmul.f32 %v1001, %v1160
    %v1163 = vmul.f32 %v1002, %v1160
    %v1164 = vmul.f32 %v1003, %v1160
    %v1165 = vlaneseq
    %v1166 = vshrl.u32 %v1165, 7
    %v1167 = vsub.s32 0, %v1166
    %v1168 = vrot.slane %v1156, %v1167
    %v1169 = vadd.f32 %v1161, %v1168
    %v1170 = vadd.f32 %v1162, %v1168
    %v1171 = vadd.f32 %v1163, %v1168
    %v1172 = vadd.f32 %v1164, %v1168
    %1173 = vmatprep.subr.mxu0 0.0
    %1174 = vmatpush1.msra.mxu0 %v1169
    %1175 = vmatprep.subr.mxu0 0.0
    %1176 = vmatpush1.msra.mxu0 %v1170
    %1177 = vmatprep.subr.mxu0 0.0
    %1178 = vmatpush1.msra.mxu0 %v1171
    %1179 = vmatprep.subr.mxu0 0.0
    %1180 = vmatpush1.msra.mxu0 %v1172
    %1181 = vmatprep.subr.mxu0 0.0
    %1182 = vmatpush1.msra.mxu0 0.0
    %1183 = vmatprep.subr.mxu0 0.0
    %1184 = vmatpush1.msra.mxu0 0.0
    %1185 = vmatprep.subr.mxu0 0.0
    %1186 = vmatpush1.msra.mxu0 0.0
    %1187 = vmatprep.subr.mxu0 0.0
    %1188 = vmatpush1.msra.mxu0 0.0
    %1189 = vmatprep.subr.mxu0 0.0
    %1190 = vmatpush1.msra.mxu0 0.0
    %1191 = vmatprep.subr.mxu0 0.0
    %1192 = vmatpush1.msra.mxu0 0.0
    %1193 = vmatprep.subr.mxu0 0.0
    %1194 = vmatpush1.msra.mxu0 0.0
    %1195 = vmatprep.subr.mxu0 0.0
    %1196 = vmatpush1.msra.mxu0 0.0
    %1197 = vmatprep.subr.mxu0 0.0
    %1198 = vmatpush1.msra.mxu0 0.0
    %1199 = vmatprep.subr.mxu0 0.0
    %1200 = vmatpush1.msra.mxu0 0.0
    %1201 = vmatprep.subr.mxu0 0.0
    %1202 = vmatpush1.msra.mxu0 0.0
    %1203 = vmatprep.subr.mxu0 0.0
    %1204 = vmatpush1.msra.mxu0 0.0
    %1205 = vmatprep.subr.mxu0 0.0
    %1206 = vmatpush1.msra.mxu0 0.0
    %1207 = vmatprep.subr.mxu0 0.0
    %1208 = vmatpush1.msra.mxu0 0.0
    %1209 = vmatprep.subr.mxu0 0.0
    %1210 = vmatpush1.msra.mxu0 0.0
    %1211 = vmatprep.subr.mxu0 0.0
    %1212 = vmatpush1.msra.mxu0 0.0
    %1213 = vmatprep.subr.mxu0 0.0
    %1214 = vmatpush1.msra.mxu0 0.0
    %1215 = vmatprep.subr.mxu0 0.0
    %1216 = vmatpush1.msra.mxu0 0.0
    %1217 = vmatprep.subr.mxu0 0.0
    %1218 = vmatpush1.msra.mxu0 0.0
    %1219 = vmatprep.subr.mxu0 0.0
    %1220 = vmatpush1.msra.mxu0 0.0
    %1221 = vmatprep.subr.mxu0 0.0
    %1222 = vmatpush1.msra.mxu0 0.0
    %1223 = vmatprep.subr.mxu0 0.0
    %1224 = vmatpush1.msra.mxu0 0.0
    %1225 = vmatprep.subr.mxu0 0.0
    %1226 = vmatpush1.msra.mxu0 0.0
    %1227 = vmatprep.subr.mxu0 0.0
    %1228 = vmatpush1.msra.mxu0 0.0
    %1229 = vmatprep.subr.mxu0 0.0
    %1230 = vmatpush1.msra.mxu0 0.0
    %1231 = vmatprep.subr.mxu0 0.0
    %1232 = vmatpush1.msra.mxu0 0.0
    %1233 = vmatprep.subr.mxu0 0.0
    %1234 = vmatpush1.msra.mxu0 0.0
    %1235 = vmatprep.subr.mxu0 0.0
    %1236 = vmatpush1.msra.mxu0 0.0
    %1237 = vmatprep.mubr.f32.mxu0 0.0
    %1238 = vmatmul.mubr.f32.gmra.mrb[0].mxu0 %v55
    %v1239 = vpop.f32.mrb[0].mxu0
    %v1240 = vadd.f32 0.0, %v1239
    %v1241 = vpop.f32.mrb[0].mxu0
    %1242 = vmatprep.mubr.f32.mxu0 0.0
    %1243 = vmatmul.mubr.f32.gmra.mrb[0].mxu0 %v58
    %v1244 = vpop.f32.mrb[0].mxu0
    %v1245 = vadd.f32 0.0, %v1244
    %v1246 = vpop.f32.mrb[0].mxu0
    %1247 = vmatprep.mubr.f32.mxu0 0.0
    %1248 = vmatmul.mubr.f32.gmra.mrb[0].mxu0 %v61
    %v1249 = vpop.f32.mrb[0].mxu0
    %v1250 = vadd.f32 0.0, %v1249
    %v1251 = vpop.f32.mrb[0].mxu0
    %1252 = vmatprep.mubr.f32.mxu0 0.0
    %1253 = vmatmul.mubr.f32.gmra.mrb[0].mxu0 %v64
    %v1254 = vpop.f32.mrb[0].mxu0
    %v1255 = vadd.f32 0.0, %v1254
    %v1256 = vpop.f32.mrb[0].mxu0
    %1257 = vdwg.mxu0
    %v1258 = vld [vmem:[#allocation2 + $0xb0] sm:$0xff]
    %v1259 = vld [vmem:[#allocation2 + $0xb8] sm:$0xff]
    %v1260 = vld [vmem:[#allocation2 + $0xc0] sm:$0xff]
    %v1261 = vld [vmem:[#allocation2 + $0xc8] sm:$0xff]
    %v1262 = vld [vmem:[#allocation2 + $0xd0] sm:$0xff]
    %v1263 = vld [vmem:[#allocation2 + $0xd8] sm:$0xff]
    %v1264 = vld [vmem:[#allocation2 + $0xe0] sm:$0xff]
    %v1265 = vld [vmem:[#allocation2 + $0xe8] sm:$0xff]
    %v1266 = vld [vmem:[#allocation2 + $0xf0] sm:$0xff]
    %v1267 = vld [vmem:[#allocation2 + $0xf8] sm:$0xff]
    %v1268 = vld [vmem:[#allocation2 + $0x100] sm:$0xff]
    %v1269 = vld [vmem:[#allocation2 + $0x108] sm:$0xff]
    %v1270 = vld [vmem:[#allocation2 + $0x110] sm:$0xff]
    %v1271 = vld [vmem:[#allocation2 + $0x118] sm:$0xff]
    %v1272 = vld [vmem:[#allocation2 + $0x120] sm:$0xff]
    %v1273 = vld [vmem:[#allocation2 + $0x128] sm:$0xff]
    %v1274 = vld [vmem:[#allocation2 + $0x130] sm:$0xff]
    %v1275 = vld [vmem:[#allocation2 + $0x138] sm:$0xff]
    %v1276 = vld [vmem:[#allocation2 + $0x140] sm:$0xff]
    %v1277 = vld [vmem:[#allocation2 + $0x148] sm:$0xff]
    %v1278 = vld [vmem:[#allocation2 + $0x150] sm:$0xff]
    %v1279 = vld [vmem:[#allocation2 + $0x158] sm:$0xff]
    %v1280 = vld [vmem:[#allocation2 + $0x160] sm:$0xff]
    %v1281 = vld [vmem:[#allocation2 + $0x168] sm:$0xff]
    %v1282 = vld [vmem:[#allocation2 + $0x170] sm:$0xff]
    %v1283 = vld [vmem:[#allocation2 + $0x178] sm:$0xff]
    %v1284 = vld [vmem:[#allocation2 + $0x180] sm:$0xff]
    %v1285 = vld [vmem:[#allocation2 + $0x188] sm:$0xff]
    %v1286 = vld [vmem:[#allocation2 + $0x190] sm:$0xff]
    %v1287 = vld [vmem:[#allocation2 + $0x198] sm:$0xff]
    %v1288 = vld [vmem:[#allocation2 + $0x1a0] sm:$0xff]
    %v1289 = vld [vmem:[#allocation2 + $0x1a8] sm:$0xff]
    %s1290 = scalar_lea.vmem [#allocation4], 17
    %v1291 = vld [vmem:[%s1290] ss:$8 sm:$0x3]
    %s1292 = scalar_lea.vmem [#allocation4], 18
    %v1293 = vld [vmem:[%s1292] ss:$8 sm:$0x3]
    %s1294 = scalar_lea.vmem [#allocation4], 19
    %v1295 = vld [vmem:[%s1294] ss:$8 sm:$0x3]
    %v1297 = vlaneseq
    %v1298 = vshrl.u32 %v1297, 7
    %v1299 = vsub.s32 0, %v1298
    %v1300 = vrot.slane %v1291, %v1299
    %v1301 = vlaneseq
    %v1302 = vshrl.u32 %v1301, 7
    %v1303 = vsub.s32 1, %v1302
    %v1304 = vrot.slane %v1291, %v1303
    %1307 = vmatprep.subr.mxu0 %v1259
    %1308 = vmatpush1.msra.mxu0 %v1258
    %1309 = vmatprep.subr.mxu0 %v1261
    %1310 = vmatpush1.msra.mxu0 %v1260
    %1311 = vmatprep.subr.mxu0 %v1263
    %1312 = vmatpush1.msra.mxu0 %v1262
    %1313 = vmatprep.subr.mxu0 %v1265
    %1314 = vmatpush1.msra.mxu0 %v1264
    %1315 = vmatprep.subr.mxu0 %v1267
    %1316 = vmatpush1.msra.mxu0 %v1266
    %1317 = vmatprep.subr.mxu0 %v1269
    %1318 = vmatpush1.msra.mxu0 %v1268
    %1319 = vmatprep.subr.mxu0 %v1271
    %1320 = vmatpush1.msra.mxu0 %v1270
    %1321 = vmatprep.subr.mxu0 %v1273
    %1322 = vmatpush1.msra.mxu0 %v1272
    %1323 = vmatprep.subr.mxu0 %v1275
    %1324 = vmatpush1.msra.mxu0 %v1274
    %1325 = vmatprep.subr.mxu0 %v1277
    %1326 = vmatpush1.msra.mxu0 %v1276
    %1327 = vmatprep.subr.mxu0 %v1279
    %1328 = vmatpush1.msra.mxu0 %v1278
    %1329 = vmatprep.subr.mxu0 %v1281
    %1330 = vmatpush1.msra.mxu0 %v1280
    %1331 = vmatprep.subr.mxu0 %v1283
    %1332 = vmatpush1.msra.mxu0 %v1282
    %1333 = vmatprep.subr.mxu0 %v1285
    %1334 = vmatpush1.msra.mxu0 %v1284
    %1335 = vmatprep.subr.mxu0 %v1287
    %1336 = vmatpush1.msra.mxu0 %v1286
    %1337 = vmatprep.subr.mxu0 %v1289
    %1338 = vmatpush1.msra.mxu0 %v1288
    %1339 = vmatprep.subr.mxu0 0.0
    %1340 = vmatpush1.msra.mxu0 0.0
    %1341 = vmatprep.subr.mxu0 0.0
    %1342 = vmatpush1.msra.mxu0 0.0
    %1343 = vmatprep.subr.mxu0 0.0
    %1344 = vmatpush1.msra.mxu0 0.0
    %1345 = vmatprep.subr.mxu0 0.0
    %1346 = vmatpush1.msra.mxu0 0.0
    %1347 = vmatprep.subr.mxu0 0.0
    %1348 = vmatpush1.msra.mxu0 0.0
    %1349 = vmatprep.subr.mxu0 0.0
    %1350 = vmatpush1.msra.mxu0 0.0
    %1351 = vmatprep.subr.mxu0 0.0
    %1352 = vmatpush1.msra.mxu0 0.0
    %1353 = vmatprep.subr.mxu0 0.0
    %1354 = vmatpush1.msra.mxu0 0.0
    %1355 = vmatprep.subr.mxu0 0.0
    %1356 = vmatpush1.msra.mxu0 0.0
    %1357 = vmatprep.subr.mxu0 0.0
    %1358 = vmatpush1.msra.mxu0 0.0
    %1359 = vmatprep.subr.mxu0 0.0
    %1360 = vmatpush1.msra.mxu0 0.0
    %1361 = vmatprep.subr.mxu0 0.0
    %1362 = vmatpush1.msra.mxu0 0.0
    %1363 = vmatprep.subr.mxu0 0.0
    %1364 = vmatpush1.msra.mxu0 0.0
    %1365 = vmatprep.subr.mxu0 0.0
    %1366 = vmatpush1.msra.mxu0 0.0
    %1367 = vmatprep.subr.mxu0 0.0
    %1368 = vmatpush1.msra.mxu0 0.0
    %1369 = vmatprep.subr.mxu0 0.0
    %1370 = vmatpush1.msra.mxu0 0.0
    %1371 = vmatprep.mubr.f32.mxu0 0.0
    %1372 = vmatmul.mubr.f32.gmra.mrb[0].mxu0 %v1240
    %v1373 = vpop.f32.mrb[0].mxu0
    %v1374 = vadd.f32 %v1300, %v1373
    %v1375 = vpop.f32.mrb[0].mxu0
    %v1376 = vadd.f32 %v1304, %v1375
    %1377 = vmatprep.mubr.f32.mxu0 0.0
    %1378 = vmatmul.mubr.f32.gmra.mrb[0].mxu0 %v1245
    %v1379 = vpop.f32.mrb[0].mxu0
    %v1380 = vadd.f32 %v1300, %v1379
    %v1381 = vpop.f32.mrb[0].mxu0
    %v1382 = vadd.f32 %v1304, %v1381
    %1383 = vmatprep.mubr.f32.mxu0 0.0
    %1384 = vmatmul.mubr.f32.gmra.mrb[0].mxu0 %v1250
    %v1385 = vpop.f32.mrb[0].mxu0
    %v1386 = vadd.f32 %v1300, %v1385
    %v1387 = vpop.f32.mrb[0].mxu0
    %v1388 = vadd.f32 %v1304, %v1387
    %1389 = vmatprep.mubr.f32.mxu0 0.0
    %1390 = vmatmul.mubr.f32.gmra.mrb[0].mxu0 %v1255
    %v1391 = vpop.f32.mrb[0].mxu0
    %v1392 = vadd.f32 %v1300, %v1391
    %v1393 = vpop.f32.mrb[0].mxu0
    %v1394 = vadd.f32 %v1304, %v1393
    %1395 = vdwg.mxu0
    %v1396 = vmul.f32 %v1374, 0.5
    %v1397 = vmul.f32 %v1376, 0.5
    %v1398 = vmul.f32 %v1380, 0.5
    %v1399 = vmul.f32 %v1382, 0.5
    %v1400 = vmul.f32 %v1386, 0.5
    %v1401 = vmul.f32 %v1388, 0.5
    %v1402 = vmul.f32 %v1392, 0.5
    %v1403 = vmul.f32 %v1394, 0.5
    %v1404 = vtanh.pop %v1396
    %v1405 = vtanh.pop %v1397
    %v1406 = vtanh.pop %v1398
    %v1407 = vtanh.pop %v1399
    %v1408 = vtanh.pop %v1400
    %v1409 = vtanh.pop %v1401
    %v1410 = vtanh.pop %v1402
    %v1411 = vtanh.pop %v1403
    %1412 = vmatprep.subr.mxu0 %v1405
    %1413 = vmatpush1.msra.mxu0 %v1404
    %1414 = vmatprep.subr.mxu0 %v1407
    %1415 = vmatpush1.msra.mxu0 %v1406
    %1416 = vmatprep.subr.mxu0 %v1409
    %1417 = vmatpush1.msra.mxu0 %v1408
    %1418 = vmatprep.subr.mxu0 %v1411
    %1419 = vmatpush1.msra.mxu0 %v1410
    %1420 = vmatprep.subr.mxu0 0.0
    %1421 = vmatpush1.msra.mxu0 0.0
    %1422 = vmatprep.subr.mxu0 0.0
    %1423 = vmatpush1.msra.mxu0 0.0
    %1424 = vmatprep.subr.mxu0 0.0
    %1425 = vmatpush1.msra.mxu0 0.0
    %1426 = vmatprep.subr.mxu0 0.0
    %1427 = vmatpush1.msra.mxu0 0.0
    %1428 = vmatprep.subr.mxu0 0.0
    %1429 = vmatpush1.msra.mxu0 0.0
    %1430 = vmatprep.subr.mxu0 0.0
    %1431 = vmatpush1.msra.mxu0 0.0
    %1432 = vmatprep.subr.mxu0 0.0
    %1433 = vmatpush1.msra.mxu0 0.0
    %1434 = vmatprep.subr.mxu0 0.0
    %1435 = vmatpush1.msra.mxu0 0.0
    %1436 = vmatprep.subr.mxu0 0.0
    %1437 = vmatpush1.msra.mxu0 0.0
    %1438 = vmatprep.subr.mxu0 0.0
    %1439 = vmatpush1.msra.mxu0 0.0
    %1440 = vmatprep.subr.mxu0 0.0
    %1441 = vmatpush1.msra.mxu0 0.0
    %1442 = vmatprep.subr.mxu0 0.0
    %1443 = vmatpush1.msra.mxu0 0.0
    %1444 = vmatprep.subr.mxu0 0.0
    %1445 = vmatpush1.msra.mxu0 0.0
    %1446 = vmatprep.subr.mxu0 0.0
    %1447 = vmatpush1.msra.mxu0 0.0
    %1448 = vmatprep.subr.mxu0 0.0
    %1449 = vmatpush1.msra.mxu0 0.0
    %1450 = vmatprep.subr.mxu0 0.0
    %1451 = vmatpush1.msra.mxu0 0.0
    %1452 = vmatprep.subr.mxu0 0.0
    %1453 = vmatpush1.msra.mxu0 0.0
    %1454 = vmatprep.subr.mxu0 0.0
    %1455 = vmatpush1.msra.mxu0 0.0
    %1456 = vmatprep.subr.mxu0 0.0
    %1457 = vmatpush1.msra.mxu0 0.0
    %1458 = vmatprep.subr.mxu0 0.0
    %1459 = vmatpush1.msra.mxu0 0.0
    %1460 = vmatprep.subr.mxu0 0.0
    %1461 = vmatpush1.msra.mxu0 0.0
    %1462 = vmatprep.subr.mxu0 0.0
    %1463 = vmatpush1.msra.mxu0 0.0
    %1464 = vmatprep.subr.mxu0 0.0
    %1465 = vmatpush1.msra.mxu0 0.0
    %1466 = vmatprep.subr.mxu0 0.0
    %1467 = vmatpush1.msra.mxu0 0.0
    %1468 = vmatprep.subr.mxu0 0.0
    %1469 = vmatpush1.msra.mxu0 0.0
    %1470 = vmatprep.subr.mxu0 0.0
    %1471 = vmatpush1.msra.mxu0 0.0
    %1472 = vmatprep.subr.mxu0 0.0
    %1473 = vmatpush1.msra.mxu0 0.0
    %1474 = vmatprep.subr.mxu0 0.0
    %1475 = vmatpush1.msra.mxu0 0.0
    %1476 = vmatprep.mubr.f32.mxu0 0.0
    %1477 = vmatmul.mubr.f32.gmra.mrb[0].mxu0 %v266
    %v1478 = vpop.f32.mrb[0].mxu0
    %v1479 = vadd.f32 0.0, %v1478
    %v1480 = vpop.f32.mrb[0].mxu0
    %v1481 = vadd.f32 0.0, %v1480
    %1482 = vdwg.mxu0
    %v1483 = vmul.f32 %v1404, %v1404
    %v1484 = vmul.f32 %v1405, %v1405
    %v1485 = vmul.f32 %v1406, %v1406
    %v1486 = vmul.f32 %v1407, %v1407
    %v1487 = vmul.f32 %v1408, %v1408
    %v1488 = vmul.f32 %v1409, %v1409
    %v1489 = vmul.f32 %v1410, %v1410
    %v1490 = vmul.f32 %v1411, %v1411
    %1491 = vmatprep.subr.mxu0 %v1484
    %1492 = vmatpush1.msra.mxu0 %v1483
    %1493 = vmatprep.subr.mxu0 %v1486
    %1494 = vmatpush1.msra.mxu0 %v1485
    %1495 = vmatprep.subr.mxu0 %v1488
    %1496 = vmatpush1.msra.mxu0 %v1487
    %1497 = vmatprep.subr.mxu0 %v1490
    %1498 = vmatpush1.msra.mxu0 %v1489
    %1499 = vmatprep.subr.mxu0 0.0
    %1500 = vmatpush1.msra.mxu0 0.0
    %1501 = vmatprep.subr.mxu0 0.0
    %1502 = vmatpush1.msra.mxu0 0.0
    %1503 = vmatprep.subr.mxu0 0.0
    %1504 = vmatpush1.msra.mxu0 0.0
    %1505 = vmatprep.subr.mxu0 0.0
    %1506 = vmatpush1.msra.mxu0 0.0
    %1507 = vmatprep.subr.mxu0 0.0
    %1508 = vmatpush1.msra.mxu0 0.0
    %1509 = vmatprep.subr.mxu0 0.0
    %1510 = vmatpush1.msra.mxu0 0.0
    %1511 = vmatprep.subr.mxu0 0.0
    %1512 = vmatpush1.msra.mxu0 0.0
    %1513 = vmatprep.subr.mxu0 0.0
    %1514 = vmatpush1.msra.mxu0 0.0
    %1515 = vmatprep.subr.mxu0 0.0
    %1516 = vmatpush1.msra.mxu0 0.0
    %1517 = vmatprep.subr.mxu0 0.0
    %1518 = vmatpush1.msra.mxu0 0.0
    %1519 = vmatprep.subr.mxu0 0.0
    %1520 = vmatpush1.msra.mxu0 0.0
    %1521 = vmatprep.subr.mxu0 0.0
    %1522 = vmatpush1.msra.mxu0 0.0
    %1523 = vmatprep.subr.mxu0 0.0
    %1524 = vmatpush1.msra.mxu0 0.0
    %1525 = vmatprep.subr.mxu0 0.0
    %1526 = vmatpush1.msra.mxu0 0.0
    %1527 = vmatprep.subr.mxu0 0.0
    %1528 = vmatpush1.msra.mxu0 0.0
    %1529 = vmatprep.subr.mxu0 0.0
    %1530 = vmatpush1.msra.mxu0 0.0
    %1531 = vmatprep.subr.mxu0 0.0
    %1532 = vmatpush1.msra.mxu0 0.0
    %1533 = vmatprep.subr.mxu0 0.0
    %1534 = vmatpush1.msra.mxu0 0.0
    %1535 = vmatprep.subr.mxu0 0.0
    %1536 = vmatpush1.msra.mxu0 0.0
    %1537 = vmatprep.subr.mxu0 0.0
    %1538 = vmatpush1.msra.mxu0 0.0
    %1539 = vmatprep.subr.mxu0 0.0
    %1540 = vmatpush1.msra.mxu0 0.0
    %1541 = vmatprep.subr.mxu0 0.0
    %1542 = vmatpush1.msra.mxu0 0.0
    %1543 = vmatprep.subr.mxu0 0.0
    %1544 = vmatpush1.msra.mxu0 0.0
    %1545 = vmatprep.subr.mxu0 0.0
    %1546 = vmatpush1.msra.mxu0 0.0
    %1547 = vmatprep.subr.mxu0 0.0
    %1548 = vmatpush1.msra.mxu0 0.0
    %1549 = vmatprep.subr.mxu0 0.0
    %1550 = vmatpush1.msra.mxu0 0.0
    %1551 = vmatprep.subr.mxu0 0.0
    %1552 = vmatpush1.msra.mxu0 0.0
    %1553 = vmatprep.subr.mxu0 0.0
    %1554 = vmatpush1.msra.mxu0 0.0
    %1555 = vmatprep.mubr.f32.mxu0 0.0
    %1556 = vmatmul.mubr.f32.gmra.mrb[0].mxu0 %v266
    %v1557 = vpop.f32.mrb[0].mxu0
    %v1558 = vadd.f32 0.0, %v1557
    %v1559 = vpop.f32.mrb[0].mxu0
    %v1560 = vadd.f32 0.0, %v1559
    %1561 = vdwg.mxu0
    %v1562 = vmul.f32 %v1479, 0.03125
    %v1563 = vmul.f32 %v1481, 0.03125
    %v1564 = vmul.f32 %v1558, 0.03125
    %v1565 = vmul.f32 %v1560, 0.03125
    %v1566 = vmul.f32 %v1562, %v1562
    %v1567 = vmul.f32 %v1563, %v1563
    %v1568 = vsub.f32 %v1564, %v1566
    %v1569 = vsub.f32 %v1565, %v1567
    %v1570 = vadd.f32 %v1568, 4e-05
    %v1571 = vadd.f32 %v1569, 4e-05
    %v1572 = vrsqrt.pop %v1570
    %v1573 = vrsqrt.pop %v1571
    %v1576 = vcombine.low %v1572, %v1573
    %v1578 = vunpack.c.l.s4 1966171168
    %v1579 = vunpack.c.0.s8 %v1578
    %v1580 = vlaneseq
    %v1581 = vshrl.u32 %v1580, 7
    %v1582 = vsub.s32 %v1579, %v1581
    %v1583 = vrot.slane %v1576, %v1582
    %v1585 = vunpack.c.l.s4 1966171168
    %v1586 = vunpack.c.0.s8 %v1585
    %v1587 = vlaneseq
    %v1588 = vshrl.u32 %v1587, 7
    %v1589 = vsub.s32 %v1586, %v1588
    %v1590 = vrot.slane %v1583, %v1589
    %v1592 = vmul.f32 %v1293, %v1590
    %v1594 = vlaneseq
    %v1595 = vshrl.u32 %v1594, 7
    %v1596 = vsub.s32 0, %v1595
    %v1597 = vrot.slane %v1592, %v1596
    %v1598 = vlaneseq
    %v1599 = vshrl.u32 %v1598, 7
    %v1600 = vsub.s32 1, %v1599
    %v1601 = vrot.slane %v1592, %v1600
    %v1604 = vmul.f32 %v1562, %v1597
    %v1605 = vmul.f32 %v1563, %v1601
    %v1608 = vcombine.low %v1604, %v1605
    %v1610 = vunpack.c.l.s4 1966171168
    %v1611 = vunpack.c.0.s8 %v1610
    %v1612 = vlaneseq
    %v1613 = vshrl.u32 %v1612, 7
    %v1614 = vsub.s32 %v1611, %v1613
    %v1615 = vrot.slane %v1608, %v1614
    %v1617 = vunpack.c.l.s4 1966171168
    %v1618 = vunpack.c.0.s8 %v1617
    %v1619 = vlaneseq
    %v1620 = vshrl.u32 %v1619, 7
    %v1621 = vsub.s32 %v1618, %v1620
    %v1622 = vrot.slane %v1615, %v1621
    %v1624 = vsub.f32 %v1295, %v1622
    %v1625 = vmul.f32 %v1404, %v1597
    %v1626 = vmul.f32 %v1405, %v1601
    %v1627 = vmul.f32 %v1406, %v1597
    %v1628 = vmul.f32 %v1407, %v1601
    %v1629 = vmul.f32 %v1408, %v1597
    %v1630 = vmul.f32 %v1409, %v1601
    %v1631 = vmul.f32 %v1410, %v1597
    %v1632 = vmul.f32 %v1411, %v1601
    %v1634 = vlaneseq
    %v1635 = vshrl.u32 %v1634, 7
    %v1636 = vsub.s32 0, %v1635
    %v1637 = vrot.slane %v1624, %v1636
    %v1638 = vlaneseq
    %v1639 = vshrl.u32 %v1638, 7
    %v1640 = vsub.s32 1, %v1639
    %v1641 = vrot.slane %v1624, %v1640
    %v1644 = vadd.f32 %v1625, %v1637
    %v1645 = vadd.f32 %v1626, %v1641
    %v1646 = vadd.f32 %v1627, %v1637
    %v1647 = vadd.f32 %v1628, %v1641
    %v1648 = vadd.f32 %v1629, %v1637
    %v1649 = vadd.f32 %v1630, %v1641
    %v1650 = vadd.f32 %v1631, %v1637
    %v1651 = vadd.f32 %v1632, %v1641
    %1652 = vmatprep.subr.mxu0 %v1645
    %1653 = vmatpush1.msra.mxu0 %v1644
    %1654 = vmatprep.subr.mxu0 %v1647
    %1655 = vmatpush1.msra.mxu0 %v1646
    %1656 = vmatprep.subr.mxu0 %v1649
    %1657 = vmatpush1.msra.mxu0 %v1648
    %1658 = vmatprep.subr.mxu0 %v1651
    %1659 = vmatpush1.msra.mxu0 %v1650
    %1660 = vmatprep.subr.mxu0 0.0
    %1661 = vmatpush1.msra.mxu0 0.0
    %1662 = vmatprep.subr.mxu0 0.0
    %1663 = vmatpush1.msra.mxu0 0.0
    %1664 = vmatprep.subr.mxu0 0.0
    %1665 = vmatpush1.msra.mxu0 0.0
    %1666 = vmatprep.subr.mxu0 0.0
    %1667 = vmatpush1.msra.mxu0 0.0
    %1668 = vmatprep.subr.mxu0 0.0
    %1669 = vmatpush1.msra.mxu0 0.0
    %1670 = vmatprep.subr.mxu0 0.0
    %1671 = vmatpush1.msra.mxu0 0.0
    %1672 = vmatprep.subr.mxu0 0.0
    %1673 = vmatpush1.msra.mxu0 0.0
    %1674 = vmatprep.subr.mxu0 0.0
    %1675 = vmatpush1.msra.mxu0 0.0
    %1676 = vmatprep.subr.mxu0 0.0
    %1677 = vmatpush1.msra.mxu0 0.0
    %1678 = vmatprep.subr.mxu0 0.0
    %1679 = vmatpush1.msra.mxu0 0.0
    %1680 = vmatprep.subr.mxu0 0.0
    %1681 = vmatpush1.msra.mxu0 0.0
    %1682 = vmatprep.subr.mxu0 0.0
    %1683 = vmatpush1.msra.mxu0 0.0
    %1684 = vmatprep.subr.mxu0 0.0
    %1685 = vmatpush1.msra.mxu0 0.0
    %1686 = vmatprep.subr.mxu0 0.0
    %1687 = vmatpush1.msra.mxu0 0.0
    %1688 = vmatprep.subr.mxu0 0.0
    %1689 = vmatpush1.msra.mxu0 0.0
    %1690 = vmatprep.subr.mxu0 0.0
    %1691 = vmatpush1.msra.mxu0 0.0
    %1692 = vmatprep.subr.mxu0 0.0
    %1693 = vmatpush1.msra.mxu0 0.0
    %1694 = vmatprep.subr.mxu0 0.0
    %1695 = vmatpush1.msra.mxu0 0.0
    %1696 = vmatprep.subr.mxu0 0.0
    %1697 = vmatpush1.msra.mxu0 0.0
    %1698 = vmatprep.subr.mxu0 0.0
    %1699 = vmatpush1.msra.mxu0 0.0
    %1700 = vmatprep.subr.mxu0 0.0
    %1701 = vmatpush1.msra.mxu0 0.0
    %1702 = vmatprep.subr.mxu0 0.0
    %1703 = vmatpush1.msra.mxu0 0.0
    %1704 = vmatprep.subr.mxu0 0.0
    %1705 = vmatpush1.msra.mxu0 0.0
    %1706 = vmatprep.subr.mxu0 0.0
    %1707 = vmatpush1.msra.mxu0 0.0
    %1708 = vmatprep.subr.mxu0 0.0
    %1709 = vmatpush1.msra.mxu0 0.0
    %1710 = vmatprep.subr.mxu0 0.0
    %1711 = vmatpush1.msra.mxu0 0.0
    %1712 = vmatprep.subr.mxu0 0.0
    %1713 = vmatpush1.msra.mxu0 0.0
    %1714 = vmatprep.subr.mxu0 0.0
    %1715 = vmatpush1.msra.mxu0 0.0
    %1716 = vmatprep.mubr.f32.mxu0 0.0
    %1717 = vmatmul.mubr.f32.gmra.mrb[0].mxu0 %v55
    %v1718 = vpop.f32.mrb[0].mxu0
    %v1719 = vadd.f32 0.0, %v1718
    %v1720 = vpop.f32.mrb[0].mxu0
    %v1721 = vadd.f32 0.0, %v1720
    %1722 = vmatprep.mubr.f32.mxu0 0.0
    %1723 = vmatmul.mubr.f32.gmra.mrb[0].mxu0 %v58
    %v1724 = vpop.f32.mrb[0].mxu0
    %v1725 = vadd.f32 0.0, %v1724
    %v1726 = vpop.f32.mrb[0].mxu0
    %v1727 = vadd.f32 0.0, %v1726
    %1728 = vmatprep.mubr.f32.mxu0 0.0
    %1729 = vmatmul.mubr.f32.gmra.mrb[0].mxu0 %v61
    %v1730 = vpop.f32.mrb[0].mxu0
    %v1731 = vadd.f32 0.0, %v1730
    %v1732 = vpop.f32.mrb[0].mxu0
    %v1733 = vadd.f32 0.0, %v1732
    %1734 = vmatprep.mubr.f32.mxu0 0.0
    %1735 = vmatmul.mubr.f32.gmra.mrb[0].mxu0 %v64
    %v1736 = vpop.f32.mrb[0].mxu0
    %v1737 = vadd.f32 0.0, %v1736
    %v1738 = vpop.f32.mrb[0].mxu0
    %v1739 = vadd.f32 0.0, %v1738
    %1740 = vdwg.mxu0
    %v1741 = vld [vmem:[#allocation2 + $0x1b0] sm:$0xff]
    %v1742 = vld [vmem:[#allocation2 + $0x1c0] sm:$0xff]
    %v1743 = vld [vmem:[#allocation2 + $0x1d0] sm:$0xff]
    %v1744 = vld [vmem:[#allocation2 + $0x1e0] sm:$0xff]
    %v1745 = vld [vmem:[#allocation2 + $0x1f0] sm:$0xff]
    %v1746 = vld [vmem:[#allocation2 + $0x200] sm:$0xff]
    %v1747 = vld [vmem:[#allocation2 + $0x210] sm:$0xff]
    %v1748 = vld [vmem:[#allocation2 + $0x220] sm:$0xff]
    %v1749 = vld [vmem:[#allocation2 + $0x230] sm:$0xff]
    %v1750 = vld [vmem:[#allocation2 + $0x240] sm:$0xff]
    %v1751 = vld [vmem:[#allocation2 + $0x250] sm:$0xff]
    %v1752 = vld [vmem:[#allocation2 + $0x260] sm:$0xff]
    %v1753 = vld [vmem:[#allocation2 + $0x270] sm:$0xff]
    %v1754 = vld [vmem:[#allocation2 + $0x280] sm:$0xff]
    %v1755 = vld [vmem:[#allocation2 + $0x290] sm:$0xff]
    %v1756 = vld [vmem:[#allocation2 + $0x2a0] sm:$0xff]
    %v1757 = vld [vmem:[#allocation2 + $0x2b0] sm:$0xff]
    %v1758 = vld [vmem:[#allocation2 + $0x2c0] sm:$0xff]
    %v1759 = vld [vmem:[#allocation2 + $0x2d0] sm:$0xff]
    %v1760 = vld [vmem:[#allocation2 + $0x2e0] sm:$0xff]
    %v1761 = vld [vmem:[#allocation2 + $0x2f0] sm:$0xff]
    %v1762 = vld [vmem:[#allocation2 + $0x300] sm:$0xff]
    %v1763 = vld [vmem:[#allocation2 + $0x310] sm:$0xff]
    %v1764 = vld [vmem:[#allocation2 + $0x320] sm:$0xff]
    %v1765 = vld [vmem:[#allocation2 + $0x330] sm:$0xff]
    %v1766 = vld [vmem:[#allocation2 + $0x340] sm:$0xff]
    %v1767 = vld [vmem:[#allocation2 + $0x350] sm:$0xff]
    %v1768 = vld [vmem:[#allocation2 + $0x360] sm:$0xff]
    %v1769 = vld [vmem:[#allocation2 + $0x370] sm:$0xff]
    %v1770 = vld [vmem:[#allocation2 + $0x380] sm:$0xff]
    %v1771 = vld [vmem:[#allocation2 + $0x390] sm:$0xff]
    %v1772 = vld [vmem:[#allocation2 + $0x3a0] sm:$0xff]
    %v1773 = vld [vmem:[#allocation4 + $0x14] ss:$0 sm:$0xff]
    %v1774 = vld [vmem:[#allocation4 + $0x15] ss:$0 sm:$0xff]
    %v1775 = vld [vmem:[#allocation4 + $0x16] ss:$0 sm:$0xff]
    %1776 = vmatprep.subr.mxu0 0.0
    %1777 = vmatpush1.msra.mxu0 %v1741
    %1778 = vmatprep.subr.mxu0 0.0
    %1779 = vmatpush1.msra.mxu0 %v1742
    %1780 = vmatprep.subr.mxu0 0.0
    %1781 = vmatpush1.msra.mxu0 %v1743
    %1782 = vmatprep.subr.mxu0 0.0
    %1783 = vmatpush1.msra.mxu0 %v1744
    %1784 = vmatprep.subr.mxu0 0.0
    %1785 = vmatpush1.msra.mxu0 %v1745
    %1786 = vmatprep.subr.mxu0 0.0
    %1787 = vmatpush1.msra.mxu0 %v1746
    %1788 = vmatprep.subr.mxu0 0.0
    %1789 = vmatpush1.msra.mxu0 %v1747
    %1790 = vmatprep.subr.mxu0 0.0
    %1791 = vmatpush1.msra.mxu0 %v1748
    %1792 = vmatprep.subr.mxu0 0.0
    %1793 = vmatpush1.msra.mxu0 %v1749
    %1794 = vmatprep.subr.mxu0 0.0
    %1795 = vmatpush1.msra.mxu0 %v1750
    %1796 = vmatprep.subr.mxu0 0.0
    %1797 = vmatpush1.msra.mxu0 %v1751
    %1798 = vmatprep.subr.mxu0 0.0
    %1799 = vmatpush1.msra.mxu0 %v1752
    %1800 = vmatprep.subr.mxu0 0.0
    %1801 = vmatpush1.msra.mxu0 %v1753
    %1802 = vmatprep.subr.mxu0 0.0
    %1803 = vmatpush1.msra.mxu0 %v1754
    %1804 = vmatprep.subr.mxu0 0.0
    %1805 = vmatpush1.msra.mxu0 %v1755
    %1806 = vmatprep.subr.mxu0 0.0
    %1807 = vmatpush1.msra.mxu0 %v1756
    %1808 = vmatprep.subr.mxu0 0.0
    %1809 = vmatpush1.msra.mxu0 %v1757
    %1810 = vmatprep.subr.mxu0 0.0
    %1811 = vmatpush1.msra.mxu0 %v1758
    %1812 = vmatprep.subr.mxu0 0.0
    %1813 = vmatpush1.msra.mxu0 %v1759
    %1814 = vmatprep.subr.mxu0 0.0
    %1815 = vmatpush1.msra.mxu0 %v1760
    %1816 = vmatprep.subr.mxu0 0.0
    %1817 = vmatpush1.msra.mxu0 %v1761
    %1818 = vmatprep.subr.mxu0 0.0
    %1819 = vmatpush1.msra.mxu0 %v1762
    %1820 = vmatprep.subr.mxu0 0.0
    %1821 = vmatpush1.msra.mxu0 %v1763
    %1822 = vmatprep.subr.mxu0 0.0
    %1823 = vmatpush1.msra.mxu0 %v1764
    %1824 = vmatprep.subr.mxu0 0.0
    %1825 = vmatpush1.msra.mxu0 %v1765
    %1826 = vmatprep.subr.mxu0 0.0
    %1827 = vmatpush1.msra.mxu0 %v1766
    %1828 = vmatprep.subr.mxu0 0.0
    %1829 = vmatpush1.msra.mxu0 %v1767
    %1830 = vmatprep.subr.mxu0 0.0
    %1831 = vmatpush1.msra.mxu0 %v1768
    %1832 = vmatprep.subr.mxu0 0.0
    %1833 = vmatpush1.msra.mxu0 %v1769
    %1834 = vmatprep.subr.mxu0 0.0
    %1835 = vmatpush1.msra.mxu0 %v1770
    %1836 = vmatprep.subr.mxu0 0.0
    %1837 = vmatpush1.msra.mxu0 %v1771
    %1838 = vmatprep.subr.mxu0 0.0
    %1839 = vmatpush1.msra.mxu0 %v1772
    %1840 = vmatprep.mubr.f32.mxu0 %v1721
    %1841 = vmatmul.mubr.f32.gmra.mrb[0].mxu0 %v1719
    %v1842 = vpop.f32.mrb[0].mxu0
    %v1843 = vadd.f32 %v1773, %v1842
    %v1844 = vpop.f32.mrb[0].mxu0
    %1845 = vmatprep.mubr.f32.mxu0 %v1727
    %1846 = vmatmul.mubr.f32.gmra.mrb[0].mxu0 %v1725
    %v1847 = vpop.f32.mrb[0].mxu0
    %v1848 = vadd.f32 %v1773, %v1847
    %v1849 = vpop.f32.mrb[0].mxu0
    %1850 = vmatprep.mubr.f32.mxu0 %v1733
    %1851 = vmatmul.mubr.f32.gmra.mrb[0].mxu0 %v1731
    %v1852 = vpop.f32.mrb[0].mxu0
    %v1853 = vadd.f32 %v1773, %v1852
    %v1854 = vpop.f32.mrb[0].mxu0
    %1855 = vmatprep.mubr.f32.mxu0 %v1739
    %1856 = vmatmul.mubr.f32.gmra.mrb[0].mxu0 %v1737
    %v1857 = vpop.f32.mrb[0].mxu0
    %v1858 = vadd.f32 %v1773, %v1857
    %v1859 = vpop.f32.mrb[0].mxu0
    %1860 = vdwg.mxu0
    %v1861 = vmul.f32 %v1843, 0.5
    %v1862 = vmul.f32 %v1848, 0.5
    %v1863 = vmul.f32 %v1853, 0.5
    %v1864 = vmul.f32 %v1858, 0.5
    %v1865 = vtanh.pop %v1861
    %v1866 = vtanh.pop %v1862
    %v1867 = vtanh.pop %v1863
    %v1868 = vtanh.pop %v1864
    %1869 = vmatprep.subr.mxu0 0.0
    %1870 = vmatpush1.msra.mxu0 %v1865
    %1871 = vmatprep.subr.mxu0 0.0
    %1872 = vmatpush1.msra.mxu0 %v1866
    %1873 = vmatprep.subr.mxu0 0.0
    %1874 = vmatpush1.msra.mxu0 %v1867
    %1875 = vmatprep.subr.mxu0 0.0
    %1876 = vmatpush1.msra.mxu0 %v1868
    %1877 = vmatprep.subr.mxu0 0.0
    %1878 = vmatpush1.msra.mxu0 0.0
    %1879 = vmatprep.subr.mxu0 0.0
    %1880 = vmatpush1.msra.mxu0 0.0
    %1881 = vmatprep.subr.mxu0 0.0
    %1882 = vmatpush1.msra.mxu0 0.0
    %1883 = vmatprep.subr.mxu0 0.0
    %1884 = vmatpush1.msra.mxu0 0.0
    %1885 = vmatprep.subr.mxu0 0.0
    %1886 = vmatpush1.msra.mxu0 0.0
    %1887 = vmatprep.subr.mxu0 0.0
    %1888 = vmatpush1.msra.mxu0 0.0
    %1889 = vmatprep.subr.mxu0 0.0
    %1890 = vmatpush1.msra.mxu0 0.0
    %1891 = vmatprep.subr.mxu0 0.0
    %1892 = vmatpush1.msra.mxu0 0.0
    %1893 = vmatprep.subr.mxu0 0.0
    %1894 = vmatpush1.msra.mxu0 0.0
    %1895 = vmatprep.subr.mxu0 0.0
    %1896 = vmatpush1.msra.mxu0 0.0
    %1897 = vmatprep.subr.mxu0 0.0
    %1898 = vmatpush1.msra.mxu0 0.0
    %1899 = vmatprep.subr.mxu0 0.0
    %1900 = vmatpush1.msra.mxu0 0.0
    %1901 = vmatprep.subr.mxu0 0.0
    %1902 = vmatpush1.msra.mxu0 0.0
    %1903 = vmatprep.subr.mxu0 0.0
    %1904 = vmatpush1.msra.mxu0 0.0
    %1905 = vmatprep.subr.mxu0 0.0
    %1906 = vmatpush1.msra.mxu0 0.0
    %1907 = vmatprep.subr.mxu0 0.0
    %1908 = vmatpush1.msra.mxu0 0.0
    %1909 = vmatprep.subr.mxu0 0.0
    %1910 = vmatpush1.msra.mxu0 0.0
    %1911 = vmatprep.subr.mxu0 0.0
    %1912 = vmatpush1.msra.mxu0 0.0
    %1913 = vmatprep.subr.mxu0 0.0
    %1914 = vmatpush1.msra.mxu0 0.0
    %1915 = vmatprep.subr.mxu0 0.0
    %1916 = vmatpush1.msra.mxu0 0.0
    %1917 = vmatprep.subr.mxu0 0.0
    %1918 = vmatpush1.msra.mxu0 0.0
    %1919 = vmatprep.subr.mxu0 0.0
    %1920 = vmatpush1.msra.mxu0 0.0
    %1921 = vmatprep.subr.mxu0 0.0
    %1922 = vmatpush1.msra.mxu0 0.0
    %1923 = vmatprep.subr.mxu0 0.0
    %1924 = vmatpush1.msra.mxu0 0.0
    %1925 = vmatprep.subr.mxu0 0.0
    %1926 = vmatpush1.msra.mxu0 0.0
    %1927 = vmatprep.subr.mxu0 0.0
    %1928 = vmatpush1.msra.mxu0 0.0
    %1929 = vmatprep.subr.mxu0 0.0
    %1930 = vmatpush1.msra.mxu0 0.0
    %1931 = vmatprep.subr.mxu0 0.0
    %1932 = vmatpush1.msra.mxu0 0.0
    %1933 = vmatprep.mubr.f32.mxu0 0.0
    %1934 = vmatmul.mubr.f32.gmra.mrb[0].mxu0 %v266
    %v1935 = vpop.f32.mrb[0].mxu0
    %v1936 = vadd.f32 0.0, %v1935
    %v1937 = vpop.f32.mrb[0].mxu0
    %1938 = vdwg.mxu0
    %v1939 = vmul.f32 %v1865, %v1865
    %v1940 = vmul.f32 %v1866, %v1866
    %v1941 = vmul.f32 %v1867, %v1867
    %v1942 = vmul.f32 %v1868, %v1868
    %1943 = vmatprep.subr.mxu0 0.0
    %1944 = vmatpush1.msra.mxu0 %v1939
    %1945 = vmatprep.subr.mxu0 0.0
    %1946 = vmatpush1.msra.mxu0 %v1940
    %1947 = vmatprep.subr.mxu0 0.0
    %1948 = vmatpush1.msra.mxu0 %v1941
    %1949 = vmatprep.subr.mxu0 0.0
    %1950 = vmatpush1.msra.mxu0 %v1942
    %1951 = vmatprep.subr.mxu0 0.0
    %1952 = vmatpush1.msra.mxu0 0.0
    %1953 = vmatprep.subr.mxu0 0.0
    %1954 = vmatpush1.msra.mxu0 0.0
    %1955 = vmatprep.subr.mxu0 0.0
    %1956 = vmatpush1.msra.mxu0 0.0
    %1957 = vmatprep.subr.mxu0 0.0
    %1958 = vmatpush1.msra.mxu0 0.0
    %1959 = vmatprep.subr.mxu0 0.0
    %1960 = vmatpush1.msra.mxu0 0.0
    %1961 = vmatprep.subr.mxu0 0.0
    %1962 = vmatpush1.msra.mxu0 0.0
    %1963 = vmatprep.subr.mxu0 0.0
    %1964 = vmatpush1.msra.mxu0 0.0
    %1965 = vmatprep.subr.mxu0 0.0
    %1966 = vmatpush1.msra.mxu0 0.0
    %1967 = vmatprep.subr.mxu0 0.0
    %1968 = vmatpush1.msra.mxu0 0.0
    %1969 = vmatprep.subr.mxu0 0.0
    %1970 = vmatpush1.msra.mxu0 0.0
    %1971 = vmatprep.subr.mxu0 0.0
    %1972 = vmatpush1.msra.mxu0 0.0
    %1973 = vmatprep.subr.mxu0 0.0
    %1974 = vmatpush1.msra.mxu0 0.0
    %1975 = vmatprep.subr.mxu0 0.0
    %1976 = vmatpush1.msra.mxu0 0.0
    %1977 = vmatprep.subr.mxu0 0.0
    %1978 = vmatpush1.msra.mxu0 0.0
    %1979 = vmatprep.subr.mxu0 0.0
    %1980 = vmatpush1.msra.mxu0 0.0
    %1981 = vmatprep.subr.mxu0 0.0
    %1982 = vmatpush1.msra.mxu0 0.0
    %1983 = vmatprep.subr.mxu0 0.0
    %1984 = vmatpush1.msra.mxu0 0.0
    %1985 = vmatprep.subr.mxu0 0.0
    %1986 = vmatpush1.msra.mxu0 0.0
    %1987 = vmatprep.subr.mxu0 0.0
    %1988 = vmatpush1.msra.mxu0 0.0
    %1989 = vmatprep.subr.mxu0 0.0
    %1990 = vmatpush1.msra.mxu0 0.0
    %1991 = vmatprep.subr.mxu0 0.0
    %1992 = vmatpush1.msra.mxu0 0.0
    %1993 = vmatprep.subr.mxu0 0.0
    %1994 = vmatpush1.msra.mxu0 0.0
    %1995 = vmatprep.subr.mxu0 0.0
    %1996 = vmatpush1.msra.mxu0 0.0
    %1997 = vmatprep.subr.mxu0 0.0
    %1998 = vmatpush1.msra.mxu0 0.0
    %1999 = vmatprep.subr.mxu0 0.0
    %2000 = vmatpush1.msra.mxu0 0.0
    %2001 = vmatprep.subr.mxu0 0.0
    %2002 = vmatpush1.msra.mxu0 0.0
    %2003 = vmatprep.subr.mxu0 0.0
    %2004 = vmatpush1.msra.mxu0 0.0
    %2005 = vmatprep.subr.mxu0 0.0
    %2006 = vmatpush1.msra.mxu0 0.0
    %2007 = vmatprep.mubr.f32.mxu0 0.0
    %2008 = vmatmul.mubr.f32.gmra.mrb[0].mxu0 %v266
    %v2009 = vpop.f32.mrb[0].mxu0
    %v2010 = vadd.f32 0.0, %v2009
    %v2011 = vpop.f32.mrb[0].mxu0
    %2012 = vdwg.mxu0
    %v2013 = vmul.f32 %v1936, 0.03125
    %v2014 = vmul.f32 %v2010, 0.03125
    %v2015 = vmul.f32 %v2013, %v2013
    %v2016 = vsub.f32 %v2014, %v2015
    %v2017 = vadd.f32 %v2016, 4e-05
    %v2018 = vrsqrt.pop %v2017
    %v2019 = vmul.f32 %v1774, %v2018
    %v2020 = vmul.f32 %v2013, %v2019
    %v2021 = vsub.f32 %v1775, %v2020
    %v2022 = vlaneseq
    %v2023 = vshrl.u32 %v2022, 7
    %v2024 = vsub.s32 0, %v2023
    %v2025 = vrot.slane %v2019, %v2024
    %v2026 = vmul.f32 %v1865, %v2025
    %v2027 = vmul.f32 %v1866, %v2025
    %v2028 = vmul.f32 %v1867, %v2025
    %v2029 = vmul.f32 %v1868, %v2025
    %v2030 = vlaneseq
    %v2031 = vshrl.u32 %v2030, 7
    %v2032 = vsub.s32 0, %v2031
    %v2033 = vrot.slane %v2021, %v2032
    %v2034 = vadd.f32 %v2026, %v2033
    %v2035 = vadd.f32 %v2027, %v2033
    %v2036 = vadd.f32 %v2028, %v2033
    %v2037 = vadd.f32 %v2029, %v2033
    %2038 = vmatprep.subr.mxu0 0.0
    %2039 = vmatpush1.msra.mxu0 %v2034
    %2040 = vmatprep.subr.mxu0 0.0
    %2041 = vmatpush1.msra.mxu0 %v2035
    %2042 = vmatprep.subr.mxu0 0.0
    %2043 = vmatpush1.msra.mxu0 %v2036
    %2044 = vmatprep.subr.mxu0 0.0
    %2045 = vmatpush1.msra.mxu0 %v2037
    %2046 = vmatprep.subr.mxu0 0.0
    %2047 = vmatpush1.msra.mxu0 0.0
    %2048 = vmatprep.subr.mxu0 0.0
    %2049 = vmatpush1.msra.mxu0 0.0
    %2050 = vmatprep.subr.mxu0 0.0
    %2051 = vmatpush1.msra.mxu0 0.0
    %2052 = vmatprep.subr.mxu0 0.0
    %2053 = vmatpush1.msra.mxu0 0.0
    %2054 = vmatprep.subr.mxu0 0.0
    %2055 = vmatpush1.msra.mxu0 0.0
    %2056 = vmatprep.subr.mxu0 0.0
    %2057 = vmatpush1.msra.mxu0 0.0
    %2058 = vmatprep.subr.mxu0 0.0
    %2059 = vmatpush1.msra.mxu0 0.0
    %2060 = vmatprep.subr.mxu0 0.0
    %2061 = vmatpush1.msra.mxu0 0.0
    %2062 = vmatprep.subr.mxu0 0.0
    %2063 = vmatpush1.msra.mxu0 0.0
    %2064 = vmatprep.subr.mxu0 0.0
    %2065 = vmatpush1.msra.mxu0 0.0
    %2066 = vmatprep.subr.mxu0 0.0
    %2067 = vmatpush1.msra.mxu0 0.0
    %2068 = vmatprep.subr.mxu0 0.0
    %2069 = vmatpush1.msra.mxu0 0.0
    %2070 = vmatprep.subr.mxu0 0.0
    %2071 = vmatpush1.msra.mxu0 0.0
    %2072 = vmatprep.subr.mxu0 0.0
    %2073 = vmatpush1.msra.mxu0 0.0
    %2074 = vmatprep.subr.mxu0 0.0
    %2075 = vmatpush1.msra.mxu0 0.0
    %2076 = vmatprep.subr.mxu0 0.0
    %2077 = vmatpush1.msra.mxu0 0.0
    %2078 = vmatprep.subr.mxu0 0.0
    %2079 = vmatpush1.msra.mxu0 0.0
    %2080 = vmatprep.subr.mxu0 0.0
    %2081 = vmatpush1.msra.mxu0 0.0
    %2082 = vmatprep.subr.mxu0 0.0
    %2083 = vmatpush1.msra.mxu0 0.0
    %2084 = vmatprep.subr.mxu0 0.0
    %2085 = vmatpush1.msra.mxu0 0.0
    %2086 = vmatprep.subr.mxu0 0.0
    %2087 = vmatpush1.msra.mxu0 0.0
    %2088 = vmatprep.subr.mxu0 0.0
    %2089 = vmatpush1.msra.mxu0 0.0
    %2090 = vmatprep.subr.mxu0 0.0
    %2091 = vmatpush1.msra.mxu0 0.0
    %2092 = vmatprep.subr.mxu0 0.0
    %2093 = vmatpush1.msra.mxu0 0.0
    %2094 = vmatprep.subr.mxu0 0.0
    %2095 = vmatpush1.msra.mxu0 0.0
    %2096 = vmatprep.subr.mxu0 0.0
    %2097 = vmatpush1.msra.mxu0 0.0
    %2098 = vmatprep.subr.mxu0 0.0
    %2099 = vmatpush1.msra.mxu0 0.0
    %2100 = vmatprep.subr.mxu0 0.0
    %2101 = vmatpush1.msra.mxu0 0.0
    %2102 = vmatprep.mubr.f32.mxu0 0.0
    %2103 = vmatmul.mubr.f32.gmra.mrb[0].mxu0 %v55
    %v2104 = vpop.f32.mrb[0].mxu0
    %v2105 = vadd.f32 0.0, %v2104
    %v2106 = vpop.f32.mrb[0].mxu0
    %2107 = vmatprep.mubr.f32.mxu0 0.0
    %2108 = vmatmul.mubr.f32.gmra.mrb[0].mxu0 %v58
    %v2109 = vpop.f32.mrb[0].mxu0
    %v2110 = vadd.f32 0.0, %v2109
    %v2111 = vpop.f32.mrb[0].mxu0
    %2112 = vmatprep.mubr.f32.mxu0 0.0
    %2113 = vmatmul.mubr.f32.gmra.mrb[0].mxu0 %v61
    %v2114 = vpop.f32.mrb[0].mxu0
    %v2115 = vadd.f32 0.0, %v2114
    %v2116 = vpop.f32.mrb[0].mxu0
    %2117 = vmatprep.mubr.f32.mxu0 0.0
    %2118 = vmatmul.mubr.f32.gmra.mrb[0].mxu0 %v64
    %v2119 = vpop.f32.mrb[0].mxu0
    %v2120 = vadd.f32 0.0, %v2119
    %v2121 = vpop.f32.mrb[0].mxu0
    %2122 = vdwg.mxu0
    %v2123 = vld [vmem:[#allocation2 + $0x3b0] sm:$0xff]
    %v2124 = vld [vmem:[#allocation2 + $0x3c0] sm:$0xff]
    %v2125 = vld [vmem:[#allocation2 + $0x3d0] sm:$0xff]
    %v2126 = vld [vmem:[#allocation2 + $0x3e0] sm:$0xff]
    %v2127 = vld [vmem:[#allocation2 + $0x3f0] sm:$0xff]
    %v2128 = vld [vmem:[#allocation2 + $0x400] sm:$0xff]
    %v2129 = vld [vmem:[#allocation2 + $0x410] sm:$0xff]
    %v2130 = vld [vmem:[#allocation2 + $0x420] sm:$0xff]
    %v2131 = vld [vmem:[#allocation2 + $0x430] sm:$0xff]
    %v2132 = vld [vmem:[#allocation2 + $0x440] sm:$0xff]
    %v2133 = vld [vmem:[#allocation2 + $0x450] sm:$0xff]
    %v2134 = vld [vmem:[#allocation2 + $0x460] sm:$0xff]
    %v2135 = vld [vmem:[#allocation2 + $0x470] sm:$0xff]
    %v2136 = vld [vmem:[#allocation2 + $0x480] sm:$0xff]
    %v2137 = vld [vmem:[#allocation2 + $0x490] sm:$0xff]
    %v2138 = vld [vmem:[#allocation2 + $0x4a0] sm:$0xff]
    %v2139 = vld [vmem:[#allocation2 + $0x4b0] sm:$0xff]
    %v2140 = vld [vmem:[#allocation2 + $0x4c0] sm:$0xff]
    %v2141 = vld [vmem:[#allocation2 + $0x4d0] sm:$0xff]
    %v2142 = vld [vmem:[#allocation2 + $0x4e0] sm:$0xff]
    %v2143 = vld [vmem:[#allocation2 + $0x4f0] sm:$0xff]
    %v2144 = vld [vmem:[#allocation2 + $0x500] sm:$0xff]
    %v2145 = vld [vmem:[#allocation2 + $0x510] sm:$0xff]
    %v2146 = vld [vmem:[#allocation2 + $0x520] sm:$0xff]
    %v2147 = vld [vmem:[#allocation2 + $0x530] sm:$0xff]
    %v2148 = vld [vmem:[#allocation2 + $0x540] sm:$0xff]
    %v2149 = vld [vmem:[#allocation2 + $0x550] sm:$0xff]
    %v2150 = vld [vmem:[#allocation2 + $0x560] sm:$0xff]
    %v2151 = vld [vmem:[#allocation2 + $0x570] sm:$0xff]
    %v2152 = vld [vmem:[#allocation2 + $0x580] sm:$0xff]
    %v2153 = vld [vmem:[#allocation2 + $0x590] sm:$0xff]
    %v2154 = vld [vmem:[#allocation2 + $0x5a0] sm:$0xff]
    %2155 = vmatprep.subr.mxu0 0.0
    %2156 = vmatpush1.msra.mxu0 %v2139
    %2157 = vmatprep.subr.mxu0 0.0
    %2158 = vmatpush1.msra.mxu0 %v2140
    %2159 = vmatprep.subr.mxu0 0.0
    %2160 = vmatpush1.msra.mxu0 %v2141
    %2161 = vmatprep.subr.mxu0 0.0
    %2162 = vmatpush1.msra.mxu0 %v2142
    %2163 = vmatprep.subr.mxu0 0.0
    %2164 = vmatpush1.msra.mxu0 %v2143
    %2165 = vmatprep.subr.mxu0 0.0
    %2166 = vmatpush1.msra.mxu0 %v2144
    %2167 = vmatprep.subr.mxu0 0.0
    %2168 = vmatpush1.msra.mxu0 %v2145
    %2169 = vmatprep.subr.mxu0 0.0
    %2170 = vmatpush1.msra.mxu0 %v2146
    %2171 = vmatprep.subr.mxu0 0.0
    %2172 = vmatpush1.msra.mxu0 %v2147
    %2173 = vmatprep.subr.mxu0 0.0
    %2174 = vmatpush1.msra.mxu0 %v2148
    %2175 = vmatprep.subr.mxu0 0.0
    %2176 = vmatpush1.msra.mxu0 %v2149
    %2177 = vmatprep.subr.mxu0 0.0
    %2178 = vmatpush1.msra.mxu0 %v2150
    %2179 = vmatprep.subr.mxu0 0.0
    %2180 = vmatpush1.msra.mxu0 %v2151
    %2181 = vmatprep.subr.mxu0 0.0
    %2182 = vmatpush1.msra.mxu0 %v2152
    %2183 = vmatprep.subr.mxu0 0.0
    %2184 = vmatpush1.msra.mxu0 %v2153
    %2185 = vmatprep.subr.mxu0 0.0
    %2186 = vmatpush1.msra.mxu0 %v2154
    %2187 = vmatprep.subr.mxu0 0.0
    %2188 = vmatpush1.msra.mxu0 0.0
    %2189 = vmatprep.subr.mxu0 0.0
    %2190 = vmatpush1.msra.mxu0 0.0
    %2191 = vmatprep.subr.mxu0 0.0
    %2192 = vmatpush1.msra.mxu0 0.0
    %2193 = vmatprep.subr.mxu0 0.0
    %2194 = vmatpush1.msra.mxu0 0.0
    %2195 = vmatprep.subr.mxu0 0.0
    %2196 = vmatpush1.msra.mxu0 0.0
    %2197 = vmatprep.subr.mxu0 0.0
    %2198 = vmatpush1.msra.mxu0 0.0
    %2199 = vmatprep.subr.mxu0 0.0
    %2200 = vmatpush1.msra.mxu0 0.0
    %2201 = vmatprep.subr.mxu0 0.0
    %2202 = vmatpush1.msra.mxu0 0.0
    %2203 = vmatprep.subr.mxu0 0.0
    %2204 = vmatpush1.msra.mxu0 0.0
    %2205 = vmatprep.subr.mxu0 0.0
    %2206 = vmatpush1.msra.mxu0 0.0
    %2207 = vmatprep.subr.mxu0 0.0
    %2208 = vmatpush1.msra.mxu0 0.0
    %2209 = vmatprep.subr.mxu0 0.0
    %2210 = vmatpush1.msra.mxu0 0.0
    %2211 = vmatprep.subr.mxu0 0.0
    %2212 = vmatpush1.msra.mxu0 0.0
    %2213 = vmatprep.subr.mxu0 0.0
    %2214 = vmatpush1.msra.mxu0 0.0
    %2215 = vmatprep.subr.mxu0 0.0
    %2216 = vmatpush1.msra.mxu0 0.0
    %2217 = vmatprep.subr.mxu0 0.0
    %2218 = vmatpush1.msra.mxu0 0.0
    %2219 = vmatprep.mubr.f32.mxu0 0.0
    %2220 = vmatmul.mubr.f32.gmra.mrb[0].mxu0 %v1240
    %v2221 = vpop.f32.mrb[0].mxu0
    %v2222 = vadd.f32 0.0, %v2221
    %v2223 = vpop.f32.mrb[0].mxu0
    %2224 = vmatprep.mubr.f32.mxu0 0.0
    %2225 = vmatmul.mubr.f32.gmra.mrb[0].mxu0 %v1245
    %v2226 = vpop.f32.mrb[0].mxu0
    %v2227 = vadd.f32 0.0, %v2226
    %v2228 = vpop.f32.mrb[0].mxu0
    %2229 = vmatprep.mubr.f32.mxu0 0.0
    %2230 = vmatmul.mubr.f32.gmra.mrb[0].mxu0 %v1250
    %v2231 = vpop.f32.mrb[0].mxu0
    %v2232 = vadd.f32 0.0, %v2231
    %v2233 = vpop.f32.mrb[0].mxu0
    %2234 = vmatprep.mubr.f32.mxu0 0.0
    %2235 = vmatmul.mubr.f32.gmra.mrb[0].mxu0 %v1255
    %v2236 = vpop.f32.mrb[0].mxu0
    %v2237 = vadd.f32 0.0, %v2236
    %v2238 = vpop.f32.mrb[0].mxu0
    %2239 = vdwg.mxu0
    %2240 = vmatprep.subr.mxu0 0.0
    %2241 = vmatpush1.msra.mxu0 %v2123
    %2242 = vmatprep.subr.mxu0 0.0
    %2243 = vmatpush1.msra.mxu0 %v2124
    %2244 = vmatprep.subr.mxu0 0.0
    %2245 = vmatpush1.msra.mxu0 %v2125
    %2246 = vmatprep.subr.mxu0 0.0
    %2247 = vmatpush1.msra.mxu0 %v2126
    %2248 = vmatprep.subr.mxu0 0.0
    %2249 = vmatpush1.msra.mxu0 %v2127
    %2250 = vmatprep.subr.mxu0 0.0
    %2251 = vmatpush1.msra.mxu0 %v2128
    %2252 = vmatprep.subr.mxu0 0.0
    %2253 = vmatpush1.msra.mxu0 %v2129
    %2254 = vmatprep.subr.mxu0 0.0
    %2255 = vmatpush1.msra.mxu0 %v2130
    %2256 = vmatprep.subr.mxu0 0.0
    %2257 = vmatpush1.msra.mxu0 %v2131
    %2258 = vmatprep.subr.mxu0 0.0
    %2259 = vmatpush1.msra.mxu0 %v2132
    %2260 = vmatprep.subr.mxu0 0.0
    %2261 = vmatpush1.msra.mxu0 %v2133
    %2262 = vmatprep.subr.mxu0 0.0
    %2263 = vmatpush1.msra.mxu0 %v2134
    %2264 = vmatprep.subr.mxu0 0.0
    %2265 = vmatpush1.msra.mxu0 %v2135
    %2266 = vmatprep.subr.mxu0 0.0
    %2267 = vmatpush1.msra.mxu0 %v2136
    %2268 = vmatprep.subr.mxu0 0.0
    %2269 = vmatpush1.msra.mxu0 %v2137
    %2270 = vmatprep.subr.mxu0 0.0
    %2271 = vmatpush1.msra.mxu0 %v2138
    %2272 = vmatprep.subr.mxu0 0.0
    %2273 = vmatpush1.msra.mxu0 0.0
    %2274 = vmatprep.subr.mxu0 0.0
    %2275 = vmatpush1.msra.mxu0 0.0
    %2276 = vmatprep.subr.mxu0 0.0
    %2277 = vmatpush1.msra.mxu0 0.0
    %2278 = vmatprep.subr.mxu0 0.0
    %2279 = vmatpush1.msra.mxu0 0.0
    %2280 = vmatprep.subr.mxu0 0.0
    %2281 = vmatpush1.msra.mxu0 0.0
    %2282 = vmatprep.subr.mxu0 0.0
    %2283 = vmatpush1.msra.mxu0 0.0
    %2284 = vmatprep.subr.mxu0 0.0
    %2285 = vmatpush1.msra.mxu0 0.0
    %2286 = vmatprep.subr.mxu0 0.0
    %2287 = vmatpush1.msra.mxu0 0.0
    %2288 = vmatprep.subr.mxu0 0.0
    %2289 = vmatpush1.msra.mxu0 0.0
    %2290 = vmatprep.subr.mxu0 0.0
    %2291 = vmatpush1.msra.mxu0 0.0
    %2292 = vmatprep.subr.mxu0 0.0
    %2293 = vmatpush1.msra.mxu0 0.0
    %2294 = vmatprep.subr.mxu0 0.0
    %2295 = vmatpush1.msra.mxu0 0.0
    %2296 = vmatprep.subr.mxu0 0.0
    %2297 = vmatpush1.msra.mxu0 0.0
    %2298 = vmatprep.subr.mxu0 0.0
    %2299 = vmatpush1.msra.mxu0 0.0
    %2300 = vmatprep.subr.mxu0 0.0
    %2301 = vmatpush1.msra.mxu0 0.0
    %2302 = vmatprep.subr.mxu0 0.0
    %2303 = vmatpush1.msra.mxu0 0.0
    %2304 = vmatprep.mubr.f32.mxu0 0.0
    %2305 = vmatmul.mubr.f32.gmra.mrb[0].mxu0 %v2105
    %v2306 = vpop.f32.mrb[0].mxu0
    %v2307 = vadd.f32 %v2222, %v2306
    %v2308 = vpop.f32.mrb[0].mxu0
    %2309 = vmatprep.mubr.f32.mxu0 0.0
    %2310 = vmatmul.mubr.f32.gmra.mrb[0].mxu0 %v2110
    %v2311 = vpop.f32.mrb[0].mxu0
    %v2312 = vadd.f32 %v2227, %v2311
    %v2313 = vpop.f32.mrb[0].mxu0
    %2314 = vmatprep.mubr.f32.mxu0 0.0
    %2315 = vmatmul.mubr.f32.gmra.mrb[0].mxu0 %v2115
    %v2316 = vpop.f32.mrb[0].mxu0
    %v2317 = vadd.f32 %v2232, %v2316
    %v2318 = vpop.f32.mrb[0].mxu0
    %2319 = vmatprep.mubr.f32.mxu0 0.0
    %2320 = vmatmul.mubr.f32.gmra.mrb[0].mxu0 %v2120
    %v2321 = vpop.f32.mrb[0].mxu0
    %v2322 = vadd.f32 %v2237, %v2321
    %v2323 = vpop.f32.mrb[0].mxu0
    %2324 = vdwg.mxu0
    %v2325 = vld [vmem:[#allocation4 + $0x17] ss:$0 sm:$0xff]
    %v2326 = vld [vmem:[#allocation4 + $0x20] ss:$0 sm:$0xff]
    %v2327 = vld [vmem:[#allocation4 + $0x21] ss:$0 sm:$0xff]
    %v2328 = vadd.f32 %v2307, %v2325
    %v2329 = vadd.f32 %v2312, %v2325
    %v2330 = vadd.f32 %v2317, %v2325
    %v2331 = vadd.f32 %v2322, %v2325
    %v2332 = vmul.f32 %v2328, 0.5
    %v2333 = vmul.f32 %v2329, 0.5
    %v2334 = vmul.f32 %v2330, 0.5
    %v2335 = vmul.f32 %v2331, 0.5
    %v2336 = vtanh.pop %v2332
    %v2337 = vtanh.pop %v2333
    %v2338 = vtanh.pop %v2334
    %v2339 = vtanh.pop %v2335
    %2340 = vmatprep.subr.mxu0 0.0
    %2341 = vmatpush1.msra.mxu0 %v2336
    %2342 = vmatprep.subr.mxu0 0.0
    %2343 = vmatpush1.msra.mxu0 %v2337
    %2344 = vmatprep.subr.mxu0 0.0
    %2345 = vmatpush1.msra.mxu0 %v2338
    %2346 = vmatprep.subr.mxu0 0.0
    %2347 = vmatpush1.msra.mxu0 %v2339
    %2348 = vmatprep.subr.mxu0 0.0
    %2349 = vmatpush1.msra.mxu0 0.0
    %2350 = vmatprep.subr.mxu0 0.0
    %2351 = vmatpush1.msra.mxu0 0.0
    %2352 = vmatprep.subr.mxu0 0.0
    %2353 = vmatpush1.msra.mxu0 0.0
    %2354 = vmatprep.subr.mxu0 0.0
    %2355 = vmatpush1.msra.mxu0 0.0
    %2356 = vmatprep.subr.mxu0 0.0
    %2357 = vmatpush1.msra.mxu0 0.0
    %2358 = vmatprep.subr.mxu0 0.0
    %2359 = vmatpush1.msra.mxu0 0.0
    %2360 = vmatprep.subr.mxu0 0.0
    %2361 = vmatpush1.msra.mxu0 0.0
    %2362 = vmatprep.subr.mxu0 0.0
    %2363 = vmatpush1.msra.mxu0 0.0
    %2364 = vmatprep.subr.mxu0 0.0
    %2365 = vmatpush1.msra.mxu0 0.0
    %2366 = vmatprep.subr.mxu0 0.0
    %2367 = vmatpush1.msra.mxu0 0.0
    %2368 = vmatprep.subr.mxu0 0.0
    %2369 = vmatpush1.msra.mxu0 0.0
    %2370 = vmatprep.subr.mxu0 0.0
    %2371 = vmatpush1.msra.mxu0 0.0
    %2372 = vmatprep.subr.mxu0 0.0
    %2373 = vmatpush1.msra.mxu0 0.0
    %2374 = vmatprep.subr.mxu0 0.0
    %2375 = vmatpush1.msra.mxu0 0.0
    %2376 = vmatprep.subr.mxu0 0.0
    %2377 = vmatpush1.msra.mxu0 0.0
    %2378 = vmatprep.subr.mxu0 0.0
    %2379 = vmatpush1.msra.mxu0 0.0
    %2380 = vmatprep.subr.mxu0 0.0
    %2381 = vmatpush1.msra.mxu0 0.0
    %2382 = vmatprep.subr.mxu0 0.0
    %2383 = vmatpush1.msra.mxu0 0.0
    %2384 = vmatprep.subr.mxu0 0.0
    %2385 = vmatpush1.msra.mxu0 0.0
    %2386 = vmatprep.subr.mxu0 0.0
    %2387 = vmatpush1.msra.mxu0 0.0
    %2388 = vmatprep.subr.mxu0 0.0
    %2389 = vmatpush1.msra.mxu0 0.0
    %2390 = vmatprep.subr.mxu0 0.0
    %2391 = vmatpush1.msra.mxu0 0.0
    %2392 = vmatprep.subr.mxu0 0.0
    %2393 = vmatpush1.msra.mxu0 0.0
    %2394 = vmatprep.subr.mxu0 0.0
    %2395 = vmatpush1.msra.mxu0 0.0
    %2396 = vmatprep.subr.mxu0 0.0
    %2397 = vmatpush1.msra.mxu0 0.0
    %2398 = vmatprep.subr.mxu0 0.0
    %2399 = vmatpush1.msra.mxu0 0.0
    %2400 = vmatprep.subr.mxu0 0.0
    %2401 = vmatpush1.msra.mxu0 0.0
    %2402 = vmatprep.subr.mxu0 0.0
    %2403 = vmatpush1.msra.mxu0 0.0
    %2404 = vmatprep.mubr.f32.mxu0 0.0
    %2405 = vmatmul.mubr.f32.gmra.mrb[0].mxu0 %v266
    %v2406 = vpop.f32.mrb[0].mxu0
    %v2407 = vadd.f32 0.0, %v2406
    %v2408 = vpop.f32.mrb[0].mxu0
    %2409 = vdwg.mxu0
    %v2410 = vmul.f32 %v2336, %v2336
    %v2411 = vmul.f32 %v2337, %v2337
    %v2412 = vmul.f32 %v2338, %v2338
    %v2413 = vmul.f32 %v2339, %v2339
    %2414 = vmatprep.subr.mxu0 0.0
    %2415 = vmatpush1.msra.mxu0 %v2410
    %2416 = vmatprep.subr.mxu0 0.0
    %2417 = vmatpush1.msra.mxu0 %v2411
    %2418 = vmatprep.subr.mxu0 0.0
    %2419 = vmatpush1.msra.mxu0 %v2412
    %2420 = vmatprep.subr.mxu0 0.0
    %2421 = vmatpush1.msra.mxu0 %v2413
    %2422 = vmatprep.subr.mxu0 0.0
    %2423 = vmatpush1.msra.mxu0 0.0
    %2424 = vmatprep.subr.mxu0 0.0
    %2425 = vmatpush1.msra.mxu0 0.0
    %2426 = vmatprep.subr.mxu0 0.0
    %2427 = vmatpush1.msra.mxu0 0.0
    %2428 = vmatprep.subr.mxu0 0.0
    %2429 = vmatpush1.msra.mxu0 0.0
    %2430 = vmatprep.subr.mxu0 0.0
    %2431 = vmatpush1.msra.mxu0 0.0
    %2432 = vmatprep.subr.mxu0 0.0
    %2433 = vmatpush1.msra.mxu0 0.0
    %2434 = vmatprep.subr.mxu0 0.0
    %2435 = vmatpush1.msra.mxu0 0.0
    %2436 = vmatprep.subr.mxu0 0.0
    %2437 = vmatpush1.msra.mxu0 0.0
    %2438 = vmatprep.subr.mxu0 0.0
    %2439 = vmatpush1.msra.mxu0 0.0
    %2440 = vmatprep.subr.mxu0 0.0
    %2441 = vmatpush1.msra.mxu0 0.0
    %2442 = vmatprep.subr.mxu0 0.0
    %2443 = vmatpush1.msra.mxu0 0.0
    %2444 = vmatprep.subr.mxu0 0.0
    %2445 = vmatpush1.msra.mxu0 0.0
    %2446 = vmatprep.subr.mxu0 0.0
    %2447 = vmatpush1.msra.mxu0 0.0
    %2448 = vmatprep.subr.mxu0 0.0
    %2449 = vmatpush1.msra.mxu0 0.0
    %2450 = vmatprep.subr.mxu0 0.0
    %2451 = vmatpush1.msra.mxu0 0.0
    %2452 = vmatprep.subr.mxu0 0.0
    %2453 = vmatpush1.msra.mxu0 0.0
    %2454 = vmatprep.subr.mxu0 0.0
    %2455 = vmatpush1.msra.mxu0 0.0
    %2456 = vmatprep.subr.mxu0 0.0
    %2457 = vmatpush1.msra.mxu0 0.0
    %2458 = vmatprep.subr.mxu0 0.0
    %2459 = vmatpush1.msra.mxu0 0.0
    %2460 = vmatprep.subr.mxu0 0.0
    %2461 = vmatpush1.msra.mxu0 0.0
    %2462 = vmatprep.subr.mxu0 0.0
    %2463 = vmatpush1.msra.mxu0 0.0
    %2464 = vmatprep.subr.mxu0 0.0
    %2465 = vmatpush1.msra.mxu0 0.0
    %2466 = vmatprep.subr.mxu0 0.0
    %2467 = vmatpush1.msra.mxu0 0.0
    %2468 = vmatprep.subr.mxu0 0.0
    %2469 = vmatpush1.msra.mxu0 0.0
    %2470 = vmatprep.subr.mxu0 0.0
    %2471 = vmatpush1.msra.mxu0 0.0
    %2472 = vmatprep.subr.mxu0 0.0
    %2473 = vmatpush1.msra.mxu0 0.0
    %2474 = vmatprep.subr.mxu0 0.0
    %2475 = vmatpush1.msra.mxu0 0.0
    %2476 = vmatprep.subr.mxu0 0.0
    %2477 = vmatpush1.msra.mxu0 0.0
    %2478 = vmatprep.mubr.f32.mxu0 0.0
    %2479 = vmatmul.mubr.f32.gmra.mrb[0].mxu0 %v266
    %v2480 = vpop.f32.mrb[0].mxu0
    %v2481 = vadd.f32 0.0, %v2480
    %v2482 = vpop.f32.mrb[0].mxu0
    %2483 = vdwg.mxu0
    %v2484 = vmul.f32 %v2407, 0.03125
    %v2485 = vmul.f32 %v2481, 0.03125
    %v2486 = vmul.f32 %v2484, %v2484
    %v2487 = vsub.f32 %v2485, %v2486
    %v2488 = vadd.f32 %v2487, 4e-05
    %v2489 = vrsqrt.pop %v2488
    %v2490 = vmul.f32 %v2326, %v2489
    %v2491 = vmul.f32 %v2484, %v2490
    %v2492 = vsub.f32 %v2327, %v2491
    %v2493 = vlaneseq
    %v2494 = vshrl.u32 %v2493, 7
    %v2495 = vsub.s32 0, %v2494
    %v2496 = vrot.slane %v2490, %v2495
    %v2497 = vmul.f32 %v2336, %v2496
    %v2498 = vmul.f32 %v2337, %v2496
    %v2499 = vmul.f32 %v2338, %v2496
    %v2500 = vmul.f32 %v2339, %v2496
    %v2501 = vlaneseq
    %v2502 = vshrl.u32 %v2501, 7
    %v2503 = vsub.s32 0, %v2502
    %v2504 = vrot.slane %v2492, %v2503
    %v2505 = vadd.f32 %v2497, %v2504
    %v2506 = vadd.f32 %v2498, %v2504
    %v2507 = vadd.f32 %v2499, %v2504
    %v2508 = vadd.f32 %v2500, %v2504
    %2509 = vmatprep.subr.mxu0 0.0
    %2510 = vmatpush1.msra.mxu0 %v2505
    %2511 = vmatprep.subr.mxu0 0.0
    %2512 = vmatpush1.msra.mxu0 %v2506
    %2513 = vmatprep.subr.mxu0 0.0
    %2514 = vmatpush1.msra.mxu0 %v2507
    %2515 = vmatprep.subr.mxu0 0.0
    %2516 = vmatpush1.msra.mxu0 %v2508
    %2517 = vmatprep.subr.mxu0 0.0
    %2518 = vmatpush1.msra.mxu0 0.0
    %2519 = vmatprep.subr.mxu0 0.0
    %2520 = vmatpush1.msra.mxu0 0.0
    %2521 = vmatprep.subr.mxu0 0.0
    %2522 = vmatpush1.msra.mxu0 0.0
    %2523 = vmatprep.subr.mxu0 0.0
    %2524 = vmatpush1.msra.mxu0 0.0
    %2525 = vmatprep.subr.mxu0 0.0
    %2526 = vmatpush1.msra.mxu0 0.0
    %2527 = vmatprep.subr.mxu0 0.0
    %2528 = vmatpush1.msra.mxu0 0.0
    %2529 = vmatprep.subr.mxu0 0.0
    %2530 = vmatpush1.msra.mxu0 0.0
    %2531 = vmatprep.subr.mxu0 0.0
    %2532 = vmatpush1.msra.mxu0 0.0
    %2533 = vmatprep.subr.mxu0 0.0
    %2534 = vmatpush1.msra.mxu0 0.0
    %2535 = vmatprep.subr.mxu0 0.0
    %2536 = vmatpush1.msra.mxu0 0.0
    %2537 = vmatprep.subr.mxu0 0.0
    %2538 = vmatpush1.msra.mxu0 0.0
    %2539 = vmatprep.subr.mxu0 0.0
    %2540 = vmatpush1.msra.mxu0 0.0
    %2541 = vmatprep.subr.mxu0 0.0
    %2542 = vmatpush1.msra.mxu0 0.0
    %2543 = vmatprep.subr.mxu0 0.0
    %2544 = vmatpush1.msra.mxu0 0.0
    %2545 = vmatprep.subr.mxu0 0.0
    %2546 = vmatpush1.msra.mxu0 0.0
    %2547 = vmatprep.subr.mxu0 0.0
    %2548 = vmatpush1.msra.mxu0 0.0
    %2549 = vmatprep.subr.mxu0 0.0
    %2550 = vmatpush1.msra.mxu0 0.0
    %2551 = vmatprep.subr.mxu0 0.0
    %2552 = vmatpush1.msra.mxu0 0.0
    %2553 = vmatprep.subr.mxu0 0.0
    %2554 = vmatpush1.msra.mxu0 0.0
    %2555 = vmatprep.subr.mxu0 0.0
    %2556 = vmatpush1.msra.mxu0 0.0
    %2557 = vmatprep.subr.mxu0 0.0
    %2558 = vmatpush1.msra.mxu0 0.0
    %2559 = vmatprep.subr.mxu0 0.0
    %2560 = vmatpush1.msra.mxu0 0.0
    %2561 = vmatprep.subr.mxu0 0.0
    %2562 = vmatpush1.msra.mxu0 0.0
    %2563 = vmatprep.subr.mxu0 0.0
    %2564 = vmatpush1.msra.mxu0 0.0
    %2565 = vmatprep.subr.mxu0 0.0
    %2566 = vmatpush1.msra.mxu0 0.0
    %2567 = vmatprep.subr.mxu0 0.0
    %2568 = vmatpush1.msra.mxu0 0.0
    %2569 = vmatprep.subr.mxu0 0.0
    %2570 = vmatpush1.msra.mxu0 0.0
    %2571 = vmatprep.subr.mxu0 0.0
    %2572 = vmatpush1.msra.mxu0 0.0
    %2573 = vmatprep.mubr.f32.mxu0 0.0
    %2574 = vmatmul.mubr.f32.gmra.mrb[0].mxu0 %v55
    %v2575 = vpop.f32.mrb[0].mxu0
    %v2576 = vadd.f32 0.0, %v2575
    %v2577 = vpop.f32.mrb[0].mxu0
    %2578 = vmatprep.mubr.f32.mxu0 0.0
    %2579 = vmatmul.mubr.f32.gmra.mrb[0].mxu0 %v58
    %v2580 = vpop.f32.mrb[0].mxu0
    %v2581 = vadd.f32 0.0, %v2580
    %v2582 = vpop.f32.mrb[0].mxu0
    %2583 = vmatprep.mubr.f32.mxu0 0.0
    %2584 = vmatmul.mubr.f32.gmra.mrb[0].mxu0 %v61
    %v2585 = vpop.f32.mrb[0].mxu0
    %v2586 = vadd.f32 0.0, %v2585
    %v2587 = vpop.f32.mrb[0].mxu0
    %2588 = vmatprep.mubr.f32.mxu0 0.0
    %2589 = vmatmul.mubr.f32.gmra.mrb[0].mxu0 %v64
    %v2590 = vpop.f32.mrb[0].mxu0
    %v2591 = vadd.f32 0.0, %v2590
    %v2592 = vpop.f32.mrb[0].mxu0
    %2593 = vdwg.mxu0
    %v2594 = vld [vmem:[#allocation2 + $0x5b0] sm:$0xff]
    %v2595 = vld [vmem:[#allocation2 + $0x5c0] sm:$0xff]
    %v2596 = vld [vmem:[#allocation2 + $0x5d0] sm:$0xff]
    %v2597 = vld [vmem:[#allocation2 + $0x5e0] sm:$0xff]
    %v2598 = vld [vmem:[#allocation2 + $0x5f0] sm:$0xff]
    %v2599 = vld [vmem:[#allocation2 + $0x600] sm:$0xff]
    %v2600 = vld [vmem:[#allocation2 + $0x610] sm:$0xff]
    %v2601 = vld [vmem:[#allocation2 + $0x620] sm:$0xff]
    %v2602 = vld [vmem:[#allocation2 + $0x630] sm:$0xff]
    %v2603 = vld [vmem:[#allocation2 + $0x640] sm:$0xff]
    %v2604 = vld [vmem:[#allocation2 + $0x650] sm:$0xff]
    %v2605 = vld [vmem:[#allocation2 + $0x660] sm:$0xff]
    %v2606 = vld [vmem:[#allocation2 + $0x670] sm:$0xff]
    %v2607 = vld [vmem:[#allocation2 + $0x680] sm:$0xff]
    %v2608 = vld [vmem:[#allocation2 + $0x690] sm:$0xff]
    %v2609 = vld [vmem:[#allocation2 + $0x6a0] sm:$0xff]
    %2610 = vmatprep.subr.mxu0 0.0
    %2611 = vmatpush1.msra.mxu0 %v2602
    %2612 = vmatprep.subr.mxu0 0.0
    %2613 = vmatpush1.msra.mxu0 %v2603
    %2614 = vmatprep.subr.mxu0 0.0
    %2615 = vmatpush1.msra.mxu0 %v2604
    %2616 = vmatprep.subr.mxu0 0.0
    %2617 = vmatpush1.msra.mxu0 %v2605
    %2618 = vmatprep.subr.mxu0 0.0
    %2619 = vmatpush1.msra.mxu0 %v2606
    %2620 = vmatprep.subr.mxu0 0.0
    %2621 = vmatpush1.msra.mxu0 %v2607
    %2622 = vmatprep.subr.mxu0 0.0
    %2623 = vmatpush1.msra.mxu0 %v2608
    %2624 = vmatprep.subr.mxu0 0.0
    %2625 = vmatpush1.msra.mxu0 %v2609
    %2626 = vmatprep.subr.mxu0 0.0
    %2627 = vmatpush1.msra.mxu0 0.0
    %2628 = vmatprep.subr.mxu0 0.0
    %2629 = vmatpush1.msra.mxu0 0.0
    %2630 = vmatprep.subr.mxu0 0.0
    %2631 = vmatpush1.msra.mxu0 0.0
    %2632 = vmatprep.subr.mxu0 0.0
    %2633 = vmatpush1.msra.mxu0 0.0
    %2634 = vmatprep.subr.mxu0 0.0
    %2635 = vmatpush1.msra.mxu0 0.0
    %2636 = vmatprep.subr.mxu0 0.0
    %2637 = vmatpush1.msra.mxu0 0.0
    %2638 = vmatprep.subr.mxu0 0.0
    %2639 = vmatpush1.msra.mxu0 0.0
    %2640 = vmatprep.subr.mxu0 0.0
    %2641 = vmatpush1.msra.mxu0 0.0
    %2642 = vmatprep.subr.mxu0 0.0
    %2643 = vmatpush1.msra.mxu0 0.0
    %2644 = vmatprep.subr.mxu0 0.0
    %2645 = vmatpush1.msra.mxu0 0.0
    %2646 = vmatprep.subr.mxu0 0.0
    %2647 = vmatpush1.msra.mxu0 0.0
    %2648 = vmatprep.subr.mxu0 0.0
    %2649 = vmatpush1.msra.mxu0 0.0
    %2650 = vmatprep.subr.mxu0 0.0
    %2651 = vmatpush1.msra.mxu0 0.0
    %2652 = vmatprep.subr.mxu0 0.0
    %2653 = vmatpush1.msra.mxu0 0.0
    %2654 = vmatprep.subr.mxu0 0.0
    %2655 = vmatpush1.msra.mxu0 0.0
    %2656 = vmatprep.subr.mxu0 0.0
    %2657 = vmatpush1.msra.mxu0 0.0
    %2658 = vmatprep.subr.mxu0 0.0
    %2659 = vmatpush1.msra.mxu0 0.0
    %2660 = vmatprep.subr.mxu0 0.0
    %2661 = vmatpush1.msra.mxu0 0.0
    %2662 = vmatprep.subr.mxu0 0.0
    %2663 = vmatpush1.msra.mxu0 0.0
    %2664 = vmatprep.subr.mxu0 0.0
    %2665 = vmatpush1.msra.mxu0 0.0
    %2666 = vmatprep.subr.mxu0 0.0
    %2667 = vmatpush1.msra.mxu0 0.0
    %2668 = vmatprep.subr.mxu0 0.0
    %2669 = vmatpush1.msra.mxu0 0.0
    %2670 = vmatprep.subr.mxu0 0.0
    %2671 = vmatpush1.msra.mxu0 0.0
    %2672 = vmatprep.subr.mxu0 0.0
    %2673 = vmatpush1.msra.mxu0 0.0
    %2674 = vmatprep.mubr.f32.mxu0 0.0
    %2675 = vmatmul.mubr.f32.gmra.mrb[0].mxu0 %v900
    %v2676 = vpop.f32.mrb[0].mxu0
    %v2677 = vadd.f32 0.0, %v2676
    %v2678 = vpop.f32.mrb[0].mxu0
    %2679 = vmatprep.mubr.f32.mxu0 0.0
    %2680 = vmatmul.mubr.f32.gmra.mrb[0].mxu0 %v903
    %v2681 = vpop.f32.mrb[0].mxu0
    %v2682 = vadd.f32 0.0, %v2681
    %v2683 = vpop.f32.mrb[0].mxu0
    %2684 = vmatprep.mubr.f32.mxu0 0.0
    %2685 = vmatmul.mubr.f32.gmra.mrb[0].mxu0 %v906
    %v2686 = vpop.f32.mrb[0].mxu0
    %v2687 = vadd.f32 0.0, %v2686
    %v2688 = vpop.f32.mrb[0].mxu0
    %2689 = vmatprep.mubr.f32.mxu0 0.0
    %2690 = vmatmul.mubr.f32.gmra.mrb[0].mxu0 %v909
    %v2691 = vpop.f32.mrb[0].mxu0
    %v2692 = vadd.f32 0.0, %v2691
    %v2693 = vpop.f32.mrb[0].mxu0
    %2694 = vdwg.mxu0
    %v2696 = vsel %vm898, %v2576, 0
    %v2699 = vsel %vm898, %v2581, 0
    %v2702 = vsel %vm898, %v2586, 0
    %v2705 = vsel %vm898, %v2591, 0
    %2707 = vmatprep.subr.mxu0 0.0
    %2708 = vmatpush1.msra.mxu0 %v2594
    %2709 = vmatprep.subr.mxu0 0.0
    %2710 = vmatpush1.msra.mxu0 %v2595
    %2711 = vmatprep.subr.mxu0 0.0
    %2712 = vmatpush1.msra.mxu0 %v2596
    %2713 = vmatprep.subr.mxu0 0.0
    %2714 = vmatpush1.msra.mxu0 %v2597
    %2715 = vmatprep.subr.mxu0 0.0
    %2716 = vmatpush1.msra.mxu0 %v2598
    %2717 = vmatprep.subr.mxu0 0.0
    %2718 = vmatpush1.msra.mxu0 %v2599
    %2719 = vmatprep.subr.mxu0 0.0
    %2720 = vmatpush1.msra.mxu0 %v2600
    %2721 = vmatprep.subr.mxu0 0.0
    %2722 = vmatpush1.msra.mxu0 %v2601
    %2723 = vmatprep.subr.mxu0 0.0
    %2724 = vmatpush1.msra.mxu0 0.0
    %2725 = vmatprep.subr.mxu0 0.0
    %2726 = vmatpush1.msra.mxu0 0.0
    %2727 = vmatprep.subr.mxu0 0.0
    %2728 = vmatpush1.msra.mxu0 0.0
    %2729 = vmatprep.subr.mxu0 0.0
    %2730 = vmatpush1.msra.mxu0 0.0
    %2731 = vmatprep.subr.mxu0 0.0
    %2732 = vmatpush1.msra.mxu0 0.0
    %2733 = vmatprep.subr.mxu0 0.0
    %2734 = vmatpush1.msra.mxu0 0.0
    %2735 = vmatprep.subr.mxu0 0.0
    %2736 = vmatpush1.msra.mxu0 0.0
    %2737 = vmatprep.subr.mxu0 0.0
    %2738 = vmatpush1.msra.mxu0 0.0
    %2739 = vmatprep.subr.mxu0 0.0
    %2740 = vmatpush1.msra.mxu0 0.0
    %2741 = vmatprep.subr.mxu0 0.0
    %2742 = vmatpush1.msra.mxu0 0.0
    %2743 = vmatprep.subr.mxu0 0.0
    %2744 = vmatpush1.msra.mxu0 0.0
    %2745 = vmatprep.subr.mxu0 0.0
    %2746 = vmatpush1.msra.mxu0 0.0
    %2747 = vmatprep.subr.mxu0 0.0
    %2748 = vmatpush1.msra.mxu0 0.0
    %2749 = vmatprep.subr.mxu0 0.0
    %2750 = vmatpush1.msra.mxu0 0.0
    %2751 = vmatprep.subr.mxu0 0.0
    %2752 = vmatpush1.msra.mxu0 0.0
    %2753 = vmatprep.subr.mxu0 0.0
    %2754 = vmatpush1.msra.mxu0 0.0
    %2755 = vmatprep.subr.mxu0 0.0
    %2756 = vmatpush1.msra.mxu0 0.0
    %2757 = vmatprep.subr.mxu0 0.0
    %2758 = vmatpush1.msra.mxu0 0.0
    %2759 = vmatprep.subr.mxu0 0.0
    %2760 = vmatpush1.msra.mxu0 0.0
    %2761 = vmatprep.subr.mxu0 0.0
    %2762 = vmatpush1.msra.mxu0 0.0
    %2763 = vmatprep.subr.mxu0 0.0
    %2764 = vmatpush1.msra.mxu0 0.0
    %2765 = vmatprep.subr.mxu0 0.0
    %2766 = vmatpush1.msra.mxu0 0.0
    %2767 = vmatprep.subr.mxu0 0.0
    %2768 = vmatpush1.msra.mxu0 0.0
    %2769 = vmatprep.subr.mxu0 0.0
    %2770 = vmatpush1.msra.mxu0 0.0
    %2771 = vmatprep.mubr.f32.mxu0 0.0
    %2772 = vmatmul.mubr.f32.gmra.mrb[0].mxu0 %v2696
    %v2773 = vpop.f32.mrb[0].mxu0
    %v2774 = vadd.f32 %v2677, %v2773
    %v2775 = vpop.f32.mrb[0].mxu0
    %2776 = vmatprep.mubr.f32.mxu0 0.0
    %2777 = vmatmul.mubr.f32.gmra.mrb[0].mxu0 %v2699
    %v2778 = vpop.f32.mrb[0].mxu0
    %v2779 = vadd.f32 %v2682, %v2778
    %v2780 = vpop.f32.mrb[0].mxu0
    %2781 = vmatprep.mubr.f32.mxu0 0.0
    %2782 = vmatmul.mubr.f32.gmra.mrb[0].mxu0 %v2702
    %v2783 = vpop.f32.mrb[0].mxu0
    %v2784 = vadd.f32 %v2687, %v2783
    %v2785 = vpop.f32.mrb[0].mxu0
    %2786 = vmatprep.mubr.f32.mxu0 0.0
    %2787 = vmatmul.mubr.f32.gmra.mrb[0].mxu0 %v2705
    %v2788 = vpop.f32.mrb[0].mxu0
    %v2789 = vadd.f32 %v2692, %v2788
    %v2790 = vpop.f32.mrb[0].mxu0
    %2791 = vdwg.mxu0
    %v2792 = vld [vmem:[#allocation4 + $0x22] ss:$0 sm:$0xff]
    %v2793 = vld [vmem:[#allocation4 + $0x23] ss:$0 sm:$0xff]
    %v2794 = vld [vmem:[#allocation4 + $0x24] ss:$0 sm:$0xff]
    %v2795 = vadd.f32 %v2774, %v2792
    %v2796 = vadd.f32 %v2779, %v2792
    %v2797 = vadd.f32 %v2784, %v2792
    %v2798 = vadd.f32 %v2789, %v2792
    %v2799 = vmul.f32 %v2795, 0.5
    %v2800 = vmul.f32 %v2796, 0.5
    %v2801 = vmul.f32 %v2797, 0.5
    %v2802 = vmul.f32 %v2798, 0.5
    %v2803 = vtanh.pop %v2799
    %v2804 = vtanh.pop %v2800
    %v2805 = vtanh.pop %v2801
    %v2806 = vtanh.pop %v2802
    %2807 = vmatprep.subr.mxu0 0.0
    %2808 = vmatpush1.msra.mxu0 %v2803
    %2809 = vmatprep.subr.mxu0 0.0
    %2810 = vmatpush1.msra.mxu0 %v2804
    %2811 = vmatprep.subr.mxu0 0.0
    %2812 = vmatpush1.msra.mxu0 %v2805
    %2813 = vmatprep.subr.mxu0 0.0
    %2814 = vmatpush1.msra.mxu0 %v2806
    %2815 = vmatprep.subr.mxu0 0.0
    %2816 = vmatpush1.msra.mxu0 0.0
    %2817 = vmatprep.subr.mxu0 0.0
    %2818 = vmatpush1.msra.mxu0 0.0
    %2819 = vmatprep.subr.mxu0 0.0
    %2820 = vmatpush1.msra.mxu0 0.0
    %2821 = vmatprep.subr.mxu0 0.0
    %2822 = vmatpush1.msra.mxu0 0.0
    %2823 = vmatprep.subr.mxu0 0.0
    %2824 = vmatpush1.msra.mxu0 0.0
    %2825 = vmatprep.subr.mxu0 0.0
    %2826 = vmatpush1.msra.mxu0 0.0
    %2827 = vmatprep.subr.mxu0 0.0
    %2828 = vmatpush1.msra.mxu0 0.0
    %2829 = vmatprep.subr.mxu0 0.0
    %2830 = vmatpush1.msra.mxu0 0.0
    %2831 = vmatprep.subr.mxu0 0.0
    %2832 = vmatpush1.msra.mxu0 0.0
    %2833 = vmatprep.subr.mxu0 0.0
    %2834 = vmatpush1.msra.mxu0 0.0
    %2835 = vmatprep.subr.mxu0 0.0
    %2836 = vmatpush1.msra.mxu0 0.0
    %2837 = vmatprep.subr.mxu0 0.0
    %2838 = vmatpush1.msra.mxu0 0.0
    %2839 = vmatprep.subr.mxu0 0.0
    %2840 = vmatpush1.msra.mxu0 0.0
    %2841 = vmatprep.subr.mxu0 0.0
    %2842 = vmatpush1.msra.mxu0 0.0
    %2843 = vmatprep.subr.mxu0 0.0
    %2844 = vmatpush1.msra.mxu0 0.0
    %2845 = vmatprep.subr.mxu0 0.0
    %2846 = vmatpush1.msra.mxu0 0.0
    %2847 = vmatprep.subr.mxu0 0.0
    %2848 = vmatpush1.msra.mxu0 0.0
    %2849 = vmatprep.subr.mxu0 0.0
    %2850 = vmatpush1.msra.mxu0 0.0
    %2851 = vmatprep.subr.mxu0 0.0
    %2852 = vmatpush1.msra.mxu0 0.0
    %2853 = vmatprep.subr.mxu0 0.0
    %2854 = vmatpush1.msra.mxu0 0.0
    %2855 = vmatprep.subr.mxu0 0.0
    %2856 = vmatpush1.msra.mxu0 0.0
    %2857 = vmatprep.subr.mxu0 0.0
    %2858 = vmatpush1.msra.mxu0 0.0
    %2859 = vmatprep.subr.mxu0 0.0
    %2860 = vmatpush1.msra.mxu0 0.0
    %2861 = vmatprep.subr.mxu0 0.0
    %2862 = vmatpush1.msra.mxu0 0.0
    %2863 = vmatprep.subr.mxu0 0.0
    %2864 = vmatpush1.msra.mxu0 0.0
    %2865 = vmatprep.subr.mxu0 0.0
    %2866 = vmatpush1.msra.mxu0 0.0
    %2867 = vmatprep.subr.mxu0 0.0
    %2868 = vmatpush1.msra.mxu0 0.0
    %2869 = vmatprep.subr.mxu0 0.0
    %2870 = vmatpush1.msra.mxu0 0.0
    %2871 = vmatprep.mubr.f32.mxu0 0.0
    %2872 = vmatmul.mubr.f32.gmra.mrb[0].mxu0 %v266
    %v2873 = vpop.f32.mrb[0].mxu0
    %v2874 = vadd.f32 0.0, %v2873
    %v2875 = vpop.f32.mrb[0].mxu0
    %2876 = vdwg.mxu0
    %v2877 = vmul.f32 %v2803, %v2803
    %v2878 = vmul.f32 %v2804, %v2804
    %v2879 = vmul.f32 %v2805, %v2805
    %v2880 = vmul.f32 %v2806, %v2806
    %2881 = vmatprep.subr.mxu0 0.0
    %2882 = vmatpush1.msra.mxu0 %v2877
    %2883 = vmatprep.subr.mxu0 0.0
    %2884 = vmatpush1.msra.mxu0 %v2878
    %2885 = vmatprep.subr.mxu0 0.0
    %2886 = vmatpush1.msra.mxu0 %v2879
    %2887 = vmatprep.subr.mxu0 0.0
    %2888 = vmatpush1.msra.mxu0 %v2880
    %2889 = vmatprep.subr.mxu0 0.0
    %2890 = vmatpush1.msra.mxu0 0.0
    %2891 = vmatprep.subr.mxu0 0.0
    %2892 = vmatpush1.msra.mxu0 0.0
    %2893 = vmatprep.subr.mxu0 0.0
    %2894 = vmatpush1.msra.mxu0 0.0
    %2895 = vmatprep.subr.mxu0 0.0
    %2896 = vmatpush1.msra.mxu0 0.0
    %2897 = vmatprep.subr.mxu0 0.0
    %2898 = vmatpush1.msra.mxu0 0.0
    %2899 = vmatprep.subr.mxu0 0.0
    %2900 = vmatpush1.msra.mxu0 0.0
    %2901 = vmatprep.subr.mxu0 0.0
    %2902 = vmatpush1.msra.mxu0 0.0
    %2903 = vmatprep.subr.mxu0 0.0
    %2904 = vmatpush1.msra.mxu0 0.0
    %2905 = vmatprep.subr.mxu0 0.0
    %2906 = vmatpush1.msra.mxu0 0.0
    %2907 = vmatprep.subr.mxu0 0.0
    %2908 = vmatpush1.msra.mxu0 0.0
    %2909 = vmatprep.subr.mxu0 0.0
    %2910 = vmatpush1.msra.mxu0 0.0
    %2911 = vmatprep.subr.mxu0 0.0
    %2912 = vmatpush1.msra.mxu0 0.0
    %2913 = vmatprep.subr.mxu0 0.0
    %2914 = vmatpush1.msra.mxu0 0.0
    %2915 = vmatprep.subr.mxu0 0.0
    %2916 = vmatpush1.msra.mxu0 0.0
    %2917 = vmatprep.subr.mxu0 0.0
    %2918 = vmatpush1.msra.mxu0 0.0
    %2919 = vmatprep.subr.mxu0 0.0
    %2920 = vmatpush1.msra.mxu0 0.0
    %2921 = vmatprep.subr.mxu0 0.0
    %2922 = vmatpush1.msra.mxu0 0.0
    %2923 = vmatprep.subr.mxu0 0.0
    %2924 = vmatpush1.msra.mxu0 0.0
    %2925 = vmatprep.subr.mxu0 0.0
    %2926 = vmatpush1.msra.mxu0 0.0
    %2927 = vmatprep.subr.mxu0 0.0
    %2928 = vmatpush1.msra.mxu0 0.0
    %2929 = vmatprep.subr.mxu0 0.0
    %2930 = vmatpush1.msra.mxu0 0.0
    %2931 = vmatprep.subr.mxu0 0.0
    %2932 = vmatpush1.msra.mxu0 0.0
    %2933 = vmatprep.subr.mxu0 0.0
    %2934 = vmatpush1.msra.mxu0 0.0
    %2935 = vmatprep.subr.mxu0 0.0
    %2936 = vmatpush1.msra.mxu0 0.0
    %2937 = vmatprep.subr.mxu0 0.0
    %2938 = vmatpush1.msra.mxu0 0.0
    %2939 = vmatprep.subr.mxu0 0.0
    %2940 = vmatpush1.msra.mxu0 0.0
    %2941 = vmatprep.subr.mxu0 0.0
    %2942 = vmatpush1.msra.mxu0 0.0
    %2943 = vmatprep.subr.mxu0 0.0
    %2944 = vmatpush1.msra.mxu0 0.0
    %2945 = vmatprep.mubr.f32.mxu0 0.0
    %2946 = vmatmul.mubr.f32.gmra.mrb[0].mxu0 %v266
    %v2947 = vpop.f32.mrb[0].mxu0
    %v2948 = vadd.f32 0.0, %v2947
    %v2949 = vpop.f32.mrb[0].mxu0
    %2950 = vdwg.mxu0
    %v2951 = vmul.f32 %v2874, 0.03125
    %v2952 = vmul.f32 %v2948, 0.03125
    %v2953 = vmul.f32 %v2951, %v2951
    %v2954 = vsub.f32 %v2952, %v2953
    %v2955 = vadd.f32 %v2954, 4e-05
    %v2956 = vrsqrt.pop %v2955
    %v2957 = vmul.f32 %v2793, %v2956
    %v2958 = vmul.f32 %v2951, %v2957
    %v2959 = vsub.f32 %v2794, %v2958
    %v2960 = vlaneseq
    %v2961 = vshrl.u32 %v2960, 7
    %v2962 = vsub.s32 0, %v2961
    %v2963 = vrot.slane %v2957, %v2962
    %v2964 = vmul.f32 %v2803, %v2963
    %v2965 = vmul.f32 %v2804, %v2963
    %v2966 = vmul.f32 %v2805, %v2963
    %v2967 = vmul.f32 %v2806, %v2963
    %v2968 = vlaneseq
    %v2969 = vshrl.u32 %v2968, 7
    %v2970 = vsub.s32 0, %v2969
    %v2971 = vrot.slane %v2959, %v2970
    %v2972 = vadd.f32 %v2964, %v2971
    %v2973 = vadd.f32 %v2965, %v2971
    %v2974 = vadd.f32 %v2966, %v2971
    %v2975 = vadd.f32 %v2967, %v2971
    %2976 = vmatprep.subr.mxu0 0.0
    %2977 = vmatpush1.msra.mxu0 %v2972
    %2978 = vmatprep.subr.mxu0 0.0
    %2979 = vmatpush1.msra.mxu0 %v2973
    %2980 = vmatprep.subr.mxu0 0.0
    %2981 = vmatpush1.msra.mxu0 %v2974
    %2982 = vmatprep.subr.mxu0 0.0
    %2983 = vmatpush1.msra.mxu0 %v2975
    %2984 = vmatprep.subr.mxu0 0.0
    %2985 = vmatpush1.msra.mxu0 0.0
    %2986 = vmatprep.subr.mxu0 0.0
    %2987 = vmatpush1.msra.mxu0 0.0
    %2988 = vmatprep.subr.mxu0 0.0
    %2989 = vmatpush1.msra.mxu0 0.0
    %2990 = vmatprep.subr.mxu0 0.0
    %2991 = vmatpush1.msra.mxu0 0.0
    %2992 = vmatprep.subr.mxu0 0.0
    %2993 = vmatpush1.msra.mxu0 0.0
    %2994 = vmatprep.subr.mxu0 0.0
    %2995 = vmatpush1.msra.mxu0 0.0
    %2996 = vmatprep.subr.mxu0 0.0
    %2997 = vmatpush1.msra.mxu0 0.0
    %2998 = vmatprep.subr.mxu0 0.0
    %2999 = vmatpush1.msra.mxu0 0.0
    %3000 = vmatprep.subr.mxu0 0.0
    %3001 = vmatpush1.msra.mxu0 0.0
    %3002 = vmatprep.subr.mxu0 0.0
    %3003 = vmatpush1.msra.mxu0 0.0
    %3004 = vmatprep.subr.mxu0 0.0
    %3005 = vmatpush1.msra.mxu0 0.0
    %3006 = vmatprep.subr.mxu0 0.0
    %3007 = vmatpush1.msra.mxu0 0.0
    %3008 = vmatprep.subr.mxu0 0.0
    %3009 = vmatpush1.msra.mxu0 0.0
    %3010 = vmatprep.subr.mxu0 0.0
    %3011 = vmatpush1.msra.mxu0 0.0
    %3012 = vmatprep.subr.mxu0 0.0
    %3013 = vmatpush1.msra.mxu0 0.0
    %3014 = vmatprep.subr.mxu0 0.0
    %3015 = vmatpush1.msra.mxu0 0.0
    %3016 = vmatprep.subr.mxu0 0.0
    %3017 = vmatpush1.msra.mxu0 0.0
    %3018 = vmatprep.subr.mxu0 0.0
    %3019 = vmatpush1.msra.mxu0 0.0
    %3020 = vmatprep.subr.mxu0 0.0
    %3021 = vmatpush1.msra.mxu0 0.0
    %3022 = vmatprep.subr.mxu0 0.0
    %3023 = vmatpush1.msra.mxu0 0.0
    %3024 = vmatprep.subr.mxu0 0.0
    %3025 = vmatpush1.msra.mxu0 0.0
    %3026 = vmatprep.subr.mxu0 0.0
    %3027 = vmatpush1.msra.mxu0 0.0
    %3028 = vmatprep.subr.mxu0 0.0
    %3029 = vmatpush1.msra.mxu0 0.0
    %3030 = vmatprep.subr.mxu0 0.0
    %3031 = vmatpush1.msra.mxu0 0.0
    %3032 = vmatprep.subr.mxu0 0.0
    %3033 = vmatpush1.msra.mxu0 0.0
    %3034 = vmatprep.subr.mxu0 0.0
    %3035 = vmatpush1.msra.mxu0 0.0
    %3036 = vmatprep.subr.mxu0 0.0
    %3037 = vmatpush1.msra.mxu0 0.0
    %3038 = vmatprep.subr.mxu0 0.0
    %3039 = vmatpush1.msra.mxu0 0.0
    %3040 = vmatprep.mubr.f32.mxu0 0.0
    %3041 = vmatmul.mubr.f32.gmra.mrb[0].mxu0 %v55
    %v3042 = vpop.f32.mrb[0].mxu0
    %v3043 = vadd.f32 0.0, %v3042
    %v3044 = vpop.f32.mrb[0].mxu0
    %3045 = vmatprep.mubr.f32.mxu0 0.0
    %3046 = vmatmul.mubr.f32.gmra.mrb[0].mxu0 %v58
    %v3047 = vpop.f32.mrb[0].mxu0
    %v3048 = vadd.f32 0.0, %v3047
    %v3049 = vpop.f32.mrb[0].mxu0
    %3050 = vmatprep.mubr.f32.mxu0 0.0
    %3051 = vmatmul.mubr.f32.gmra.mrb[0].mxu0 %v61
    %v3052 = vpop.f32.mrb[0].mxu0
    %v3053 = vadd.f32 0.0, %v3052
    %v3054 = vpop.f32.mrb[0].mxu0
    %3055 = vmatprep.mubr.f32.mxu0 0.0
    %3056 = vmatmul.mubr.f32.gmra.mrb[0].mxu0 %v64
    %v3057 = vpop.f32.mrb[0].mxu0
    %v3058 = vadd.f32 0.0, %v3057
    %v3059 = vpop.f32.mrb[0].mxu0
    %3060 = vdwg.mxu0
    %v3061 = vld [vmem:[#allocation2 + $0x6b0] sm:$0xff]
    %v3062 = vld [vmem:[#allocation2 + $0x6c0] sm:$0xff]
    %v3063 = vld [vmem:[#allocation2 + $0x6d0] sm:$0xff]
    %v3064 = vld [vmem:[#allocation2 + $0x6e0] sm:$0xff]
    %3065 = vmatprep.subr.mxu0 0.0
    %3066 = vmatpush1.msra.mxu0 %v3063
    %3067 = vmatprep.subr.mxu0 0.0
    %3068 = vmatpush1.msra.mxu0 %v3064
    %3069 = vmatprep.subr.mxu0 0.0
    %3070 = vmatpush1.msra.mxu0 0.0
    %3071 = vmatprep.subr.mxu0 0.0
    %3072 = vmatpush1.msra.mxu0 0.0
    %3073 = vmatprep.subr.mxu0 0.0
    %3074 = vmatpush1.msra.mxu0 0.0
    %3075 = vmatprep.subr.mxu0 0.0
    %3076 = vmatpush1.msra.mxu0 0.0
    %3077 = vmatprep.subr.mxu0 0.0
    %3078 = vmatpush1.msra.mxu0 0.0
    %3079 = vmatprep.subr.mxu0 0.0
    %3080 = vmatpush1.msra.mxu0 0.0
    %3081 = vmatprep.subr.mxu0 0.0
    %3082 = vmatpush1.msra.mxu0 0.0
    %3083 = vmatprep.subr.mxu0 0.0
    %3084 = vmatpush1.msra.mxu0 0.0
    %3085 = vmatprep.subr.mxu0 0.0
    %3086 = vmatpush1.msra.mxu0 0.0
    %3087 = vmatprep.subr.mxu0 0.0
    %3088 = vmatpush1.msra.mxu0 0.0
    %3089 = vmatprep.subr.mxu0 0.0
    %3090 = vmatpush1.msra.mxu0 0.0
    %3091 = vmatprep.subr.mxu0 0.0
    %3092 = vmatpush1.msra.mxu0 0.0
    %3093 = vmatprep.subr.mxu0 0.0
    %3094 = vmatpush1.msra.mxu0 0.0
    %3095 = vmatprep.subr.mxu0 0.0
    %3096 = vmatpush1.msra.mxu0 0.0
    %3097 = vmatprep.subr.mxu0 0.0
    %3098 = vmatpush1.msra.mxu0 0.0
    %3099 = vmatprep.subr.mxu0 0.0
    %3100 = vmatpush1.msra.mxu0 0.0
    %3101 = vmatprep.subr.mxu0 0.0
    %3102 = vmatpush1.msra.mxu0 0.0
    %3103 = vmatprep.subr.mxu0 0.0
    %3104 = vmatpush1.msra.mxu0 0.0
    %3105 = vmatprep.subr.mxu0 0.0
    %3106 = vmatpush1.msra.mxu0 0.0
    %3107 = vmatprep.subr.mxu0 0.0
    %3108 = vmatpush1.msra.mxu0 0.0
    %3109 = vmatprep.subr.mxu0 0.0
    %3110 = vmatpush1.msra.mxu0 0.0
    %3111 = vmatprep.subr.mxu0 0.0
    %3112 = vmatpush1.msra.mxu0 0.0
    %3113 = vmatprep.subr.mxu0 0.0
    %3114 = vmatpush1.msra.mxu0 0.0
    %3115 = vmatprep.subr.mxu0 0.0
    %3116 = vmatpush1.msra.mxu0 0.0
    %3117 = vmatprep.subr.mxu0 0.0
    %3118 = vmatpush1.msra.mxu0 0.0
    %3119 = vmatprep.subr.mxu0 0.0
    %3120 = vmatpush1.msra.mxu0 0.0
    %3121 = vmatprep.subr.mxu0 0.0
    %3122 = vmatpush1.msra.mxu0 0.0
    %3123 = vmatprep.subr.mxu0 0.0
    %3124 = vmatpush1.msra.mxu0 0.0
    %3125 = vmatprep.subr.mxu0 0.0
    %3126 = vmatpush1.msra.mxu0 0.0
    %3127 = vmatprep.subr.mxu0 0.0
    %3128 = vmatpush1.msra.mxu0 0.0
    %3129 = vmatprep.mubr.f32.mxu0 0.0
    %3130 = vmatmul.mubr.f32.gmra.mrb[0].mxu0 %v529
    %v3131 = vpop.f32.mrb[0].mxu0
    %v3132 = vadd.f32 0.0, %v3131
    %v3133 = vpop.f32.mrb[0].mxu0
    %3134 = vmatprep.mubr.f32.mxu0 0.0
    %3135 = vmatmul.mubr.f32.gmra.mrb[0].mxu0 %v532
    %v3136 = vpop.f32.mrb[0].mxu0
    %v3137 = vadd.f32 0.0, %v3136
    %v3138 = vpop.f32.mrb[0].mxu0
    %3139 = vmatprep.mubr.f32.mxu0 0.0
    %3140 = vmatmul.mubr.f32.gmra.mrb[0].mxu0 %v535
    %v3141 = vpop.f32.mrb[0].mxu0
    %v3142 = vadd.f32 0.0, %v3141
    %v3143 = vpop.f32.mrb[0].mxu0
    %3144 = vmatprep.mubr.f32.mxu0 0.0
    %3145 = vmatmul.mubr.f32.gmra.mrb[0].mxu0 %v538
    %v3146 = vpop.f32.mrb[0].mxu0
    %v3147 = vadd.f32 0.0, %v3146
    %v3148 = vpop.f32.mrb[0].mxu0
    %3149 = vdwg.mxu0
    %v3151 = vsel %vm527, %v3043, 0
    %v3154 = vsel %vm527, %v3048, 0
    %v3157 = vsel %vm527, %v3053, 0
    %v3160 = vsel %vm527, %v3058, 0
    %3162 = vmatprep.subr.mxu0 0.0
    %3163 = vmatpush1.msra.mxu0 %v3061
    %3164 = vmatprep.subr.mxu0 0.0
    %3165 = vmatpush1.msra.mxu0 %v3062
    %3166 = vmatprep.subr.mxu0 0.0
    %3167 = vmatpush1.msra.mxu0 0.0
    %3168 = vmatprep.subr.mxu0 0.0
    %3169 = vmatpush1.msra.mxu0 0.0
    %3170 = vmatprep.subr.mxu0 0.0
    %3171 = vmatpush1.msra.mxu0 0.0
    %3172 = vmatprep.subr.mxu0 0.0
    %3173 = vmatpush1.msra.mxu0 0.0
    %3174 = vmatprep.subr.mxu0 0.0
    %3175 = vmatpush1.msra.mxu0 0.0
    %3176 = vmatprep.subr.mxu0 0.0
    %3177 = vmatpush1.msra.mxu0 0.0
    %3178 = vmatprep.subr.mxu0 0.0
    %3179 = vmatpush1.msra.mxu0 0.0
    %3180 = vmatprep.subr.mxu0 0.0
    %3181 = vmatpush1.msra.mxu0 0.0
    %3182 = vmatprep.subr.mxu0 0.0
    %3183 = vmatpush1.msra.mxu0 0.0
    %3184 = vmatprep.subr.mxu0 0.0
    %3185 = vmatpush1.msra.mxu0 0.0
    %3186 = vmatprep.subr.mxu0 0.0
    %3187 = vmatpush1.msra.mxu0 0.0
    %3188 = vmatprep.subr.mxu0 0.0
    %3189 = vmatpush1.msra.mxu0 0.0
    %3190 = vmatprep.subr.mxu0 0.0
    %3191 = vmatpush1.msra.mxu0 0.0
    %3192 = vmatprep.subr.mxu0 0.0
    %3193 = vmatpush1.msra.mxu0 0.0
    %3194 = vmatprep.subr.mxu0 0.0
    %3195 = vmatpush1.msra.mxu0 0.0
    %3196 = vmatprep.subr.mxu0 0.0
    %3197 = vmatpush1.msra.mxu0 0.0
    %3198 = vmatprep.subr.mxu0 0.0
    %3199 = vmatpush1.msra.mxu0 0.0
    %3200 = vmatprep.subr.mxu0 0.0
    %3201 = vmatpush1.msra.mxu0 0.0
    %3202 = vmatprep.subr.mxu0 0.0
    %3203 = vmatpush1.msra.mxu0 0.0
    %3204 = vmatprep.subr.mxu0 0.0
    %3205 = vmatpush1.msra.mxu0 0.0
    %3206 = vmatprep.subr.mxu0 0.0
    %3207 = vmatpush1.msra.mxu0 0.0
    %3208 = vmatprep.subr.mxu0 0.0
    %3209 = vmatpush1.msra.mxu0 0.0
    %3210 = vmatprep.subr.mxu0 0.0
    %3211 = vmatpush1.msra.mxu0 0.0
    %3212 = vmatprep.subr.mxu0 0.0
    %3213 = vmatpush1.msra.mxu0 0.0
    %3214 = vmatprep.subr.mxu0 0.0
    %3215 = vmatpush1.msra.mxu0 0.0
    %3216 = vmatprep.subr.mxu0 0.0
    %3217 = vmatpush1.msra.mxu0 0.0
    %3218 = vmatprep.subr.mxu0 0.0
    %3219 = vmatpush1.msra.mxu0 0.0
    %3220 = vmatprep.subr.mxu0 0.0
    %3221 = vmatpush1.msra.mxu0 0.0
    %3222 = vmatprep.subr.mxu0 0.0
    %3223 = vmatpush1.msra.mxu0 0.0
    %3224 = vmatprep.subr.mxu0 0.0
    %3225 = vmatpush1.msra.mxu0 0.0
    %3226 = vmatprep.mubr.f32.mxu0 0.0
    %3227 = vmatmul.mubr.f32.gmra.mrb[0].mxu0 %v3151
    %v3228 = vpop.f32.mrb[0].mxu0
    %v3229 = vadd.f32 %v3132, %v3228
    %v3230 = vpop.f32.mrb[0].mxu0
    %3231 = vmatprep.mubr.f32.mxu0 0.0
    %3232 = vmatmul.mubr.f32.gmra.mrb[0].mxu0 %v3154
    %v3233 = vpop.f32.mrb[0].mxu0
    %v3234 = vadd.f32 %v3137, %v3233
    %v3235 = vpop.f32.mrb[0].mxu0
    %3236 = vmatprep.mubr.f32.mxu0 0.0
    %3237 = vmatmul.mubr.f32.gmra.mrb[0].mxu0 %v3157
    %v3238 = vpop.f32.mrb[0].mxu0
    %v3239 = vadd.f32 %v3142, %v3238
    %v3240 = vpop.f32.mrb[0].mxu0
    %3241 = vmatprep.mubr.f32.mxu0 0.0
    %3242 = vmatmul.mubr.f32.gmra.mrb[0].mxu0 %v3160
    %v3243 = vpop.f32.mrb[0].mxu0
    %v3244 = vadd.f32 %v3147, %v3243
    %v3245 = vpop.f32.mrb[0].mxu0
    %3246 = vdwg.mxu0
    %v3247 = vld [vmem:[#allocation4 + $0x25] ss:$0 sm:$0xff]
    %v3248 = vld [vmem:[#allocation4 + $0x26] ss:$0 sm:$0xff]
    %v3249 = vld [vmem:[#allocation4 + $0x27] ss:$0 sm:$0xff]
    %v3250 = vadd.f32 %v3229, %v3247
    %v3251 = vadd.f32 %v3234, %v3247
    %v3252 = vadd.f32 %v3239, %v3247
    %v3253 = vadd.f32 %v3244, %v3247
    %v3254 = vmul.f32 %v3250, 0.5
    %v3255 = vmul.f32 %v3251, 0.5
    %v3256 = vmul.f32 %v3252, 0.5
    %v3257 = vmul.f32 %v3253, 0.5
    %v3258 = vtanh.pop %v3254
    %v3259 = vtanh.pop %v3255
    %v3260 = vtanh.pop %v3256
    %v3261 = vtanh.pop %v3257
    %3262 = vmatprep.subr.mxu0 0.0
    %3263 = vmatpush1.msra.mxu0 %v3258
    %3264 = vmatprep.subr.mxu0 0.0
    %3265 = vmatpush1.msra.mxu0 %v3259
    %3266 = vmatprep.subr.mxu0 0.0
    %3267 = vmatpush1.msra.mxu0 %v3260
    %3268 = vmatprep.subr.mxu0 0.0
    %3269 = vmatpush1.msra.mxu0 %v3261
    %3270 = vmatprep.subr.mxu0 0.0
    %3271 = vmatpush1.msra.mxu0 0.0
    %3272 = vmatprep.subr.mxu0 0.0
    %3273 = vmatpush1.msra.mxu0 0.0
    %3274 = vmatprep.subr.mxu0 0.0
    %3275 = vmatpush1.msra.mxu0 0.0
    %3276 = vmatprep.subr.mxu0 0.0
    %3277 = vmatpush1.msra.mxu0 0.0
    %3278 = vmatprep.subr.mxu0 0.0
    %3279 = vmatpush1.msra.mxu0 0.0
    %3280 = vmatprep.subr.mxu0 0.0
    %3281 = vmatpush1.msra.mxu0 0.0
    %3282 = vmatprep.subr.mxu0 0.0
    %3283 = vmatpush1.msra.mxu0 0.0
    %3284 = vmatprep.subr.mxu0 0.0
    %3285 = vmatpush1.msra.mxu0 0.0
    %3286 = vmatprep.subr.mxu0 0.0
    %3287 = vmatpush1.msra.mxu0 0.0
    %3288 = vmatprep.subr.mxu0 0.0
    %3289 = vmatpush1.msra.mxu0 0.0
    %3290 = vmatprep.subr.mxu0 0.0
    %3291 = vmatpush1.msra.mxu0 0.0
    %3292 = vmatprep.subr.mxu0 0.0
    %3293 = vmatpush1.msra.mxu0 0.0
    %3294 = vmatprep.subr.mxu0 0.0
    %3295 = vmatpush1.msra.mxu0 0.0
    %3296 = vmatprep.subr.mxu0 0.0
    %3297 = vmatpush1.msra.mxu0 0.0
    %3298 = vmatprep.subr.mxu0 0.0
    %3299 = vmatpush1.msra.mxu0 0.0
    %3300 = vmatprep.subr.mxu0 0.0
    %3301 = vmatpush1.msra.mxu0 0.0
    %3302 = vmatprep.subr.mxu0 0.0
    %3303 = vmatpush1.msra.mxu0 0.0
    %3304 = vmatprep.subr.mxu0 0.0
    %3305 = vmatpush1.msra.mxu0 0.0
    %3306 = vmatprep.subr.mxu0 0.0
    %3307 = vmatpush1.msra.mxu0 0.0
    %3308 = vmatprep.subr.mxu0 0.0
    %3309 = vmatpush1.msra.mxu0 0.0
    %3310 = vmatprep.subr.mxu0 0.0
    %3311 = vmatpush1.msra.mxu0 0.0
    %3312 = vmatprep.subr.mxu0 0.0
    %3313 = vmatpush1.msra.mxu0 0.0
    %3314 = vmatprep.subr.mxu0 0.0
    %3315 = vmatpush1.msra.mxu0 0.0
    %3316 = vmatprep.subr.mxu0 0.0
    %3317 = vmatpush1.msra.mxu0 0.0
    %3318 = vmatprep.subr.mxu0 0.0
    %3319 = vmatpush1.msra.mxu0 0.0
    %3320 = vmatprep.subr.mxu0 0.0
    %3321 = vmatpush1.msra.mxu0 0.0
    %3322 = vmatprep.subr.mxu0 0.0
    %3323 = vmatpush1.msra.mxu0 0.0
    %3324 = vmatprep.subr.mxu0 0.0
    %3325 = vmatpush1.msra.mxu0 0.0
    %3326 = vmatprep.mubr.f32.mxu0 0.0
    %3327 = vmatmul.mubr.f32.gmra.mrb[0].mxu0 %v266
    %v3328 = vpop.f32.mrb[0].mxu0
    %v3329 = vadd.f32 0.0, %v3328
    %v3330 = vpop.f32.mrb[0].mxu0
    %3331 = vdwg.mxu0
    %v3332 = vmul.f32 %v3258, %v3258
    %v3333 = vmul.f32 %v3259, %v3259
    %v3334 = vmul.f32 %v3260, %v3260
    %v3335 = vmul.f32 %v3261, %v3261
    %3336 = vmatprep.subr.mxu0 0.0
    %3337 = vmatpush1.msra.mxu0 %v3332
    %3338 = vmatprep.subr.mxu0 0.0
    %3339 = vmatpush1.msra.mxu0 %v3333
    %3340 = vmatprep.subr.mxu0 0.0
    %3341 = vmatpush1.msra.mxu0 %v3334
    %3342 = vmatprep.subr.mxu0 0.0
    %3343 = vmatpush1.msra.mxu0 %v3335
    %3344 = vmatprep.subr.mxu0 0.0
    %3345 = vmatpush1.msra.mxu0 0.0
    %3346 = vmatprep.subr.mxu0 0.0
    %3347 = vmatpush1.msra.mxu0 0.0
    %3348 = vmatprep.subr.mxu0 0.0
    %3349 = vmatpush1.msra.mxu0 0.0
    %3350 = vmatprep.subr.mxu0 0.0
    %3351 = vmatpush1.msra.mxu0 0.0
    %3352 = vmatprep.subr.mxu0 0.0
    %3353 = vmatpush1.msra.mxu0 0.0
    %3354 = vmatprep.subr.mxu0 0.0
    %3355 = vmatpush1.msra.mxu0 0.0
    %3356 = vmatprep.subr.mxu0 0.0
    %3357 = vmatpush1.msra.mxu0 0.0
    %3358 = vmatprep.subr.mxu0 0.0
    %3359 = vmatpush1.msra.mxu0 0.0
    %3360 = vmatprep.subr.mxu0 0.0
    %3361 = vmatpush1.msra.mxu0 0.0
    %3362 = vmatprep.subr.mxu0 0.0
    %3363 = vmatpush1.msra.mxu0 0.0
    %3364 = vmatprep.subr.mxu0 0.0
    %3365 = vmatpush1.msra.mxu0 0.0
    %3366 = vmatprep.subr.mxu0 0.0
    %3367 = vmatpush1.msra.mxu0 0.0
    %3368 = vmatprep.subr.mxu0 0.0
    %3369 = vmatpush1.msra.mxu0 0.0
    %3370 = vmatprep.subr.mxu0 0.0
    %3371 = vmatpush1.msra.mxu0 0.0
    %3372 = vmatprep.subr.mxu0 0.0
    %3373 = vmatpush1.msra.mxu0 0.0
    %3374 = vmatprep.subr.mxu0 0.0
    %3375 = vmatpush1.msra.mxu0 0.0
    %3376 = vmatprep.subr.mxu0 0.0
    %3377 = vmatpush1.msra.mxu0 0.0
    %3378 = vmatprep.subr.mxu0 0.0
    %3379 = vmatpush1.msra.mxu0 0.0
    %3380 = vmatprep.subr.mxu0 0.0
    %3381 = vmatpush1.msra.mxu0 0.0
    %3382 = vmatprep.subr.mxu0 0.0
    %3383 = vmatpush1.msra.mxu0 0.0
    %3384 = vmatprep.subr.mxu0 0.0
    %3385 = vmatpush1.msra.mxu0 0.0
    %3386 = vmatprep.subr.mxu0 0.0
    %3387 = vmatpush1.msra.mxu0 0.0
    %3388 = vmatprep.subr.mxu0 0.0
    %3389 = vmatpush1.msra.mxu0 0.0
    %3390 = vmatprep.subr.mxu0 0.0
    %3391 = vmatpush1.msra.mxu0 0.0
    %3392 = vmatprep.subr.mxu0 0.0
    %3393 = vmatpush1.msra.mxu0 0.0
    %3394 = vmatprep.subr.mxu0 0.0
    %3395 = vmatpush1.msra.mxu0 0.0
    %3396 = vmatprep.subr.mxu0 0.0
    %3397 = vmatpush1.msra.mxu0 0.0
    %3398 = vmatprep.subr.mxu0 0.0
    %3399 = vmatpush1.msra.mxu0 0.0
    %3400 = vmatprep.mubr.f32.mxu0 0.0
    %3401 = vmatmul.mubr.f32.gmra.mrb[0].mxu0 %v266
    %v3402 = vpop.f32.mrb[0].mxu0
    %v3403 = vadd.f32 0.0, %v3402
    %v3404 = vpop.f32.mrb[0].mxu0
    %3405 = vdwg.mxu0
    %v3406 = vmul.f32 %v3329, 0.03125
    %v3407 = vmul.f32 %v3403, 0.03125
    %v3408 = vmul.f32 %v3406, %v3406
    %v3409 = vsub.f32 %v3407, %v3408
    %v3410 = vadd.f32 %v3409, 4e-05
    %v3411 = vrsqrt.pop %v3410
    %v3412 = vmul.f32 %v3248, %v3411
    %v3413 = vmul.f32 %v3406, %v3412
    %v3414 = vsub.f32 %v3249, %v3413
    %v3415 = vlaneseq
    %v3416 = vshrl.u32 %v3415, 7
    %v3417 = vsub.s32 0, %v3416
    %v3418 = vrot.slane %v3412, %v3417
    %v3419 = vmul.f32 %v3258, %v3418
    %v3420 = vmul.f32 %v3259, %v3418
    %v3421 = vmul.f32 %v3260, %v3418
    %v3422 = vmul.f32 %v3261, %v3418
    %v3423 = vlaneseq
    %v3424 = vshrl.u32 %v3423, 7
    %v3425 = vsub.s32 0, %v3424
    %v3426 = vrot.slane %v3414, %v3425
    %v3427 = vadd.f32 %v3419, %v3426
    %v3428 = vadd.f32 %v3420, %v3426
    %v3429 = vadd.f32 %v3421, %v3426
    %v3430 = vadd.f32 %v3422, %v3426
    %3435 = vrot.lane.b32.xlu0 %v3427, 1
    %v3436 = vpop.permute.xlu0 %3435
    %3437 = vrot.lane.b32.xlu0 %v3428, 1
    %v3438 = vpop.permute.xlu0 %3437
    %3439 = vrot.lane.b32.xlu0 %v3429, 1
    %v3440 = vpop.permute.xlu0 %3439
    %3441 = vrot.lane.b32.xlu0 %v3430, 1
    %v3442 = vpop.permute.xlu0 %3441
    %v3447 = vsub.f32 %v3427, %v3436
    %v3448 = vsub.f32 %v3428, %v3438
    %v3449 = vsub.f32 %v3429, %v3440
    %v3450 = vsub.f32 %v3430, %v3442
    %v3451 = vmul.f32 %v3447, 0.5
    %v3452 = vmul.f32 %v3448, 0.5
    %v3453 = vmul.f32 %v3449, 0.5
    %v3454 = vmul.f32 %v3450, 0.5
    %v3455 = vtanh.pop %v3451
    %v3456 = vtanh.pop %v3452
    %v3457 = vtanh.pop %v3453
    %v3458 = vtanh.pop %v3454
    %v3459 = vmul.f32 %v3455, 0.5
    %v3460 = vmul.f32 %v3456, 0.5
    %v3461 = vmul.f32 %v3457, 0.5
    %v3462 = vmul.f32 %v3458, 0.5
    %v3463 = vadd.f32 %v3459, 0.5
    %v3464 = vadd.f32 %v3460, 0.5
    %v3465 = vadd.f32 %v3461, 0.5
    %v3466 = vadd.f32 %v3462, 0.5
    %v3467 = vsub.f32 1.0, %v3463
    %v3468 = vsub.f32 1.0, %v3464
    %v3469 = vsub.f32 1.0, %v3465
    %v3470 = vsub.f32 1.0, %v3466
    %3475 = vrot.lane.b32.xlu0 %v3467, 127
    %v3476 = vpop.permute.xlu0 %3475
    %3477 = vrot.lane.b32.xlu0 %v3468, 127
    %v3478 = vpop.permute.xlu0 %3477
    %3479 = vrot.lane.b32.xlu0 %v3469, 127
    %v3480 = vpop.permute.xlu0 %3479
    %3481 = vrot.lane.b32.xlu0 %v3470, 127
    %v3482 = vpop.permute.xlu0 %3481
    %vm3487 = vcmask 7168
    %3488 = vst.msk [vmem:[%s4] sm:$0xff] %vm3487, %v3476
    %3489 = vst.msk [vmem:[%s4 + $0x8] sm:$0xff] %vm3487, %v3478
    %3490 = vst.msk [vmem:[%s4 + $0x10] sm:$0xff] %vm3487, %v3480
    %3491 = vst.msk [vmem:[%s4 + $0x18] sm:$0xff] %vm3487, %v3482
    %vm3492 = vcmask 15368
    %3493 = vst.msk [vmem:[%s4] sm:$0xff] %vm3492, %v3463
    %3494 = vst.msk [vmem:[%s4 + $0x8] sm:$0xff] %vm3492, %v3464
    %3495 = vst.msk [vmem:[%s4 + $0x10] sm:$0xff] %vm3492, %v3465
    %3496 = vst.msk [vmem:[%s4 + $0x18] sm:$0xff] %vm3492, %v3466
    // Predicated region
    $region26: #{netconnect1_forward.1} parent=1 // pred_check
      _
    $region27: #{netconnect1_forward.1} parent=1 // pred_check_branch
      %3498 = sbr.rel (0) target = $region29
    $region28: #{netconnect1_forward.1} parent=1 // pred_region
      _
    $region29: #{netconnect1_forward.1} parent=1 // pred_fallthru
      _
    // Predicated region
    $region30: #{netconnect1_forward.1} parent=1 // pred_check
      _
    $region31: #{netconnect1_forward.1} parent=1 // pred_check_branch
      %3500 = sbr.rel (0) target = $region33
    $region32: #{netconnect1_forward.1} parent=1 // pred_region
      _
    $region33: #{netconnect1_forward.1} parent=1 // pred_fallthru
      _
    %3501 = vsyncpa [#allocation3], 1
    %3502 = vsyncpa [#allocation5], 1

</llo_original>
